<compile_context>
chip_gen: v7x
topology: tpu7x:2x2x1
jax: 0.10.0
libtpu: 0.0.40
codegen_flags: <defaults>
</compile_context>

<pallas_src>
import math
from functools import partial

import jax
import jax.numpy as jnp
from jax.experimental import pallas as pl
from jax.experimental.pallas import tpu as pltpu


def _fusion_attn_kernel(img_ref, txt_ref,
                        wqT_ref, bq_ref, wkT_ref, bk_ref,
                        wvT_ref, bv_ref, woT_ref, bo_ref,
                        out_ref, *, num_heads, head_dim, block_b, Lq, Lk, E):
    cdt = wqT_ref.dtype                      # compute dtype (f32 or bf16)
    scale = 1.0 / math.sqrt(head_dim)

    # Fold the batch block into the M dim of the projection matmuls.
    img = img_ref[...].reshape(block_b * Lq, E)
    txt = txt_ref[...].reshape(block_b * Lk, E)

    # Linear projections: x @ W.T + b with W.T pre-computed in the wrapper.
    q = jnp.dot(img, wqT_ref[...], preferred_element_type=jnp.float32) + bq_ref[...]
    k = jnp.dot(txt, wkT_ref[...], preferred_element_type=jnp.float32) + bk_ref[...]
    v = jnp.dot(txt, wvT_ref[...], preferred_element_type=jnp.float32) + bv_ref[...]

    # Apply the attention scale once on q (cheaper than scaling the scores).
    q = (q * scale).astype(cdt).reshape(block_b, Lq, E)
    k = k.astype(cdt).reshape(block_b, Lk, E)
    v = v.astype(cdt).reshape(block_b, Lk, E)

    woT = woT_ref[...]
    # Output projection accumulated per head -> no head-concat / lane stitching.
    acc = jnp.broadcast_to(bo_ref[...].astype(jnp.float32), (block_b * Lq, E))

    for h in range(num_heads):                       # static, small head count
        sl = slice(h * head_dim, (h + 1) * head_dim)
        qh = q[:, :, sl]                             # (Bb, Lq, hd)
        kh = k[:, :, sl]                             # (Bb, Lk, hd)
        vh = v[:, :, sl]                             # (Bb, Lk, hd)

        # Batched scores over the folded batch block.
        s = jnp.einsum('bqd,bkd->bqk', qh, kh,
                       preferred_element_type=jnp.float32)       # (Bb, Lq, Lk)
        m = jnp.max(s, axis=-1, keepdims=True)
        p = jnp.exp(s - m)
        denom = jnp.sum(p, axis=-1, keepdims=True)
        attn = (p * pl.reciprocal(denom, approx=True)).astype(cdt)

        ctx = jnp.einsum('bqk,bkd->bqd', attn, vh,
                         preferred_element_type=jnp.float32)     # (Bb, Lq, hd)
        ctx2 = ctx.astype(cdt).reshape(block_b * Lq, head_dim)
        acc = acc + jnp.dot(ctx2, woT[sl, :],
                            preferred_element_type=jnp.float32)  # (Bb*Lq, E)

    out_ref[...] = acc.reshape(block_b, Lq, E).astype(out_ref.dtype)


def _pick_block_b(B, Lq):
    # Aim for >= ~256 rows in the projection matmuls; block_b must divide B.
    bb = max(1, min(B, 256 // max(Lq, 1)))
    while B % bb != 0:
        bb -= 1
    return max(bb, 1)


def fusion_module_forward(image_seq, text_seq, params, *, num_heads,
                          compute_dtype=None, block_b=None):
    """Cross-attention forward: query = image_seq, key/value = text_seq."""
    B, Lq, E = image_seq.shape
    Bk, Lk, Ek = text_seq.shape
    assert B == Bk and E == Ek
    assert E % num_heads == 0, "embed_dim must be divisible by num_heads"
    head_dim = E // num_heads

    if compute_dtype is None:
        compute_dtype = image_seq.dtype
    if block_b is None:
        block_b = _pick_block_b(B, Lq)
    assert B % block_b == 0

    wq, bq, wk, bk, wv, bv, wo, bo = params
    cdt = jnp.dtype(compute_dtype)

    # Pre-transpose weights once in the wrapper (grid-invariant layout plumbing),
    # optionally cast to the compute dtype (bf16 recommended on v6e/v7x).
    wqT = jnp.transpose(wq).astype(cdt)
    wkT = jnp.transpose(wk).astype(cdt)
    wvT = jnp.transpose(wv).astype(cdt)
    woT = jnp.transpose(wo).astype(cdt)
    # Biases stay in f32 (added to f32 accumulators).
    bq2, bk2, bv2, bo2 = (b.reshape(1, E).astype(jnp.float32)
                          for b in (bq, bk, bv, bo))

    img = image_seq.astype(cdt)
    txt = text_seq.astype(cdt)

    seq_q_spec = pl.BlockSpec((block_b, Lq, E), lambda b: (b, 0, 0))
    seq_k_spec = pl.BlockSpec((block_b, Lk, E), lambda b: (b, 0, 0))
    w_spec = pl.BlockSpec((E, E), lambda b: (0, 0))
    b_spec = pl.BlockSpec((1, E), lambda b: (0, 0))
    out_spec = pl.BlockSpec((block_b, Lq, E), lambda b: (b, 0, 0))

    # VMEM budget: double-buffered inputs + weights + output + f32 temporaries.
    cbytes = cdt.itemsize
    obytes = jnp.dtype(image_seq.dtype).itemsize
    vmem_est = (
        2 * block_b * (Lq + Lk) * E * cbytes          # seq inputs (double-buffered)
        + 2 * (4 * E * E * cbytes + 4 * E * 4)        # weights + biases
        + 2 * block_b * Lq * E * obytes               # output
        + 8 * block_b * max(Lq, Lk) * E * 4           # f32 q/k/v/acc + temporaries
    )
    vmem_limit = int(min(max(2 * vmem_est, 16 * 1024 * 1024), 48 * 1024 * 1024))

    kernel = partial(_fusion_attn_kernel, num_heads=num_heads, head_dim=head_dim,
                     block_b=block_b, Lq=Lq, Lk=Lk, E=E)

    return pl.pallas_call(
        kernel,
        out_shape=jax.ShapeDtypeStruct((B, Lq, E), image_seq.dtype),
        grid_spec=pltpu.PrefetchScalarGridSpec(
            num_scalar_prefetch=0,
            grid=(B // block_b,),
            in_specs=[seq_q_spec, seq_k_spec,
                      w_spec, b_spec, w_spec, b_spec,
                      w_spec, b_spec, w_spec, b_spec],
            out_specs=out_spec,
        ),
        compiler_params=pltpu.CompilerParams(
            dimension_semantics=("parallel",),
            vmem_limit_bytes=vmem_limit),
    )(img, txt, wqT, bq2, wkT, bk2, wvT, bv2, woT, bo2)


def _reference(image_seq, text_seq, params, num_heads):
    wq, bq, wk, bk, wv, bv, wo, bo = params
    B, Lq, E = image_seq.shape
    Lk = text_seq.shape[1]
    hd = E // num_heads
    q = image_seq @ wq.T + bq
    k = text_seq @ wk.T + bk
    v = text_seq @ wv.T + bv
    q = q.reshape(B, Lq, num_heads, hd).transpose(0, 2, 1, 3)
    k = k.reshape(B, Lk, num_heads, hd).transpose(0, 2, 1, 3)
    v = v.reshape(B, Lk, num_heads, hd).transpose(0, 2, 1, 3)
    scores = jnp.einsum("bhqd,bhkd->bhqk", q, k) / math.sqrt(hd)
    attn = jax.nn.softmax(scores, axis=-1)
    ctx = jnp.einsum("bhqk,bhkd->bhqd", attn, v)
    ctx = ctx.transpose(0, 2, 1, 3).reshape(B, Lq, E)
    return ctx @ wo.T + bo


if __name__ == "__main__":
    # Small shapes consistent with FusionModule(embed_dim, num_heads).
    # E=128 keeps the kernel lane-dense (outputs/weights are full 128-lane tiles).
    B, Lq, Lk, E, H = 2, 8, 8, 128, 8

    key = jax.random.PRNGKey(0)
    ks = jax.random.split(key, 10)

    def linear_params(kw, kb, fan_in):
        bound = 1.0 / math.sqrt(fan_in)
        w = jax.random.uniform(kw, (E, E), jnp.float32, -bound, bound)
        b = jax.random.uniform(kb, (E,), jnp.float32, -bound, bound)
        return w, b

    wq, bq = linear_params(ks[0], ks[1], E)
    wk, bk = linear_params(ks[2], ks[3], E)
    wv, bv = linear_params(ks[4], ks[5], E)
    wo, bo = linear_params(ks[6], ks[7], E)
    params = (wq, bq, wk, bk, wv, bv, wo, bo)

    image_seq = jax.random.normal(ks[8], (B, Lq, E), jnp.float32)
    text_seq = jax.random.normal(ks[9], (B, Lk, E), jnp.float32)

    ref = _reference(image_seq, text_seq, params, H)

    # f32 compute path (exact semantics, approx reciprocal in softmax denom).
    out = fusion_module_forward(image_seq, text_seq, params, num_heads=H)
    out = jax.block_until_ready(out)
    assert out.shape == (B, Lq, E)
    assert jnp.allclose(out, ref, atol=5e-3, rtol=5e-3), "f32 mismatch vs reference"

    # bf16 compute path (recommended on v6e/v7x MXU), f32 accumulation/softmax.
    out_bf16 = fusion_module_forward(image_seq, text_seq, params, num_heads=H,
                                     compute_dtype=jnp.bfloat16)
    out_bf16 = jax.block_until_ready(out_bf16)
    assert jnp.allclose(out_bf16, ref, atol=5e-2, rtol=5e-2), "bf16 mismatch vs reference"

    print("KERNEL_OK")
</pallas_src>

<mosaic_0001>
module attributes {stable_mosaic.version = 11 : i64} {
  func.func @_fusion_attn_kernel(%arg0: i32, %arg1: memref<2x8x128xf32, #tpu.memory_space<vmem>>, %arg2: memref<2x8x128xf32, #tpu.memory_space<vmem>>, %arg3: memref<128x128xf32, #tpu.memory_space<vmem>>, %arg4: memref<1x128xf32, #tpu.memory_space<vmem>>, %arg5: memref<128x128xf32, #tpu.memory_space<vmem>>, %arg6: memref<1x128xf32, #tpu.memory_space<vmem>>, %arg7: memref<128x128xf32, #tpu.memory_space<vmem>>, %arg8: memref<1x128xf32, #tpu.memory_space<vmem>>, %arg9: memref<128x128xf32, #tpu.memory_space<vmem>>, %arg10: memref<1x128xf32, #tpu.memory_space<vmem>>, %arg11: memref<2x8x128xf32, #tpu.memory_space<vmem>>) attributes {dimension_semantics = [#tpu.dimension_semantics<parallel>], iteration_bounds = array<i64: 1>, scalar_prefetch = 0 : i64, scratch_operands = 0 : i64, tpu.core_type = #tpu.core_type<tc>, window_params = [{transform_indices = @transform_0, window_bounds = array<i64: 2, 8, 128>}, {transform_indices = @transform_1, window_bounds = array<i64: 2, 8, 128>}, {pipeline_mode = #tpu.pipeline_mode<synchronous>, transform_indices = @transform_2, window_bounds = array<i64: 128, 128>}, {pipeline_mode = #tpu.pipeline_mode<synchronous>, transform_indices = @transform_3, window_bounds = array<i64: 1, 128>}, {pipeline_mode = #tpu.pipeline_mode<synchronous>, transform_indices = @transform_4, window_bounds = array<i64: 128, 128>}, {pipeline_mode = #tpu.pipeline_mode<synchronous>, transform_indices = @transform_5, window_bounds = array<i64: 1, 128>}, {pipeline_mode = #tpu.pipeline_mode<synchronous>, transform_indices = @transform_6, window_bounds = array<i64: 128, 128>}, {pipeline_mode = #tpu.pipeline_mode<synchronous>, transform_indices = @transform_7, window_bounds = array<i64: 1, 128>}, {pipeline_mode = #tpu.pipeline_mode<synchronous>, transform_indices = @transform_8, window_bounds = array<i64: 128, 128>}, {pipeline_mode = #tpu.pipeline_mode<synchronous>, transform_indices = @transform_9, window_bounds = array<i64: 1, 128>}, {transform_indices = @transform_10, window_bounds = array<i64: 2, 8, 128>}]} {
    %c0 = arith.constant 0 : index
    %c0_0 = arith.constant 0 : index
    %c0_1 = arith.constant 0 : index
    %0 = vector.load %arg1[%c0, %c0_0, %c0_1] : memref<2x8x128xf32, #tpu.memory_space<vmem>>, vector<2x8x128xf32>
    %1 = vector.shape_cast %0 : vector<2x8x128xf32> to vector<16x128xf32>
    %c0_2 = arith.constant 0 : index
    %c0_3 = arith.constant 0 : index
    %c0_4 = arith.constant 0 : index
    %2 = vector.load %arg2[%c0_2, %c0_3, %c0_4] : memref<2x8x128xf32, #tpu.memory_space<vmem>>, vector<2x8x128xf32>
    %3 = vector.shape_cast %2 : vector<2x8x128xf32> to vector<16x128xf32>
    %c0_5 = arith.constant 0 : index
    %c0_6 = arith.constant 0 : index
    %4 = vector.load %arg3[%c0_5, %c0_6] : memref<128x128xf32, #tpu.memory_space<vmem>>, vector<128x128xf32>
    %cst = arith.constant dense<0.000000e+00> : vector<16x128xf32>
    %5 = tpu.matmul %1, %4, %cst {dimension_numbers = #tpu.dot_dimension_numbers<[1], [0], [0], [1], [0, 0, 1, 1], [], []>} : vector<16x128xf32>, vector<128x128xf32>, vector<16x128xf32> -> vector<16x128xf32>
    %c0_7 = arith.constant 0 : index
    %c0_8 = arith.constant 0 : index
    %6 = vector.load %arg4[%c0_7, %c0_8] : memref<1x128xf32, #tpu.memory_space<vmem>>, vector<1x128xf32>
    %7 = vector.broadcast %6 : vector<1x128xf32> to vector<16x128xf32>
    %8 = arith.addf %5, %7 : vector<16x128xf32>
    %c0_9 = arith.constant 0 : index
    %c0_10 = arith.constant 0 : index
    %9 = vector.load %arg5[%c0_9, %c0_10] : memref<128x128xf32, #tpu.memory_space<vmem>>, vector<128x128xf32>
    %cst_11 = arith.constant dense<0.000000e+00> : vector<16x128xf32>
    %10 = tpu.matmul %3, %9, %cst_11 {dimension_numbers = #tpu.dot_dimension_numbers<[1], [0], [0], [1], [0, 0, 1, 1], [], []>} : vector<16x128xf32>, vector<128x128xf32>, vector<16x128xf32> -> vector<16x128xf32>
    %c0_12 = arith.constant 0 : index
    %c0_13 = arith.constant 0 : index
    %11 = vector.load %arg6[%c0_12, %c0_13] : memref<1x128xf32, #tpu.memory_space<vmem>>, vector<1x128xf32>
    %12 = vector.broadcast %11 : vector<1x128xf32> to vector<16x128xf32>
    %13 = arith.addf %10, %12 : vector<16x128xf32>
    %c0_14 = arith.constant 0 : index
    %c0_15 = arith.constant 0 : index
    %14 = vector.load %arg7[%c0_14, %c0_15] : memref<128x128xf32, #tpu.memory_space<vmem>>, vector<128x128xf32>
    %cst_16 = arith.constant dense<0.000000e+00> : vector<16x128xf32>
    %15 = tpu.matmul %3, %14, %cst_16 {dimension_numbers = #tpu.dot_dimension_numbers<[1], [0], [0], [1], [0, 0, 1, 1], [], []>} : vector<16x128xf32>, vector<128x128xf32>, vector<16x128xf32> -> vector<16x128xf32>
    %c0_17 = arith.constant 0 : index
    %c0_18 = arith.constant 0 : index
    %16 = vector.load %arg8[%c0_17, %c0_18] : memref<1x128xf32, #tpu.memory_space<vmem>>, vector<1x128xf32>
    %17 = vector.broadcast %16 : vector<1x128xf32> to vector<16x128xf32>
    %18 = arith.addf %15, %17 : vector<16x128xf32>
    %cst_19 = arith.constant 2.500000e-01 : f32
    %19 = vector.broadcast %cst_19 : f32 to vector<16x128xf32>
    %20 = arith.mulf %8, %19 : vector<16x128xf32>
    %21 = vector.shape_cast %20 : vector<16x128xf32> to vector<2x8x128xf32>
    %22 = vector.shape_cast %13 : vector<16x128xf32> to vector<2x8x128xf32>
    %23 = vector.shape_cast %18 : vector<16x128xf32> to vector<2x8x128xf32>
    %c0_20 = arith.constant 0 : index
    %c0_21 = arith.constant 0 : index
    %24 = vector.load %arg9[%c0_20, %c0_21] : memref<128x128xf32, #tpu.memory_space<vmem>>, vector<128x128xf32>
    %c0_22 = arith.constant 0 : index
    %c0_23 = arith.constant 0 : index
    %25 = vector.load %arg10[%c0_22, %c0_23] : memref<1x128xf32, #tpu.memory_space<vmem>>, vector<1x128xf32>
    %26 = vector.shape_cast %25 : vector<1x128xf32> to vector<1x128xf32>
    %27 = vector.broadcast %26 : vector<1x128xf32> to vector<16x128xf32>
    %28 = vector.extract_strided_slice %21 {offsets = [0, 0, 0], sizes = [2, 8, 16], strides = [1, 1, 1]} : vector<2x8x128xf32> to vector<2x8x16xf32>
    %29 = vector.extract_strided_slice %22 {offsets = [0, 0, 0], sizes = [2, 8, 16], strides = [1, 1, 1]} : vector<2x8x128xf32> to vector<2x8x16xf32>
    %30 = vector.extract_strided_slice %23 {offsets = [0, 0, 0], sizes = [2, 8, 16], strides = [1, 1, 1]} : vector<2x8x128xf32> to vector<2x8x16xf32>
    "tpu.trace_start"() <{level = 10 : i32, message = "bqd,bkd->bqk"}> : () -> ()
    %cst_24 = arith.constant dense<0.000000e+00> : vector<2x8x8xf32>
    %31 = tpu.matmul %28, %29, %cst_24 {dimension_numbers = #tpu.dot_dimension_numbers<[2], [2], [1], [1], [0, 0, 0, 1, 1, 1], [0], [0]>} : vector<2x8x16xf32>, vector<2x8x16xf32>, vector<2x8x8xf32> -> vector<2x8x8xf32>
    "tpu.trace_stop"() : () -> ()
    %cst_25 = arith.constant dense<0xFF800000> : vector<2x8xf32>
    %32 = vector.multi_reduction <maximumf>, %31, %cst_25 [2] : vector<2x8x8xf32> to vector<2x8xf32>
    %33 = vector.shape_cast %32 : vector<2x8xf32> to vector<2x8x1xf32>
    %34 = vector.broadcast %33 : vector<2x8x1xf32> to vector<2x8x8xf32>
    %35 = arith.subf %31, %34 : vector<2x8x8xf32>
    %36 = math.exp %35 : vector<2x8x8xf32>
    %cst_26 = arith.constant dense<0.000000e+00> : vector<2x8xf32>
    %37 = vector.multi_reduction <add>, %36, %cst_26 [2] : vector<2x8x8xf32> to vector<2x8xf32>
    %38 = vector.shape_cast %37 : vector<2x8xf32> to vector<2x8x1xf32>
    %39 = tpu.reciprocal %38 {approx = true} : vector<2x8x1xf32> -> vector<2x8x1xf32>
    %40 = vector.broadcast %39 : vector<2x8x1xf32> to vector<2x8x8xf32>
    %41 = arith.mulf %36, %40 : vector<2x8x8xf32>
    "tpu.trace_start"() <{level = 10 : i32, message = "bqk,bkd->bqd"}> : () -> ()
    %cst_27 = arith.constant dense<0.000000e+00> : vector<2x8x16xf32>
    %42 = tpu.matmul %41, %30, %cst_27 {dimension_numbers = #tpu.dot_dimension_numbers<[2], [1], [1], [2], [0, 0, 0, 1, 1, 2], [0], [0]>} : vector<2x8x8xf32>, vector<2x8x16xf32>, vector<2x8x16xf32> -> vector<2x8x16xf32>
    "tpu.trace_stop"() : () -> ()
    %43 = vector.shape_cast %42 : vector<2x8x16xf32> to vector<16x16xf32>
    %44 = vector.extract_strided_slice %24 {offsets = [0, 0], sizes = [16, 128], strides = [1, 1]} : vector<128x128xf32> to vector<16x128xf32>
    %cst_28 = arith.constant dense<0.000000e+00> : vector<16x128xf32>
    %45 = tpu.matmul %43, %44, %cst_28 {dimension_numbers = #tpu.dot_dimension_numbers<[1], [0], [0], [1], [0, 0, 1, 1], [], []>} : vector<16x16xf32>, vector<16x128xf32>, vector<16x128xf32> -> vector<16x128xf32>
    %46 = arith.addf %27, %45 : vector<16x128xf32>
    %47 = vector.extract_strided_slice %21 {offsets = [0, 0, 16], sizes = [2, 8, 16], strides = [1, 1, 1]} : vector<2x8x128xf32> to vector<2x8x16xf32>
    %48 = vector.extract_strided_slice %22 {offsets = [0, 0, 16], sizes = [2, 8, 16], strides = [1, 1, 1]} : vector<2x8x128xf32> to vector<2x8x16xf32>
    %49 = vector.extract_strided_slice %23 {offsets = [0, 0, 16], sizes = [2, 8, 16], strides = [1, 1, 1]} : vector<2x8x128xf32> to vector<2x8x16xf32>
    "tpu.trace_start"() <{level = 10 : i32, message = "bqd,bkd->bqk"}> : () -> ()
    %cst_29 = arith.constant dense<0.000000e+00> : vector<2x8x8xf32>
    %50 = tpu.matmul %47, %48, %cst_29 {dimension_numbers = #tpu.dot_dimension_numbers<[2], [2], [1], [1], [0, 0, 0, 1, 1, 1], [0], [0]>} : vector<2x8x16xf32>, vector<2x8x16xf32>, vector<2x8x8xf32> -> vector<2x8x8xf32>
    "tpu.trace_stop"() : () -> ()
    %cst_30 = arith.constant dense<0xFF800000> : vector<2x8xf32>
    %51 = vector.multi_reduction <maximumf>, %50, %cst_30 [2] : vector<2x8x8xf32> to vector<2x8xf32>
    %52 = vector.shape_cast %51 : vector<2x8xf32> to vector<2x8x1xf32>
    %53 = vector.broadcast %52 : vector<2x8x1xf32> to vector<2x8x8xf32>
    %54 = arith.subf %50, %53 : vector<2x8x8xf32>
    %55 = math.exp %54 : vector<2x8x8xf32>
    %cst_31 = arith.constant dense<0.000000e+00> : vector<2x8xf32>
    %56 = vector.multi_reduction <add>, %55, %cst_31 [2] : vector<2x8x8xf32> to vector<2x8xf32>
    %57 = vector.shape_cast %56 : vector<2x8xf32> to vector<2x8x1xf32>
    %58 = tpu.reciprocal %57 {approx = true} : vector<2x8x1xf32> -> vector<2x8x1xf32>
    %59 = vector.broadcast %58 : vector<2x8x1xf32> to vector<2x8x8xf32>
    %60 = arith.mulf %55, %59 : vector<2x8x8xf32>
    "tpu.trace_start"() <{level = 10 : i32, message = "bqk,bkd->bqd"}> : () -> ()
    %cst_32 = arith.constant dense<0.000000e+00> : vector<2x8x16xf32>
    %61 = tpu.matmul %60, %49, %cst_32 {dimension_numbers = #tpu.dot_dimension_numbers<[2], [1], [1], [2], [0, 0, 0, 1, 1, 2], [0], [0]>} : vector<2x8x8xf32>, vector<2x8x16xf32>, vector<2x8x16xf32> -> vector<2x8x16xf32>
    "tpu.trace_stop"() : () -> ()
    %62 = vector.shape_cast %61 : vector<2x8x16xf32> to vector<16x16xf32>
    %63 = vector.extract_strided_slice %24 {offsets = [16, 0], sizes = [16, 128], strides = [1, 1]} : vector<128x128xf32> to vector<16x128xf32>
    %cst_33 = arith.constant dense<0.000000e+00> : vector<16x128xf32>
    %64 = tpu.matmul %62, %63, %cst_33 {dimension_numbers = #tpu.dot_dimension_numbers<[1], [0], [0], [1], [0, 0, 1, 1], [], []>} : vector<16x16xf32>, vector<16x128xf32>, vector<16x128xf32> -> vector<16x128xf32>
    %65 = arith.addf %46, %64 : vector<16x128xf32>
    %66 = vector.extract_strided_slice %21 {offsets = [0, 0, 32], sizes = [2, 8, 16], strides = [1, 1, 1]} : vector<2x8x128xf32> to vector<2x8x16xf32>
    %67 = vector.extract_strided_slice %22 {offsets = [0, 0, 32], sizes = [2, 8, 16], strides = [1, 1, 1]} : vector<2x8x128xf32> to vector<2x8x16xf32>
    %68 = vector.extract_strided_slice %23 {offsets = [0, 0, 32], sizes = [2, 8, 16], strides = [1, 1, 1]} : vector<2x8x128xf32> to vector<2x8x16xf32>
    "tpu.trace_start"() <{level = 10 : i32, message = "bqd,bkd->bqk"}> : () -> ()
    %cst_34 = arith.constant dense<0.000000e+00> : vector<2x8x8xf32>
    %69 = tpu.matmul %66, %67, %cst_34 {dimension_numbers = #tpu.dot_dimension_numbers<[2], [2], [1], [1], [0, 0, 0, 1, 1, 1], [0], [0]>} : vector<2x8x16xf32>, vector<2x8x16xf32>, vector<2x8x8xf32> -> vector<2x8x8xf32>
    "tpu.trace_stop"() : () -> ()
    %cst_35 = arith.constant dense<0xFF800000> : vector<2x8xf32>
    %70 = vector.multi_reduction <maximumf>, %69, %cst_35 [2] : vector<2x8x8xf32> to vector<2x8xf32>
    %71 = vector.shape_cast %70 : vector<2x8xf32> to vector<2x8x1xf32>
    %72 = vector.broadcast %71 : vector<2x8x1xf32> to vector<2x8x8xf32>
    %73 = arith.subf %69, %72 : vector<2x8x8xf32>
    %74 = math.exp %73 : vector<2x8x8xf32>
    %cst_36 = arith.constant dense<0.000000e+00> : vector<2x8xf32>
    %75 = vector.multi_reduction <add>, %74, %cst_36 [2] : vector<2x8x8xf32> to vector<2x8xf32>
    %76 = vector.shape_cast %75 : vector<2x8xf32> to vector<2x8x1xf32>
    %77 = tpu.reciprocal %76 {approx = true} : vector<2x8x1xf32> -> vector<2x8x1xf32>
    %78 = vector.broadcast %77 : vector<2x8x1xf32> to vector<2x8x8xf32>
    %79 = arith.mulf %74, %78 : vector<2x8x8xf32>
    "tpu.trace_start"() <{level = 10 : i32, message = "bqk,bkd->bqd"}> : () -> ()
    %cst_37 = arith.constant dense<0.000000e+00> : vector<2x8x16xf32>
    %80 = tpu.matmul %79, %68, %cst_37 {dimension_numbers = #tpu.dot_dimension_numbers<[2], [1], [1], [2], [0, 0, 0, 1, 1, 2], [0], [0]>} : vector<2x8x8xf32>, vector<2x8x16xf32>, vector<2x8x16xf32> -> vector<2x8x16xf32>
    "tpu.trace_stop"() : () -> ()
    %81 = vector.shape_cast %80 : vector<2x8x16xf32> to vector<16x16xf32>
    %82 = vector.extract_strided_slice %24 {offsets = [32, 0], sizes = [16, 128], strides = [1, 1]} : vector<128x128xf32> to vector<16x128xf32>
    %cst_38 = arith.constant dense<0.000000e+00> : vector<16x128xf32>
    %83 = tpu.matmul %81, %82, %cst_38 {dimension_numbers = #tpu.dot_dimension_numbers<[1], [0], [0], [1], [0, 0, 1, 1], [], []>} : vector<16x16xf32>, vector<16x128xf32>, vector<16x128xf32> -> vector<16x128xf32>
    %84 = arith.addf %65, %83 : vector<16x128xf32>
    %85 = vector.extract_strided_slice %21 {offsets = [0, 0, 48], sizes = [2, 8, 16], strides = [1, 1, 1]} : vector<2x8x128xf32> to vector<2x8x16xf32>
    %86 = vector.extract_strided_slice %22 {offsets = [0, 0, 48], sizes = [2, 8, 16], strides = [1, 1, 1]} : vector<2x8x128xf32> to vector<2x8x16xf32>
    %87 = vector.extract_strided_slice %23 {offsets = [0, 0, 48], sizes = [2, 8, 16], strides = [1, 1, 1]} : vector<2x8x128xf32> to vector<2x8x16xf32>
    "tpu.trace_start"() <{level = 10 : i32, message = "bqd,bkd->bqk"}> : () -> ()
    %cst_39 = arith.constant dense<0.000000e+00> : vector<2x8x8xf32>
    %88 = tpu.matmul %85, %86, %cst_39 {dimension_numbers = #tpu.dot_dimension_numbers<[2], [2], [1], [1], [0, 0, 0, 1, 1, 1], [0], [0]>} : vector<2x8x16xf32>, vector<2x8x16xf32>, vector<2x8x8xf32> -> vector<2x8x8xf32>
    "tpu.trace_stop"() : () -> ()
    %cst_40 = arith.constant dense<0xFF800000> : vector<2x8xf32>
    %89 = vector.multi_reduction <maximumf>, %88, %cst_40 [2] : vector<2x8x8xf32> to vector<2x8xf32>
    %90 = vector.shape_cast %89 : vector<2x8xf32> to vector<2x8x1xf32>
    %91 = vector.broadcast %90 : vector<2x8x1xf32> to vector<2x8x8xf32>
    %92 = arith.subf %88, %91 : vector<2x8x8xf32>
    %93 = math.exp %92 : vector<2x8x8xf32>
    %cst_41 = arith.constant dense<0.000000e+00> : vector<2x8xf32>
    %94 = vector.multi_reduction <add>, %93, %cst_41 [2] : vector<2x8x8xf32> to vector<2x8xf32>
    %95 = vector.shape_cast %94 : vector<2x8xf32> to vector<2x8x1xf32>
    %96 = tpu.reciprocal %95 {approx = true} : vector<2x8x1xf32> -> vector<2x8x1xf32>
    %97 = vector.broadcast %96 : vector<2x8x1xf32> to vector<2x8x8xf32>
    %98 = arith.mulf %93, %97 : vector<2x8x8xf32>
    "tpu.trace_start"() <{level = 10 : i32, message = "bqk,bkd->bqd"}> : () -> ()
    %cst_42 = arith.constant dense<0.000000e+00> : vector<2x8x16xf32>
    %99 = tpu.matmul %98, %87, %cst_42 {dimension_numbers = #tpu.dot_dimension_numbers<[2], [1], [1], [2], [0, 0, 0, 1, 1, 2], [0], [0]>} : vector<2x8x8xf32>, vector<2x8x16xf32>, vector<2x8x16xf32> -> vector<2x8x16xf32>
    "tpu.trace_stop"() : () -> ()
    %100 = vector.shape_cast %99 : vector<2x8x16xf32> to vector<16x16xf32>
    %101 = vector.extract_strided_slice %24 {offsets = [48, 0], sizes = [16, 128], strides = [1, 1]} : vector<128x128xf32> to vector<16x128xf32>
    %cst_43 = arith.constant dense<0.000000e+00> : vector<16x128xf32>
    %102 = tpu.matmul %100, %101, %cst_43 {dimension_numbers = #tpu.dot_dimension_numbers<[1], [0], [0], [1], [0, 0, 1, 1], [], []>} : vector<16x16xf32>, vector<16x128xf32>, vector<16x128xf32> -> vector<16x128xf32>
    %103 = arith.addf %84, %102 : vector<16x128xf32>
    %104 = vector.extract_strided_slice %21 {offsets = [0, 0, 64], sizes = [2, 8, 16], strides = [1, 1, 1]} : vector<2x8x128xf32> to vector<2x8x16xf32>
    %105 = vector.extract_strided_slice %22 {offsets = [0, 0, 64], sizes = [2, 8, 16], strides = [1, 1, 1]} : vector<2x8x128xf32> to vector<2x8x16xf32>
    %106 = vector.extract_strided_slice %23 {offsets = [0, 0, 64], sizes = [2, 8, 16], strides = [1, 1, 1]} : vector<2x8x128xf32> to vector<2x8x16xf32>
    "tpu.trace_start"() <{level = 10 : i32, message = "bqd,bkd->bqk"}> : () -> ()
    %cst_44 = arith.constant dense<0.000000e+00> : vector<2x8x8xf32>
    %107 = tpu.matmul %104, %105, %cst_44 {dimension_numbers = #tpu.dot_dimension_numbers<[2], [2], [1], [1], [0, 0, 0, 1, 1, 1], [0], [0]>} : vector<2x8x16xf32>, vector<2x8x16xf32>, vector<2x8x8xf32> -> vector<2x8x8xf32>
    "tpu.trace_stop"() : () -> ()
    %cst_45 = arith.constant dense<0xFF800000> : vector<2x8xf32>
    %108 = vector.multi_reduction <maximumf>, %107, %cst_45 [2] : vector<2x8x8xf32> to vector<2x8xf32>
    %109 = vector.shape_cast %108 : vector<2x8xf32> to vector<2x8x1xf32>
    %110 = vector.broadcast %109 : vector<2x8x1xf32> to vector<2x8x8xf32>
    %111 = arith.subf %107, %110 : vector<2x8x8xf32>
    %112 = math.exp %111 : vector<2x8x8xf32>
    %cst_46 = arith.constant dense<0.000000e+00> : vector<2x8xf32>
    %113 = vector.multi_reduction <add>, %112, %cst_46 [2] : vector<2x8x8xf32> to vector<2x8xf32>
    %114 = vector.shape_cast %113 : vector<2x8xf32> to vector<2x8x1xf32>
    %115 = tpu.reciprocal %114 {approx = true} : vector<2x8x1xf32> -> vector<2x8x1xf32>
    %116 = vector.broadcast %115 : vector<2x8x1xf32> to vector<2x8x8xf32>
    %117 = arith.mulf %112, %116 : vector<2x8x8xf32>
    "tpu.trace_start"() <{level = 10 : i32, message = "bqk,bkd->bqd"}> : () -> ()
    %cst_47 = arith.constant dense<0.000000e+00> : vector<2x8x16xf32>
    %118 = tpu.matmul %117, %106, %cst_47 {dimension_numbers = #tpu.dot_dimension_numbers<[2], [1], [1], [2], [0, 0, 0, 1, 1, 2], [0], [0]>} : vector<2x8x8xf32>, vector<2x8x16xf32>, vector<2x8x16xf32> -> vector<2x8x16xf32>
    "tpu.trace_stop"() : () -> ()
    %119 = vector.shape_cast %118 : vector<2x8x16xf32> to vector<16x16xf32>
    %120 = vector.extract_strided_slice %24 {offsets = [64, 0], sizes = [16, 128], strides = [1, 1]} : vector<128x128xf32> to vector<16x128xf32>
    %cst_48 = arith.constant dense<0.000000e+00> : vector<16x128xf32>
    %121 = tpu.matmul %119, %120, %cst_48 {dimension_numbers = #tpu.dot_dimension_numbers<[1], [0], [0], [1], [0, 0, 1, 1], [], []>} : vector<16x16xf32>, vector<16x128xf32>, vector<16x128xf32> -> vector<16x128xf32>
    %122 = arith.addf %103, %121 : vector<16x128xf32>
    %123 = vector.extract_strided_slice %21 {offsets = [0, 0, 80], sizes = [2, 8, 16], strides = [1, 1, 1]} : vector<2x8x128xf32> to vector<2x8x16xf32>
    %124 = vector.extract_strided_slice %22 {offsets = [0, 0, 80], sizes = [2, 8, 16], strides = [1, 1, 1]} : vector<2x8x128xf32> to vector<2x8x16xf32>
    %125 = vector.extract_strided_slice %23 {offsets = [0, 0, 80], sizes = [2, 8, 16], strides = [1, 1, 1]} : vector<2x8x128xf32> to vector<2x8x16xf32>
    "tpu.trace_start"() <{level = 10 : i32, message = "bqd,bkd->bqk"}> : () -> ()
    %cst_49 = arith.constant dense<0.000000e+00> : vector<2x8x8xf32>
    %126 = tpu.matmul %123, %124, %cst_49 {dimension_numbers = #tpu.dot_dimension_numbers<[2], [2], [1], [1], [0, 0, 0, 1, 1, 1], [0], [0]>} : vector<2x8x16xf32>, vector<2x8x16xf32>, vector<2x8x8xf32> -> vector<2x8x8xf32>
    "tpu.trace_stop"() : () -> ()
    %cst_50 = arith.constant dense<0xFF800000> : vector<2x8xf32>
    %127 = vector.multi_reduction <maximumf>, %126, %cst_50 [2] : vector<2x8x8xf32> to vector<2x8xf32>
    %128 = vector.shape_cast %127 : vector<2x8xf32> to vector<2x8x1xf32>
    %129 = vector.broadcast %128 : vector<2x8x1xf32> to vector<2x8x8xf32>
    %130 = arith.subf %126, %129 : vector<2x8x8xf32>
    %131 = math.exp %130 : vector<2x8x8xf32>
    %cst_51 = arith.constant dense<0.000000e+00> : vector<2x8xf32>
    %132 = vector.multi_reduction <add>, %131, %cst_51 [2] : vector<2x8x8xf32> to vector<2x8xf32>
    %133 = vector.shape_cast %132 : vector<2x8xf32> to vector<2x8x1xf32>
    %134 = tpu.reciprocal %133 {approx = true} : vector<2x8x1xf32> -> vector<2x8x1xf32>
    %135 = vector.broadcast %134 : vector<2x8x1xf32> to vector<2x8x8xf32>
    %136 = arith.mulf %131, %135 : vector<2x8x8xf32>
    "tpu.trace_start"() <{level = 10 : i32, message = "bqk,bkd->bqd"}> : () -> ()
    %cst_52 = arith.constant dense<0.000000e+00> : vector<2x8x16xf32>
    %137 = tpu.matmul %136, %125, %cst_52 {dimension_numbers = #tpu.dot_dimension_numbers<[2], [1], [1], [2], [0, 0, 0, 1, 1, 2], [0], [0]>} : vector<2x8x8xf32>, vector<2x8x16xf32>, vector<2x8x16xf32> -> vector<2x8x16xf32>
    "tpu.trace_stop"() : () -> ()
    %138 = vector.shape_cast %137 : vector<2x8x16xf32> to vector<16x16xf32>
    %139 = vector.extract_strided_slice %24 {offsets = [80, 0], sizes = [16, 128], strides = [1, 1]} : vector<128x128xf32> to vector<16x128xf32>
    %cst_53 = arith.constant dense<0.000000e+00> : vector<16x128xf32>
    %140 = tpu.matmul %138, %139, %cst_53 {dimension_numbers = #tpu.dot_dimension_numbers<[1], [0], [0], [1], [0, 0, 1, 1], [], []>} : vector<16x16xf32>, vector<16x128xf32>, vector<16x128xf32> -> vector<16x128xf32>
    %141 = arith.addf %122, %140 : vector<16x128xf32>
    %142 = vector.extract_strided_slice %21 {offsets = [0, 0, 96], sizes = [2, 8, 16], strides = [1, 1, 1]} : vector<2x8x128xf32> to vector<2x8x16xf32>
    %143 = vector.extract_strided_slice %22 {offsets = [0, 0, 96], sizes = [2, 8, 16], strides = [1, 1, 1]} : vector<2x8x128xf32> to vector<2x8x16xf32>
    %144 = vector.extract_strided_slice %23 {offsets = [0, 0, 96], sizes = [2, 8, 16], strides = [1, 1, 1]} : vector<2x8x128xf32> to vector<2x8x16xf32>
    "tpu.trace_start"() <{level = 10 : i32, message = "bqd,bkd->bqk"}> : () -> ()
    %cst_54 = arith.constant dense<0.000000e+00> : vector<2x8x8xf32>
    %145 = tpu.matmul %142, %143, %cst_54 {dimension_numbers = #tpu.dot_dimension_numbers<[2], [2], [1], [1], [0, 0, 0, 1, 1, 1], [0], [0]>} : vector<2x8x16xf32>, vector<2x8x16xf32>, vector<2x8x8xf32> -> vector<2x8x8xf32>
    "tpu.trace_stop"() : () -> ()
    %cst_55 = arith.constant dense<0xFF800000> : vector<2x8xf32>
    %146 = vector.multi_reduction <maximumf>, %145, %cst_55 [2] : vector<2x8x8xf32> to vector<2x8xf32>
    %147 = vector.shape_cast %146 : vector<2x8xf32> to vector<2x8x1xf32>
    %148 = vector.broadcast %147 : vector<2x8x1xf32> to vector<2x8x8xf32>
    %149 = arith.subf %145, %148 : vector<2x8x8xf32>
    %150 = math.exp %149 : vector<2x8x8xf32>
    %cst_56 = arith.constant dense<0.000000e+00> : vector<2x8xf32>
    %151 = vector.multi_reduction <add>, %150, %cst_56 [2] : vector<2x8x8xf32> to vector<2x8xf32>
    %152 = vector.shape_cast %151 : vector<2x8xf32> to vector<2x8x1xf32>
    %153 = tpu.reciprocal %152 {approx = true} : vector<2x8x1xf32> -> vector<2x8x1xf32>
    %154 = vector.broadcast %153 : vector<2x8x1xf32> to vector<2x8x8xf32>
    %155 = arith.mulf %150, %154 : vector<2x8x8xf32>
    "tpu.trace_start"() <{level = 10 : i32, message = "bqk,bkd->bqd"}> : () -> ()
    %cst_57 = arith.constant dense<0.000000e+00> : vector<2x8x16xf32>
    %156 = tpu.matmul %155, %144, %cst_57 {dimension_numbers = #tpu.dot_dimension_numbers<[2], [1], [1], [2], [0, 0, 0, 1, 1, 2], [0], [0]>} : vector<2x8x8xf32>, vector<2x8x16xf32>, vector<2x8x16xf32> -> vector<2x8x16xf32>
    "tpu.trace_stop"() : () -> ()
    %157 = vector.shape_cast %156 : vector<2x8x16xf32> to vector<16x16xf32>
    %158 = vector.extract_strided_slice %24 {offsets = [96, 0], sizes = [16, 128], strides = [1, 1]} : vector<128x128xf32> to vector<16x128xf32>
    %cst_58 = arith.constant dense<0.000000e+00> : vector<16x128xf32>
    %159 = tpu.matmul %157, %158, %cst_58 {dimension_numbers = #tpu.dot_dimension_numbers<[1], [0], [0], [1], [0, 0, 1, 1], [], []>} : vector<16x16xf32>, vector<16x128xf32>, vector<16x128xf32> -> vector<16x128xf32>
    %160 = arith.addf %141, %159 : vector<16x128xf32>
    %161 = vector.extract_strided_slice %21 {offsets = [0, 0, 112], sizes = [2, 8, 16], strides = [1, 1, 1]} : vector<2x8x128xf32> to vector<2x8x16xf32>
    %162 = vector.extract_strided_slice %22 {offsets = [0, 0, 112], sizes = [2, 8, 16], strides = [1, 1, 1]} : vector<2x8x128xf32> to vector<2x8x16xf32>
    %163 = vector.extract_strided_slice %23 {offsets = [0, 0, 112], sizes = [2, 8, 16], strides = [1, 1, 1]} : vector<2x8x128xf32> to vector<2x8x16xf32>
    "tpu.trace_start"() <{level = 10 : i32, message = "bqd,bkd->bqk"}> : () -> ()
    %cst_59 = arith.constant dense<0.000000e+00> : vector<2x8x8xf32>
    %164 = tpu.matmul %161, %162, %cst_59 {dimension_numbers = #tpu.dot_dimension_numbers<[2], [2], [1], [1], [0, 0, 0, 1, 1, 1], [0], [0]>} : vector<2x8x16xf32>, vector<2x8x16xf32>, vector<2x8x8xf32> -> vector<2x8x8xf32>
    "tpu.trace_stop"() : () -> ()
    %cst_60 = arith.constant dense<0xFF800000> : vector<2x8xf32>
    %165 = vector.multi_reduction <maximumf>, %164, %cst_60 [2] : vector<2x8x8xf32> to vector<2x8xf32>
    %166 = vector.shape_cast %165 : vector<2x8xf32> to vector<2x8x1xf32>
    %167 = vector.broadcast %166 : vector<2x8x1xf32> to vector<2x8x8xf32>
    %168 = arith.subf %164, %167 : vector<2x8x8xf32>
    %169 = math.exp %168 : vector<2x8x8xf32>
    %cst_61 = arith.constant dense<0.000000e+00> : vector<2x8xf32>
    %170 = vector.multi_reduction <add>, %169, %cst_61 [2] : vector<2x8x8xf32> to vector<2x8xf32>
    %171 = vector.shape_cast %170 : vector<2x8xf32> to vector<2x8x1xf32>
    %172 = tpu.reciprocal %171 {approx = true} : vector<2x8x1xf32> -> vector<2x8x1xf32>
    %173 = vector.broadcast %172 : vector<2x8x1xf32> to vector<2x8x8xf32>
    %174 = arith.mulf %169, %173 : vector<2x8x8xf32>
    "tpu.trace_start"() <{level = 10 : i32, message = "bqk,bkd->bqd"}> : () -> ()
    %cst_62 = arith.constant dense<0.000000e+00> : vector<2x8x16xf32>
    %175 = tpu.matmul %174, %163, %cst_62 {dimension_numbers = #tpu.dot_dimension_numbers<[2], [1], [1], [2], [0, 0, 0, 1, 1, 2], [0], [0]>} : vector<2x8x8xf32>, vector<2x8x16xf32>, vector<2x8x16xf32> -> vector<2x8x16xf32>
    "tpu.trace_stop"() : () -> ()
    %176 = vector.shape_cast %175 : vector<2x8x16xf32> to vector<16x16xf32>
    %177 = vector.extract_strided_slice %24 {offsets = [112, 0], sizes = [16, 128], strides = [1, 1]} : vector<128x128xf32> to vector<16x128xf32>
    %cst_63 = arith.constant dense<0.000000e+00> : vector<16x128xf32>
    %178 = tpu.matmul %176, %177, %cst_63 {dimension_numbers = #tpu.dot_dimension_numbers<[1], [0], [0], [1], [0, 0, 1, 1], [], []>} : vector<16x16xf32>, vector<16x128xf32>, vector<16x128xf32> -> vector<16x128xf32>
    %179 = arith.addf %160, %178 : vector<16x128xf32>
    %180 = vector.shape_cast %179 : vector<16x128xf32> to vector<2x8x128xf32>
    %c0_64 = arith.constant 0 : index
    %c0_65 = arith.constant 0 : index
    %c0_66 = arith.constant 0 : index
    %181 = vector.load %arg11[%c0_64, %c0_65, %c0_66] : memref<2x8x128xf32, #tpu.memory_space<vmem>>, vector<2x8x128xf32>
    tpu.vector_store %arg11[%c0_64, %c0_65, %c0_66], %180 {strides = array<i32>} : memref<2x8x128xf32, #tpu.memory_space<vmem>>, vector<2x8x128xf32>,
    return
  }
  func.func @transform_0(%arg0: i32) -> (i32, i32, i32) {
    %c0_i32 = arith.constant 0 : i32
    %c0_i32_0 = arith.constant 0 : i32
    %c0_i32_1 = arith.constant 0 : i32
    return %arg0, %c0_i32, %c0_i32_0 : i32, i32, i32
  }
  func.func @transform_1(%arg0: i32) -> (i32, i32, i32) {
    %c0_i32 = arith.constant 0 : i32
    %c0_i32_0 = arith.constant 0 : i32
    %c0_i32_1 = arith.constant 0 : i32
    return %arg0, %c0_i32, %c0_i32_0 : i32, i32, i32
  }
  func.func @transform_2(%arg0: i32) -> (i32, i32) {
    %c0_i32 = arith.constant 0 : i32
    %c0_i32_0 = arith.constant 0 : i32
    %c0_i32_1 = arith.constant 0 : i32
    return %c0_i32, %c0_i32_0 : i32, i32
  }
  func.func @transform_3(%arg0: i32) -> (i32, i32) {
    %c0_i32 = arith.constant 0 : i32
    %c0_i32_0 = arith.constant 0 : i32
    %c0_i32_1 = arith.constant 0 : i32
    return %c0_i32, %c0_i32_0 : i32, i32
  }
  func.func @transform_4(%arg0: i32) -> (i32, i32) {
    %c0_i32 = arith.constant 0 : i32
    %c0_i32_0 = arith.constant 0 : i32
    %c0_i32_1 = arith.constant 0 : i32
    return %c0_i32, %c0_i32_0 : i32, i32
  }
  func.func @transform_5(%arg0: i32) -> (i32, i32) {
    %c0_i32 = arith.constant 0 : i32
    %c0_i32_0 = arith.constant 0 : i32
    %c0_i32_1 = arith.constant 0 : i32
    return %c0_i32, %c0_i32_0 : i32, i32
  }
  func.func @transform_6(%arg0: i32) -> (i32, i32) {
    %c0_i32 = arith.constant 0 : i32
    %c0_i32_0 = arith.constant 0 : i32
    %c0_i32_1 = arith.constant 0 : i32
    return %c0_i32, %c0_i32_0 : i32, i32
  }
  func.func @transform_7(%arg0: i32) -> (i32, i32) {
    %c0_i32 = arith.constant 0 : i32
    %c0_i32_0 = arith.constant 0 : i32
    %c0_i32_1 = arith.constant 0 : i32
    return %c0_i32, %c0_i32_0 : i32, i32
  }
  func.func @transform_8(%arg0: i32) -> (i32, i32) {
    %c0_i32 = arith.constant 0 : i32
    %c0_i32_0 = arith.constant 0 : i32
    %c0_i32_1 = arith.constant 0 : i32
    return %c0_i32, %c0_i32_0 : i32, i32
  }
  func.func @transform_9(%arg0: i32) -> (i32, i32) {
    %c0_i32 = arith.constant 0 : i32
    %c0_i32_0 = arith.constant 0 : i32
    %c0_i32_1 = arith.constant 0 : i32
    return %c0_i32, %c0_i32_0 : i32, i32
  }
  func.func @transform_10(%arg0: i32) -> (i32, i32, i32) {
    %c0_i32 = arith.constant 0 : i32
    %c0_i32_0 = arith.constant 0 : i32
    %c0_i32_1 = arith.constant 0 : i32
    return %arg0, %c0_i32, %c0_i32_0 : i32, i32, i32
  }
}

</mosaic_0001>

<llo_original>
// kernel: tpu_custom_call.1
$region0: #{tpu_custom_call.1}
  #allocation0 [shape = 'u32[]', space=smem, size = 0x4, offset = 0x4, fixed_abs, tag = 'smem constant byte address 0x4 - core index']
  #allocation1 [shape = 'u32[144,128]{1,0:T(1,128)}', space=vmem, size = 0x12000, scoped, tag = 'internal scratch']
  %s0 = inlined_call_operand.hbm [shape: f32[2,8,128], index: 0, kind: input, shape index: {}]
  %s1 = inlined_call_operand.hbm [shape: f32[2,8,128], index: 1, kind: input, shape index: {}]
  %s2 = inlined_call_operand.hbm [shape: f32[128,128], index: 2, kind: input, shape index: {}]
  %s3 = inlined_call_operand.vmem [shape: f32[1,128], index: 3, kind: input, shape index: {}]
  %s4 = inlined_call_operand.hbm [shape: f32[128,128], index: 4, kind: input, shape index: {}]
  %s5 = inlined_call_operand.vmem [shape: f32[1,128], index: 5, kind: input, shape index: {}]
  %s6 = inlined_call_operand.hbm [shape: f32[128,128], index: 6, kind: input, shape index: {}]
  %s7 = inlined_call_operand.vmem [shape: f32[1,128], index: 7, kind: input, shape index: {}]
  %s8 = inlined_call_operand.hbm [shape: f32[128,128], index: 8, kind: input, shape index: {}]
  %s9 = inlined_call_operand.vmem [shape: f32[1,128], index: 9, kind: input, shape index: {}]
  %s10 = inlined_call_operand.hbm [shape: f32[2,8,128], index: 10, kind: output, shape index: {}]
  %s11 = sld [smem:[#allocation0]]
  $region74: #{tpu_custom_call.1} parent=0
    _
  %s13 = ssub.s32 1, %s11
  %s14 = scalar_select 0, %s13, %s11
  $region1: #{tpu_custom_call.1} parent=0
    #allocation2 [shape = 'u8[8192]{0}', space=vmem, size = 0x2000, scoped, tag = 'input window, operand 0, single buffered']
    #allocation3 [shape = 's32[1]{0}', space=sflag, size = 0x4, scoped, tag = 'scoped memory for tpu_custom_call.1']
    #allocation4 [shape = 's32[1]{0}', space=sflag, size = 0x4, scoped, tag = 'scoped memory for tpu_custom_call.1']
    #allocation5 [shape = 'u8[8192]{0}', space=vmem, size = 0x2000, scoped, tag = 'input window, operand 1, single buffered']
    #allocation6 [shape = 's32[1]{0}', space=sflag, size = 0x4, scoped, tag = 'scoped memory for tpu_custom_call.1']
    #allocation7 [shape = 'u8[65536]{0}', space=vmem, size = 0x10000, scoped, tag = 'input window, operand 2, single buffered']
    #allocation8 [shape = 'u8[65536]{0}', space=vmem, size = 0x10000, scoped, tag = 'input window, operand 4, single buffered']
    #allocation9 [shape = 's32[1]{0}', space=sflag, size = 0x4, scoped, tag = 'scoped memory for tpu_custom_call.1']
    #allocation10 [shape = 'u8[65536]{0}', space=vmem, size = 0x10000, scoped, tag = 'input window, operand 6, single buffered']
    #allocation11 [shape = 'u8[65536]{0}', space=vmem, size = 0x10000, scoped, tag = 'input window, operand 8, single buffered']
    #allocation12 [shape = 's32[1]{0}', space=sflag, size = 0x4, scoped, tag = 'scoped memory for tpu_custom_call.1']
    #allocation13 [shape = 'u8[8192]{0}', space=vmem, size = 0x2000, scoped, tag = 'output window, operand 0, single buffered']
    %15 = vsyncpa [#allocation3], 0
    %16 = vsyncpa [#allocation6], 0
    %17 = vsyncpa [#allocation9], 0
    %18 = vsyncpa [#allocation12], 0
    %19 = vsyncpa [#allocation4], 0
    // Predicated region
    $region2: #{tpu_custom_call.1} parent=1 // pred_check
      _
    $region3: #{tpu_custom_call.1} parent=1 // pred_check_branch
      %21 = sbr.rel (0) target = $region5
    $region4: #{tpu_custom_call.1} parent=1 // pred_region
      %s23 = ssub.s32 256, 256
      %24 = vsyncadd [#allocation3], %s23
      %s25 = sshll.u32 [#allocation2], 4
      %s26 = int_to_ptr.vmem [resolvable:$true] %s25
      %31 = dma.hbm_to_vmem [thread:$0]  %s0, 256, %s26, [#allocation3], 128, 128, 8
    $region5: #{tpu_custom_call.1} parent=1 // pred_fallthru
      _
    // Predicated region
    $region6: #{tpu_custom_call.1} parent=1 // pred_check
      _
    $region7: #{tpu_custom_call.1} parent=1 // pred_check_branch
      %33 = sbr.rel (0) target = $region9
    $region8: #{tpu_custom_call.1} parent=1 // pred_region
      %s35 = ssub.s32 256, 256
      %36 = vsyncadd [#allocation6], %s35
      %s37 = sshll.u32 [#allocation5], 4
      %s38 = int_to_ptr.vmem [resolvable:$true] %s37
      %43 = dma.hbm_to_vmem [thread:$0]  %s1, 256, %s38, [#allocation6], 128, 128, 8
    $region9: #{tpu_custom_call.1} parent=1 // pred_fallthru
      _
    // Predicated region
    $region10: #{tpu_custom_call.1} parent=1 // pred_check
      _
    $region11: #{tpu_custom_call.1} parent=1 // pred_check_branch
      %45 = sbr.rel (0) target = $region13
    $region12: #{tpu_custom_call.1} parent=1 // pred_region
      %s47 = ssub.s32 2048, 2048
      %48 = vsyncadd [#allocation6], %s47
      %s49 = sshll.u32 [#allocation7], 4
      %s50 = int_to_ptr.vmem [resolvable:$true] %s49
      %55 = dma.hbm_to_vmem [thread:$0]  %s2, 2048, %s50, [#allocation6], 128, 128, 8
    $region13: #{tpu_custom_call.1} parent=1 // pred_fallthru
      _
    // Predicated region
    $region14: #{tpu_custom_call.1} parent=1 // pred_check
      _
    $region15: #{tpu_custom_call.1} parent=1 // pred_check_branch
      %57 = sbr.rel (0) target = $region17
    $region16: #{tpu_custom_call.1} parent=1 // pred_region
      _
    $region17: #{tpu_custom_call.1} parent=1 // pred_fallthru
      _
    // Predicated region
    $region18: #{tpu_custom_call.1} parent=1 // pred_check
      _
    $region19: #{tpu_custom_call.1} parent=1 // pred_check_branch
      %59 = sbr.rel (0) target = $region21
    $region20: #{tpu_custom_call.1} parent=1 // pred_region
      %s61 = ssub.s32 2048, 2048
      %62 = vsyncadd [#allocation9], %s61
      %s63 = sshll.u32 [#allocation8], 4
      %s64 = int_to_ptr.vmem [resolvable:$true] %s63
      %69 = dma.hbm_to_vmem [thread:$0]  %s4, 2048, %s64, [#allocation9], 128, 128, 8
    $region21: #{tpu_custom_call.1} parent=1 // pred_fallthru
      _
    // Predicated region
    $region22: #{tpu_custom_call.1} parent=1 // pred_check
      _
    $region23: #{tpu_custom_call.1} parent=1 // pred_check_branch
      %71 = sbr.rel (0) target = $region25
    $region24: #{tpu_custom_call.1} parent=1 // pred_region
      _
    $region25: #{tpu_custom_call.1} parent=1 // pred_fallthru
      _
    // Predicated region
    $region26: #{tpu_custom_call.1} parent=1 // pred_check
      _
    $region27: #{tpu_custom_call.1} parent=1 // pred_check_branch
      %73 = sbr.rel (0) target = $region29
    $region28: #{tpu_custom_call.1} parent=1 // pred_region
      %s75 = ssub.s32 2048, 2048
      %76 = vsyncadd [#allocation9], %s75
      %s77 = sshll.u32 [#allocation10], 4
      %s78 = int_to_ptr.vmem [resolvable:$true] %s77
      %83 = dma.hbm_to_vmem [thread:$0]  %s6, 2048, %s78, [#allocation9], 128, 128, 8
    $region29: #{tpu_custom_call.1} parent=1 // pred_fallthru
      _
    // Predicated region
    $region30: #{tpu_custom_call.1} parent=1 // pred_check
      _
    $region31: #{tpu_custom_call.1} parent=1 // pred_check_branch
      %85 = sbr.rel (0) target = $region33
    $region32: #{tpu_custom_call.1} parent=1 // pred_region
      _
    $region33: #{tpu_custom_call.1} parent=1 // pred_fallthru
      _
    // Predicated region
    $region34: #{tpu_custom_call.1} parent=1 // pred_check
      _
    $region35: #{tpu_custom_call.1} parent=1 // pred_check_branch
      %87 = sbr.rel (0) target = $region37
    $region36: #{tpu_custom_call.1} parent=1 // pred_region
      %s89 = ssub.s32 2048, 2048
      %90 = vsyncadd [#allocation12], %s89
      %s91 = sshll.u32 [#allocation11], 4
      %s92 = int_to_ptr.vmem [resolvable:$true] %s91
      %97 = dma.hbm_to_vmem [thread:$0]  %s8, 2048, %s92, [#allocation12], 128, 128, 8
    $region37: #{tpu_custom_call.1} parent=1 // pred_fallthru
      _
    // Predicated region
    $region38: #{tpu_custom_call.1} parent=1 // pred_check
      _
    $region39: #{tpu_custom_call.1} parent=1 // pred_check_branch
      %99 = sbr.rel (0) target = $region41
    $region40: #{tpu_custom_call.1} parent=1 // pred_region
      _
    $region41: #{tpu_custom_call.1} parent=1 // pred_fallthru
      _
    // Predicated region
    $region42: #{tpu_custom_call.1} parent=1 // pred_check
      _
    $region43: #{tpu_custom_call.1} parent=1 // pred_check_branch
      %101 = sbr.rel (0) target = $region45
    $region44: #{tpu_custom_call.1} parent=1 // pred_region
      %102 = dma.done [#allocation3], 256
    $region45: #{tpu_custom_call.1} parent=1 // pred_fallthru
      _
    // Predicated region
    $region46: #{tpu_custom_call.1} parent=1 // pred_check
      _
    $region47: #{tpu_custom_call.1} parent=1 // pred_check_branch
      %104 = sbr.rel (0) target = $region49
    $region48: #{tpu_custom_call.1} parent=1 // pred_region
      %105 = dma.done [#allocation6], 256
    $region49: #{tpu_custom_call.1} parent=1 // pred_fallthru
      _
    // Predicated region
    $region50: #{tpu_custom_call.1} parent=1 // pred_check
      _
    $region51: #{tpu_custom_call.1} parent=1 // pred_check_branch
      %107 = sbr.rel (0) target = $region53
    $region52: #{tpu_custom_call.1} parent=1 // pred_region
      %108 = dma.done [#allocation6], 2048
    $region53: #{tpu_custom_call.1} parent=1 // pred_fallthru
      _
    // Predicated region
    $region54: #{tpu_custom_call.1} parent=1 // pred_check
      _
    $region55: #{tpu_custom_call.1} parent=1 // pred_check_branch
      %110 = sbr.rel (0) target = $region57
    $region56: #{tpu_custom_call.1} parent=1 // pred_region
      %111 = dma.done [#allocation9], 2048
    $region57: #{tpu_custom_call.1} parent=1 // pred_fallthru
      _
    // Predicated region
    $region58: #{tpu_custom_call.1} parent=1 // pred_check
      _
    $region59: #{tpu_custom_call.1} parent=1 // pred_check_branch
      %113 = sbr.rel (0) target = $region61
    $region60: #{tpu_custom_call.1} parent=1 // pred_region
      %114 = dma.done [#allocation9], 2048
    $region61: #{tpu_custom_call.1} parent=1 // pred_fallthru
      _
    // Predicated region
    $region62: #{tpu_custom_call.1} parent=1 // pred_check
      _
    $region63: #{tpu_custom_call.1} parent=1 // pred_check_branch
      %116 = sbr.rel (0) target = $region65
    $region64: #{tpu_custom_call.1} parent=1 // pred_region
      %117 = dma.done [#allocation12], 2048
    $region65: #{tpu_custom_call.1} parent=1 // pred_fallthru
      _
    %v118 = vld [vmem:[#allocation2] sm:$0xff]
    %v119 = vld [vmem:[#allocation2 + $0x8] sm:$0xff]
    %v120 = vld [vmem:[#allocation5] sm:$0xff]
    %v121 = vld [vmem:[#allocation5 + $0x8] sm:$0xff]
    %v122 = vld [vmem:[#allocation7] sm:$0xff]
    %v123 = vld [vmem:[#allocation7 + $0x8] sm:$0xff]
    %v124 = vld [vmem:[#allocation7 + $0x10] sm:$0xff]
    %v125 = vld [vmem:[#allocation7 + $0x18] sm:$0xff]
    %v126 = vld [vmem:[#allocation7 + $0x20] sm:$0xff]
    %v127 = vld [vmem:[#allocation7 + $0x28] sm:$0xff]
    %v128 = vld [vmem:[#allocation7 + $0x30] sm:$0xff]
    %v129 = vld [vmem:[#allocation7 + $0x38] sm:$0xff]
    %v130 = vld [vmem:[#allocation7 + $0x40] sm:$0xff]
    %v131 = vld [vmem:[#allocation7 + $0x48] sm:$0xff]
    %v132 = vld [vmem:[#allocation7 + $0x50] sm:$0xff]
    %v133 = vld [vmem:[#allocation7 + $0x58] sm:$0xff]
    %v134 = vld [vmem:[#allocation7 + $0x60] sm:$0xff]
    %v135 = vld [vmem:[#allocation7 + $0x68] sm:$0xff]
    %v136 = vld [vmem:[#allocation7 + $0x70] sm:$0xff]
    %v137 = vld [vmem:[#allocation7 + $0x78] sm:$0xff]
    %v138 = vld [vmem:[%s3] sm:$0x1]
    %v140 = vlaneseq
    %v141 = vshrl.u32 %v140, 7
    %v142 = vsub.s32 0, %v141
    %v143 = vrot.slane %v138, %v142
    %145 = vmatprep.subr.mxu0 0.0
    %146 = vmatpush1.msra.mxu0 %v122
    %147 = vmatprep.subr.mxu0 0.0
    %148 = vmatpush1.msra.mxu0 %v123
    %149 = vmatprep.subr.mxu0 0.0
    %150 = vmatpush1.msra.mxu0 %v124
    %151 = vmatprep.subr.mxu0 0.0
    %152 = vmatpush1.msra.mxu0 %v125
    %153 = vmatprep.subr.mxu0 0.0
    %154 = vmatpush1.msra.mxu0 %v126
    %155 = vmatprep.subr.mxu0 0.0
    %156 = vmatpush1.msra.mxu0 %v127
    %157 = vmatprep.subr.mxu0 0.0
    %158 = vmatpush1.msra.mxu0 %v128
    %159 = vmatprep.subr.mxu0 0.0
    %160 = vmatpush1.msra.mxu0 %v129
    %161 = vmatprep.subr.mxu0 0.0
    %162 = vmatpush1.msra.mxu0 %v130
    %163 = vmatprep.subr.mxu0 0.0
    %164 = vmatpush1.msra.mxu0 %v131
    %165 = vmatprep.subr.mxu0 0.0
    %166 = vmatpush1.msra.mxu0 %v132
    %167 = vmatprep.subr.mxu0 0.0
    %168 = vmatpush1.msra.mxu0 %v133
    %169 = vmatprep.subr.mxu0 0.0
    %170 = vmatpush1.msra.mxu0 %v134
    %171 = vmatprep.subr.mxu0 0.0
    %172 = vmatpush1.msra.mxu0 %v135
    %173 = vmatprep.subr.mxu0 0.0
    %174 = vmatpush1.msra.mxu0 %v136
    %175 = vmatprep.subr.mxu0 0.0
    %176 = vmatpush1.msra.mxu0 %v137
    %177 = vmatprep.subr.mxu0 0.0
    %178 = vmatpush1.msra.mxu0 0.0
    %179 = vmatprep.subr.mxu0 0.0
    %180 = vmatpush1.msra.mxu0 0.0
    %181 = vmatprep.subr.mxu0 0.0
    %182 = vmatpush1.msra.mxu0 0.0
    %183 = vmatprep.subr.mxu0 0.0
    %184 = vmatpush1.msra.mxu0 0.0
    %185 = vmatprep.subr.mxu0 0.0
    %186 = vmatpush1.msra.mxu0 0.0
    %187 = vmatprep.subr.mxu0 0.0
    %188 = vmatpush1.msra.mxu0 0.0
    %189 = vmatprep.subr.mxu0 0.0
    %190 = vmatpush1.msra.mxu0 0.0
    %191 = vmatprep.subr.mxu0 0.0
    %192 = vmatpush1.msra.mxu0 0.0
    %193 = vmatprep.subr.mxu0 0.0
    %194 = vmatpush1.msra.mxu0 0.0
    %195 = vmatprep.subr.mxu0 0.0
    %196 = vmatpush1.msra.mxu0 0.0
    %197 = vmatprep.subr.mxu0 0.0
    %198 = vmatpush1.msra.mxu0 0.0
    %199 = vmatprep.subr.mxu0 0.0
    %200 = vmatpush1.msra.mxu0 0.0
    %201 = vmatprep.subr.mxu0 0.0
    %202 = vmatpush1.msra.mxu0 0.0
    %203 = vmatprep.subr.mxu0 0.0
    %204 = vmatpush1.msra.mxu0 0.0
    %205 = vmatprep.subr.mxu0 0.0
    %206 = vmatpush1.msra.mxu0 0.0
    %207 = vmatprep.subr.mxu0 0.0
    %208 = vmatpush1.msra.mxu0 0.0
    %209 = vmatprep.mubr.f32.mxu0 0.0
    %210 = vmatmul.mubr.f32.gmra.mrb[0].mxu0 %v118
    %v211 = vpop.f32.mrb[0].mxu0
    %v212 = vadd.f32 %v143, %v211
    %v213 = vpop.f32.mrb[0].mxu0
    %214 = vmatprep.mubr.f32.mxu0 0.0
    %215 = vmatmul.mubr.f32.gmra.mrb[0].mxu0 %v119
    %v216 = vpop.f32.mrb[0].mxu0
    %v217 = vadd.f32 %v143, %v216
    %v218 = vpop.f32.mrb[0].mxu0
    %219 = vdwg.mxu0
    %v220 = vld [vmem:[#allocation8] sm:$0xff]
    %v221 = vld [vmem:[#allocation8 + $0x8] sm:$0xff]
    %v222 = vld [vmem:[#allocation8 + $0x10] sm:$0xff]
    %v223 = vld [vmem:[#allocation8 + $0x18] sm:$0xff]
    %v224 = vld [vmem:[#allocation8 + $0x20] sm:$0xff]
    %v225 = vld [vmem:[#allocation8 + $0x28] sm:$0xff]
    %v226 = vld [vmem:[#allocation8 + $0x30] sm:$0xff]
    %v227 = vld [vmem:[#allocation8 + $0x38] sm:$0xff]
    %v228 = vld [vmem:[#allocation8 + $0x40] sm:$0xff]
    %v229 = vld [vmem:[#allocation8 + $0x48] sm:$0xff]
    %v230 = vld [vmem:[#allocation8 + $0x50] sm:$0xff]
    %v231 = vld [vmem:[#allocation8 + $0x58] sm:$0xff]
    %v232 = vld [vmem:[#allocation8 + $0x60] sm:$0xff]
    %v233 = vld [vmem:[#allocation8 + $0x68] sm:$0xff]
    %v234 = vld [vmem:[#allocation8 + $0x70] sm:$0xff]
    %v235 = vld [vmem:[#allocation8 + $0x78] sm:$0xff]
    %v236 = vld [vmem:[%s5] sm:$0x1]
    %v238 = vlaneseq
    %v239 = vshrl.u32 %v238, 7
    %v240 = vsub.s32 0, %v239
    %v241 = vrot.slane %v236, %v240
    %243 = vmatprep.subr.mxu0 0.0
    %244 = vmatpush1.msra.mxu0 %v220
    %245 = vmatprep.subr.mxu0 0.0
    %246 = vmatpush1.msra.mxu0 %v221
    %247 = vmatprep.subr.mxu0 0.0
    %248 = vmatpush1.msra.mxu0 %v222
    %249 = vmatprep.subr.mxu0 0.0
    %250 = vmatpush1.msra.mxu0 %v223
    %251 = vmatprep.subr.mxu0 0.0
    %252 = vmatpush1.msra.mxu0 %v224
    %253 = vmatprep.subr.mxu0 0.0
    %254 = vmatpush1.msra.mxu0 %v225
    %255 = vmatprep.subr.mxu0 0.0
    %256 = vmatpush1.msra.mxu0 %v226
    %257 = vmatprep.subr.mxu0 0.0
    %258 = vmatpush1.msra.mxu0 %v227
    %259 = vmatprep.subr.mxu0 0.0
    %260 = vmatpush1.msra.mxu0 %v228
    %261 = vmatprep.subr.mxu0 0.0
    %262 = vmatpush1.msra.mxu0 %v229
    %263 = vmatprep.subr.mxu0 0.0
    %264 = vmatpush1.msra.mxu0 %v230
    %265 = vmatprep.subr.mxu0 0.0
    %266 = vmatpush1.msra.mxu0 %v231
    %267 = vmatprep.subr.mxu0 0.0
    %268 = vmatpush1.msra.mxu0 %v232
    %269 = vmatprep.subr.mxu0 0.0
    %270 = vmatpush1.msra.mxu0 %v233
    %271 = vmatprep.subr.mxu0 0.0
    %272 = vmatpush1.msra.mxu0 %v234
    %273 = vmatprep.subr.mxu0 0.0
    %274 = vmatpush1.msra.mxu0 %v235
    %275 = vmatprep.subr.mxu0 0.0
    %276 = vmatpush1.msra.mxu0 0.0
    %277 = vmatprep.subr.mxu0 0.0
    %278 = vmatpush1.msra.mxu0 0.0
    %279 = vmatprep.subr.mxu0 0.0
    %280 = vmatpush1.msra.mxu0 0.0
    %281 = vmatprep.subr.mxu0 0.0
    %282 = vmatpush1.msra.mxu0 0.0
    %283 = vmatprep.subr.mxu0 0.0
    %284 = vmatpush1.msra.mxu0 0.0
    %285 = vmatprep.subr.mxu0 0.0
    %286 = vmatpush1.msra.mxu0 0.0
    %287 = vmatprep.subr.mxu0 0.0
    %288 = vmatpush1.msra.mxu0 0.0
    %289 = vmatprep.subr.mxu0 0.0
    %290 = vmatpush1.msra.mxu0 0.0
    %291 = vmatprep.subr.mxu0 0.0
    %292 = vmatpush1.msra.mxu0 0.0
    %293 = vmatprep.subr.mxu0 0.0
    %294 = vmatpush1.msra.mxu0 0.0
    %295 = vmatprep.subr.mxu0 0.0
    %296 = vmatpush1.msra.mxu0 0.0
    %297 = vmatprep.subr.mxu0 0.0
    %298 = vmatpush1.msra.mxu0 0.0
    %299 = vmatprep.subr.mxu0 0.0
    %300 = vmatpush1.msra.mxu0 0.0
    %301 = vmatprep.subr.mxu0 0.0
    %302 = vmatpush1.msra.mxu0 0.0
    %303 = vmatprep.subr.mxu0 0.0
    %304 = vmatpush1.msra.mxu0 0.0
    %305 = vmatprep.subr.mxu0 0.0
    %306 = vmatpush1.msra.mxu0 0.0
    %307 = vmatprep.mubr.f32.mxu0 0.0
    %308 = vmatmul.mubr.f32.gmra.mrb[0].mxu0 %v120
    %v309 = vpop.f32.mrb[0].mxu0
    %v310 = vadd.f32 %v241, %v309
    %v311 = vpop.f32.mrb[0].mxu0
    %312 = vmatprep.mubr.f32.mxu0 0.0
    %313 = vmatmul.mubr.f32.gmra.mrb[0].mxu0 %v121
    %v314 = vpop.f32.mrb[0].mxu0
    %v315 = vadd.f32 %v241, %v314
    %v316 = vpop.f32.mrb[0].mxu0
    %317 = vdwg.mxu0
    %v318 = vld [vmem:[#allocation10] sm:$0xff]
    %v319 = vld [vmem:[#allocation10 + $0x8] sm:$0xff]
    %v320 = vld [vmem:[#allocation10 + $0x10] sm:$0xff]
    %v321 = vld [vmem:[#allocation10 + $0x18] sm:$0xff]
    %v322 = vld [vmem:[#allocation10 + $0x20] sm:$0xff]
    %v323 = vld [vmem:[#allocation10 + $0x28] sm:$0xff]
    %v324 = vld [vmem:[#allocation10 + $0x30] sm:$0xff]
    %v325 = vld [vmem:[#allocation10 + $0x38] sm:$0xff]
    %v326 = vld [vmem:[#allocation10 + $0x40] sm:$0xff]
    %v327 = vld [vmem:[#allocation10 + $0x48] sm:$0xff]
    %v328 = vld [vmem:[#allocation10 + $0x50] sm:$0xff]
    %v329 = vld [vmem:[#allocation10 + $0x58] sm:$0xff]
    %v330 = vld [vmem:[#allocation10 + $0x60] sm:$0xff]
    %v331 = vld [vmem:[#allocation10 + $0x68] sm:$0xff]
    %v332 = vld [vmem:[#allocation10 + $0x70] sm:$0xff]
    %v333 = vld [vmem:[#allocation10 + $0x78] sm:$0xff]
    %v334 = vld [vmem:[%s7] sm:$0x1]
    %v336 = vlaneseq
    %v337 = vshrl.u32 %v336, 7
    %v338 = vsub.s32 0, %v337
    %v339 = vrot.slane %v334, %v338
    %341 = vmatprep.subr.mxu0 0.0
    %342 = vmatpush1.msra.mxu0 %v318
    %343 = vmatprep.subr.mxu0 0.0
    %344 = vmatpush1.msra.mxu0 %v319
    %345 = vmatprep.subr.mxu0 0.0
    %346 = vmatpush1.msra.mxu0 %v320
    %347 = vmatprep.subr.mxu0 0.0
    %348 = vmatpush1.msra.mxu0 %v321
    %349 = vmatprep.subr.mxu0 0.0
    %350 = vmatpush1.msra.mxu0 %v322
    %351 = vmatprep.subr.mxu0 0.0
    %352 = vmatpush1.msra.mxu0 %v323
    %353 = vmatprep.subr.mxu0 0.0
    %354 = vmatpush1.msra.mxu0 %v324
    %355 = vmatprep.subr.mxu0 0.0
    %356 = vmatpush1.msra.mxu0 %v325
    %357 = vmatprep.subr.mxu0 0.0
    %358 = vmatpush1.msra.mxu0 %v326
    %359 = vmatprep.subr.mxu0 0.0
    %360 = vmatpush1.msra.mxu0 %v327
    %361 = vmatprep.subr.mxu0 0.0
    %362 = vmatpush1.msra.mxu0 %v328
    %363 = vmatprep.subr.mxu0 0.0
    %364 = vmatpush1.msra.mxu0 %v329
    %365 = vmatprep.subr.mxu0 0.0
    %366 = vmatpush1.msra.mxu0 %v330
    %367 = vmatprep.subr.mxu0 0.0
    %368 = vmatpush1.msra.mxu0 %v331
    %369 = vmatprep.subr.mxu0 0.0
    %370 = vmatpush1.msra.mxu0 %v332
    %371 = vmatprep.subr.mxu0 0.0
    %372 = vmatpush1.msra.mxu0 %v333
    %373 = vmatprep.subr.mxu0 0.0
    %374 = vmatpush1.msra.mxu0 0.0
    %375 = vmatprep.subr.mxu0 0.0
    %376 = vmatpush1.msra.mxu0 0.0
    %377 = vmatprep.subr.mxu0 0.0
    %378 = vmatpush1.msra.mxu0 0.0
    %379 = vmatprep.subr.mxu0 0.0
    %380 = vmatpush1.msra.mxu0 0.0
    %381 = vmatprep.subr.mxu0 0.0
    %382 = vmatpush1.msra.mxu0 0.0
    %383 = vmatprep.subr.mxu0 0.0
    %384 = vmatpush1.msra.mxu0 0.0
    %385 = vmatprep.subr.mxu0 0.0
    %386 = vmatpush1.msra.mxu0 0.0
    %387 = vmatprep.subr.mxu0 0.0
    %388 = vmatpush1.msra.mxu0 0.0
    %389 = vmatprep.subr.mxu0 0.0
    %390 = vmatpush1.msra.mxu0 0.0
    %391 = vmatprep.subr.mxu0 0.0
    %392 = vmatpush1.msra.mxu0 0.0
    %393 = vmatprep.subr.mxu0 0.0
    %394 = vmatpush1.msra.mxu0 0.0
    %395 = vmatprep.subr.mxu0 0.0
    %396 = vmatpush1.msra.mxu0 0.0
    %397 = vmatprep.subr.mxu0 0.0
    %398 = vmatpush1.msra.mxu0 0.0
    %399 = vmatprep.subr.mxu0 0.0
    %400 = vmatpush1.msra.mxu0 0.0
    %401 = vmatprep.subr.mxu0 0.0
    %402 = vmatpush1.msra.mxu0 0.0
    %403 = vmatprep.subr.mxu0 0.0
    %404 = vmatpush1.msra.mxu0 0.0
    %405 = vmatprep.mubr.f32.mxu0 0.0
    %406 = vmatmul.mubr.f32.gmra.mrb[0].mxu0 %v120
    %v407 = vpop.f32.mrb[0].mxu0
    %v408 = vadd.f32 %v339, %v407
    %v409 = vpop.f32.mrb[0].mxu0
    %410 = vmatprep.mubr.f32.mxu0 0.0
    %411 = vmatmul.mubr.f32.gmra.mrb[0].mxu0 %v121
    %v412 = vpop.f32.mrb[0].mxu0
    %v413 = vadd.f32 %v339, %v412
    %v414 = vpop.f32.mrb[0].mxu0
    %415 = vdwg.mxu0
    %v416 = vmul.f32 %v212, 0.25
    %v417 = vmul.f32 %v217, 0.25
    %v418 = vld [vmem:[#allocation11] sm:$0xff]
    %v419 = vld [vmem:[#allocation11 + $0x8] sm:$0xff]
    %v420 = vld [vmem:[#allocation11 + $0x10] sm:$0xff]
    %v421 = vld [vmem:[#allocation11 + $0x18] sm:$0xff]
    %v422 = vld [vmem:[#allocation11 + $0x20] sm:$0xff]
    %v423 = vld [vmem:[#allocation11 + $0x28] sm:$0xff]
    %v424 = vld [vmem:[#allocation11 + $0x30] sm:$0xff]
    %v425 = vld [vmem:[#allocation11 + $0x38] sm:$0xff]
    %v426 = vld [vmem:[#allocation11 + $0x40] sm:$0xff]
    %v427 = vld [vmem:[#allocation11 + $0x48] sm:$0xff]
    %v428 = vld [vmem:[#allocation11 + $0x50] sm:$0xff]
    %v429 = vld [vmem:[#allocation11 + $0x58] sm:$0xff]
    %v430 = vld [vmem:[#allocation11 + $0x60] sm:$0xff]
    %v431 = vld [vmem:[#allocation11 + $0x68] sm:$0xff]
    %v432 = vld [vmem:[#allocation11 + $0x70] sm:$0xff]
    %v433 = vld [vmem:[#allocation11 + $0x78] sm:$0xff]
    %v434 = vld [vmem:[%s9] sm:$0x1]
    %v436 = vlaneseq
    %v437 = vshrl.u32 %v436, 7
    %v438 = vsub.s32 0, %v437
    %v439 = vrot.slane %v434, %v438
    %vm441 = vcmask 130048
    %v443 = vsel %vm441, %v416, 0
    %v446 = vsel %vm441, %v310, 0
    %448 = vmatprep.subr.mxu0 0.0
    %449 = vmatpush1.xpose.msra.mxu0 %v446
    %450 = vmatprep.subr.mxu0 0.0
    %451 = vmatpush1.xpose.msra.mxu0 0.0
    %452 = vmatprep.subr.mxu0 0.0
    %453 = vmatpush1.xpose.msra.mxu0 0.0
    %454 = vmatprep.subr.mxu0 0.0
    %455 = vmatpush1.xpose.msra.mxu0 0.0
    %456 = vmatprep.subr.mxu0 0.0
    %457 = vmatpush1.xpose.msra.mxu0 0.0
    %458 = vmatprep.subr.mxu0 0.0
    %459 = vmatpush1.xpose.msra.mxu0 0.0
    %460 = vmatprep.subr.mxu0 0.0
    %461 = vmatpush1.xpose.msra.mxu0 0.0
    %462 = vmatprep.subr.mxu0 0.0
    %463 = vmatpush1.xpose.msra.mxu0 0.0
    %464 = vmatprep.subr.mxu0 0.0
    %465 = vmatpush1.xpose.msra.mxu0 0.0
    %466 = vmatprep.subr.mxu0 0.0
    %467 = vmatpush1.xpose.msra.mxu0 0.0
    %468 = vmatprep.subr.mxu0 0.0
    %469 = vmatpush1.xpose.msra.mxu0 0.0
    %470 = vmatprep.subr.mxu0 0.0
    %471 = vmatpush1.xpose.msra.mxu0 0.0
    %472 = vmatprep.subr.mxu0 0.0
    %473 = vmatpush1.xpose.msra.mxu0 0.0
    %474 = vmatprep.subr.mxu0 0.0
    %475 = vmatpush1.xpose.msra.mxu0 0.0
    %476 = vmatprep.subr.mxu0 0.0
    %477 = vmatpush1.xpose.msra.mxu0 0.0
    %478 = vmatprep.subr.mxu0 0.0
    %479 = vmatpush1.xpose.msra.mxu0 0.0
    %480 = vmatprep.subr.mxu0 0.0
    %481 = vmatpush1.xpose.msra.mxu0 0.0
    %482 = vmatprep.subr.mxu0 0.0
    %483 = vmatpush1.xpose.msra.mxu0 0.0
    %484 = vmatprep.subr.mxu0 0.0
    %485 = vmatpush1.xpose.msra.mxu0 0.0
    %486 = vmatprep.subr.mxu0 0.0
    %487 = vmatpush1.xpose.msra.mxu0 0.0
    %488 = vmatprep.subr.mxu0 0.0
    %489 = vmatpush1.xpose.msra.mxu0 0.0
    %490 = vmatprep.subr.mxu0 0.0
    %491 = vmatpush1.xpose.msra.mxu0 0.0
    %492 = vmatprep.subr.mxu0 0.0
    %493 = vmatpush1.xpose.msra.mxu0 0.0
    %494 = vmatprep.subr.mxu0 0.0
    %495 = vmatpush1.xpose.msra.mxu0 0.0
    %496 = vmatprep.subr.mxu0 0.0
    %497 = vmatpush1.xpose.msra.mxu0 0.0
    %498 = vmatprep.subr.mxu0 0.0
    %499 = vmatpush1.xpose.msra.mxu0 0.0
    %500 = vmatprep.subr.mxu0 0.0
    %501 = vmatpush1.xpose.msra.mxu0 0.0
    %502 = vmatprep.subr.mxu0 0.0
    %503 = vmatpush1.xpose.msra.mxu0 0.0
    %504 = vmatprep.subr.mxu0 0.0
    %505 = vmatpush1.xpose.msra.mxu0 0.0
    %506 = vmatprep.subr.mxu0 0.0
    %507 = vmatpush1.xpose.msra.mxu0 0.0
    %508 = vmatprep.subr.mxu0 0.0
    %509 = vmatpush1.xpose.msra.mxu0 0.0
    %510 = vmatprep.subr.mxu0 0.0
    %511 = vmatpush1.xpose.msra.mxu0 0.0
    %512 = vmatprep.mubr.f32.mxu0 0.0
    %513 = vmatmul.mubr.f32.gmra.mrb[0].mxu0 %v443
    %v514 = vpop.f32.mrb[0].mxu0
    %v515 = vadd.f32 0.0, %v514
    %v516 = vpop.f32.mrb[0].mxu0
    %517 = vdwg.mxu0
    %v519 = vsel %vm441, %v417, 0
    %v522 = vsel %vm441, %v315, 0
    %524 = vmatprep.subr.mxu0 0.0
    %525 = vmatpush1.xpose.msra.mxu0 %v522
    %526 = vmatprep.subr.mxu0 0.0
    %527 = vmatpush1.xpose.msra.mxu0 0.0
    %528 = vmatprep.subr.mxu0 0.0
    %529 = vmatpush1.xpose.msra.mxu0 0.0
    %530 = vmatprep.subr.mxu0 0.0
    %531 = vmatpush1.xpose.msra.mxu0 0.0
    %532 = vmatprep.subr.mxu0 0.0
    %533 = vmatpush1.xpose.msra.mxu0 0.0
    %534 = vmatprep.subr.mxu0 0.0
    %535 = vmatpush1.xpose.msra.mxu0 0.0
    %536 = vmatprep.subr.mxu0 0.0
    %537 = vmatpush1.xpose.msra.mxu0 0.0
    %538 = vmatprep.subr.mxu0 0.0
    %539 = vmatpush1.xpose.msra.mxu0 0.0
    %540 = vmatprep.subr.mxu0 0.0
    %541 = vmatpush1.xpose.msra.mxu0 0.0
    %542 = vmatprep.subr.mxu0 0.0
    %543 = vmatpush1.xpose.msra.mxu0 0.0
    %544 = vmatprep.subr.mxu0 0.0
    %545 = vmatpush1.xpose.msra.mxu0 0.0
    %546 = vmatprep.subr.mxu0 0.0
    %547 = vmatpush1.xpose.msra.mxu0 0.0
    %548 = vmatprep.subr.mxu0 0.0
    %549 = vmatpush1.xpose.msra.mxu0 0.0
    %550 = vmatprep.subr.mxu0 0.0
    %551 = vmatpush1.xpose.msra.mxu0 0.0
    %552 = vmatprep.subr.mxu0 0.0
    %553 = vmatpush1.xpose.msra.mxu0 0.0
    %554 = vmatprep.subr.mxu0 0.0
    %555 = vmatpush1.xpose.msra.mxu0 0.0
    %556 = vmatprep.subr.mxu0 0.0
    %557 = vmatpush1.xpose.msra.mxu0 0.0
    %558 = vmatprep.subr.mxu0 0.0
    %559 = vmatpush1.xpose.msra.mxu0 0.0
    %560 = vmatprep.subr.mxu0 0.0
    %561 = vmatpush1.xpose.msra.mxu0 0.0
    %562 = vmatprep.subr.mxu0 0.0
    %563 = vmatpush1.xpose.msra.mxu0 0.0
    %564 = vmatprep.subr.mxu0 0.0
    %565 = vmatpush1.xpose.msra.mxu0 0.0
    %566 = vmatprep.subr.mxu0 0.0
    %567 = vmatpush1.xpose.msra.mxu0 0.0
    %568 = vmatprep.subr.mxu0 0.0
    %569 = vmatpush1.xpose.msra.mxu0 0.0
    %570 = vmatprep.subr.mxu0 0.0
    %571 = vmatpush1.xpose.msra.mxu0 0.0
    %572 = vmatprep.subr.mxu0 0.0
    %573 = vmatpush1.xpose.msra.mxu0 0.0
    %574 = vmatprep.subr.mxu0 0.0
    %575 = vmatpush1.xpose.msra.mxu0 0.0
    %576 = vmatprep.subr.mxu0 0.0
    %577 = vmatpush1.xpose.msra.mxu0 0.0
    %578 = vmatprep.subr.mxu0 0.0
    %579 = vmatpush1.xpose.msra.mxu0 0.0
    %580 = vmatprep.subr.mxu0 0.0
    %581 = vmatpush1.xpose.msra.mxu0 0.0
    %582 = vmatprep.subr.mxu0 0.0
    %583 = vmatpush1.xpose.msra.mxu0 0.0
    %584 = vmatprep.subr.mxu0 0.0
    %585 = vmatpush1.xpose.msra.mxu0 0.0
    %586 = vmatprep.subr.mxu0 0.0
    %587 = vmatpush1.xpose.msra.mxu0 0.0
    %588 = vmatprep.mubr.f32.mxu0 0.0
    %589 = vmatmul.mubr.f32.gmra.mrb[0].mxu0 %v519
    %v590 = vpop.f32.mrb[0].mxu0
    %v591 = vadd.f32 0.0, %v590
    %v592 = vpop.f32.mrb[0].mxu0
    %593 = vdwg.mxu0
    %vm594 = vcmask 64512
    %v595 = vsel %vm594, %v515, -inf
    %596 = vmax.xlane.f32.xlu0 %v595
    %v597 = vpop.xlane.xlu0 %596
    %v598 = vsel %vm594, %v591, -inf
    %599 = vmax.xlane.f32.xlu0 %v598
    %v600 = vpop.xlane.xlu0 %599
    %v601 = vsub.f32 %v515, %v597
    %v602 = vsub.f32 %v591, %v600
    %v603 = vmul.f32 %v601, 1.442695
    %v604 = vpow.pop %v603
    %v605 = vmul.f32 %v602, 1.442695
    %v606 = vpow.pop %v605
    %v607 = vsel %vm594, %v604, 0.0
    %608 = vadd.xlane.f32.xlu0 %v607
    %v609 = vpop.xlane.xlu0 %608
    %v610 = vsel %vm594, %v606, 0.0
    %611 = vadd.xlane.f32.xlu0 %v610
    %v612 = vpop.xlane.xlu0 %611
    %v613 = vrcp.pop %v609
    %v614 = vrcp.pop %v612
    %v615 = vmul.f32 %v604, %v613
    %v616 = vmul.f32 %v606, %v614
    %v618 = vsel %vm594, %v615, 0
    %620 = vmatprep.subr.mxu0 0.0
    %621 = vmatpush1.msra.mxu0 %v408
    %622 = vmatprep.subr.mxu0 0.0
    %623 = vmatpush1.msra.mxu0 0.0
    %624 = vmatprep.subr.mxu0 0.0
    %625 = vmatpush1.msra.mxu0 0.0
    %626 = vmatprep.subr.mxu0 0.0
    %627 = vmatpush1.msra.mxu0 0.0
    %628 = vmatprep.subr.mxu0 0.0
    %629 = vmatpush1.msra.mxu0 0.0
    %630 = vmatprep.subr.mxu0 0.0
    %631 = vmatpush1.msra.mxu0 0.0
    %632 = vmatprep.subr.mxu0 0.0
    %633 = vmatpush1.msra.mxu0 0.0
    %634 = vmatprep.subr.mxu0 0.0
    %635 = vmatpush1.msra.mxu0 0.0
    %636 = vmatprep.subr.mxu0 0.0
    %637 = vmatpush1.msra.mxu0 0.0
    %638 = vmatprep.subr.mxu0 0.0
    %639 = vmatpush1.msra.mxu0 0.0
    %640 = vmatprep.subr.mxu0 0.0
    %641 = vmatpush1.msra.mxu0 0.0
    %642 = vmatprep.subr.mxu0 0.0
    %643 = vmatpush1.msra.mxu0 0.0
    %644 = vmatprep.subr.mxu0 0.0
    %645 = vmatpush1.msra.mxu0 0.0
    %646 = vmatprep.subr.mxu0 0.0
    %647 = vmatpush1.msra.mxu0 0.0
    %648 = vmatprep.subr.mxu0 0.0
    %649 = vmatpush1.msra.mxu0 0.0
    %650 = vmatprep.subr.mxu0 0.0
    %651 = vmatpush1.msra.mxu0 0.0
    %652 = vmatprep.subr.mxu0 0.0
    %653 = vmatpush1.msra.mxu0 0.0
    %654 = vmatprep.subr.mxu0 0.0
    %655 = vmatpush1.msra.mxu0 0.0
    %656 = vmatprep.subr.mxu0 0.0
    %657 = vmatpush1.msra.mxu0 0.0
    %658 = vmatprep.subr.mxu0 0.0
    %659 = vmatpush1.msra.mxu0 0.0
    %660 = vmatprep.subr.mxu0 0.0
    %661 = vmatpush1.msra.mxu0 0.0
    %662 = vmatprep.subr.mxu0 0.0
    %663 = vmatpush1.msra.mxu0 0.0
    %664 = vmatprep.subr.mxu0 0.0
    %665 = vmatpush1.msra.mxu0 0.0
    %666 = vmatprep.subr.mxu0 0.0
    %667 = vmatpush1.msra.mxu0 0.0
    %668 = vmatprep.subr.mxu0 0.0
    %669 = vmatpush1.msra.mxu0 0.0
    %670 = vmatprep.subr.mxu0 0.0
    %671 = vmatpush1.msra.mxu0 0.0
    %672 = vmatprep.subr.mxu0 0.0
    %673 = vmatpush1.msra.mxu0 0.0
    %674 = vmatprep.subr.mxu0 0.0
    %675 = vmatpush1.msra.mxu0 0.0
    %676 = vmatprep.subr.mxu0 0.0
    %677 = vmatpush1.msra.mxu0 0.0
    %678 = vmatprep.subr.mxu0 0.0
    %679 = vmatpush1.msra.mxu0 0.0
    %680 = vmatprep.subr.mxu0 0.0
    %681 = vmatpush1.msra.mxu0 0.0
    %682 = vmatprep.subr.mxu0 0.0
    %683 = vmatpush1.msra.mxu0 0.0
    %684 = vmatprep.mubr.f32.mxu0 0.0
    %685 = vmatmul.mubr.f32.gmra.mrb[0].mxu0 %v618
    %v686 = vpop.f32.mrb[0].mxu0
    %v687 = vadd.f32 0.0, %v686
    %v688 = vpop.f32.mrb[0].mxu0
    %689 = vdwg.mxu0
    %v691 = vsel %vm594, %v616, 0
    %693 = vmatprep.subr.mxu0 0.0
    %694 = vmatpush1.msra.mxu0 %v413
    %695 = vmatprep.subr.mxu0 0.0
    %696 = vmatpush1.msra.mxu0 0.0
    %697 = vmatprep.subr.mxu0 0.0
    %698 = vmatpush1.msra.mxu0 0.0
    %699 = vmatprep.subr.mxu0 0.0
    %700 = vmatpush1.msra.mxu0 0.0
    %701 = vmatprep.subr.mxu0 0.0
    %702 = vmatpush1.msra.mxu0 0.0
    %703 = vmatprep.subr.mxu0 0.0
    %704 = vmatpush1.msra.mxu0 0.0
    %705 = vmatprep.subr.mxu0 0.0
    %706 = vmatpush1.msra.mxu0 0.0
    %707 = vmatprep.subr.mxu0 0.0
    %708 = vmatpush1.msra.mxu0 0.0
    %709 = vmatprep.subr.mxu0 0.0
    %710 = vmatpush1.msra.mxu0 0.0
    %711 = vmatprep.subr.mxu0 0.0
    %712 = vmatpush1.msra.mxu0 0.0
    %713 = vmatprep.subr.mxu0 0.0
    %714 = vmatpush1.msra.mxu0 0.0
    %715 = vmatprep.subr.mxu0 0.0
    %716 = vmatpush1.msra.mxu0 0.0
    %717 = vmatprep.subr.mxu0 0.0
    %718 = vmatpush1.msra.mxu0 0.0
    %719 = vmatprep.subr.mxu0 0.0
    %720 = vmatpush1.msra.mxu0 0.0
    %721 = vmatprep.subr.mxu0 0.0
    %722 = vmatpush1.msra.mxu0 0.0
    %723 = vmatprep.subr.mxu0 0.0
    %724 = vmatpush1.msra.mxu0 0.0
    %725 = vmatprep.subr.mxu0 0.0
    %726 = vmatpush1.msra.mxu0 0.0
    %727 = vmatprep.subr.mxu0 0.0
    %728 = vmatpush1.msra.mxu0 0.0
    %729 = vmatprep.subr.mxu0 0.0
    %730 = vmatpush1.msra.mxu0 0.0
    %731 = vmatprep.subr.mxu0 0.0
    %732 = vmatpush1.msra.mxu0 0.0
    %733 = vmatprep.subr.mxu0 0.0
    %734 = vmatpush1.msra.mxu0 0.0
    %735 = vmatprep.subr.mxu0 0.0
    %736 = vmatpush1.msra.mxu0 0.0
    %737 = vmatprep.subr.mxu0 0.0
    %738 = vmatpush1.msra.mxu0 0.0
    %739 = vmatprep.subr.mxu0 0.0
    %740 = vmatpush1.msra.mxu0 0.0
    %741 = vmatprep.subr.mxu0 0.0
    %742 = vmatpush1.msra.mxu0 0.0
    %743 = vmatprep.subr.mxu0 0.0
    %744 = vmatpush1.msra.mxu0 0.0
    %745 = vmatprep.subr.mxu0 0.0
    %746 = vmatpush1.msra.mxu0 0.0
    %747 = vmatprep.subr.mxu0 0.0
    %748 = vmatpush1.msra.mxu0 0.0
    %749 = vmatprep.subr.mxu0 0.0
    %750 = vmatpush1.msra.mxu0 0.0
    %751 = vmatprep.subr.mxu0 0.0
    %752 = vmatpush1.msra.mxu0 0.0
    %753 = vmatprep.subr.mxu0 0.0
    %754 = vmatpush1.msra.mxu0 0.0
    %755 = vmatprep.subr.mxu0 0.0
    %756 = vmatpush1.msra.mxu0 0.0
    %757 = vmatprep.mubr.f32.mxu0 0.0
    %758 = vmatmul.mubr.f32.gmra.mrb[0].mxu0 %v691
    %v759 = vpop.f32.mrb[0].mxu0
    %v760 = vadd.f32 0.0, %v759
    %v761 = vpop.f32.mrb[0].mxu0
    %762 = vdwg.mxu0
    %v764 = vsel %vm441, %v687, 0
    %v767 = vsel %vm441, %v760, 0
    %769 = vmatprep.subr.mxu0 0.0
    %770 = vmatpush1.msra.mxu0 %v418
    %771 = vmatprep.subr.mxu0 0.0
    %772 = vmatpush1.msra.mxu0 %v419
    %773 = vmatprep.subr.mxu0 0.0
    %774 = vmatpush1.msra.mxu0 0.0
    %775 = vmatprep.subr.mxu0 0.0
    %776 = vmatpush1.msra.mxu0 0.0
    %777 = vmatprep.subr.mxu0 0.0
    %778 = vmatpush1.msra.mxu0 0.0
    %779 = vmatprep.subr.mxu0 0.0
    %780 = vmatpush1.msra.mxu0 0.0
    %781 = vmatprep.subr.mxu0 0.0
    %782 = vmatpush1.msra.mxu0 0.0
    %783 = vmatprep.subr.mxu0 0.0
    %784 = vmatpush1.msra.mxu0 0.0
    %785 = vmatprep.subr.mxu0 0.0
    %786 = vmatpush1.msra.mxu0 0.0
    %787 = vmatprep.subr.mxu0 0.0
    %788 = vmatpush1.msra.mxu0 0.0
    %789 = vmatprep.subr.mxu0 0.0
    %790 = vmatpush1.msra.mxu0 0.0
    %791 = vmatprep.subr.mxu0 0.0
    %792 = vmatpush1.msra.mxu0 0.0
    %793 = vmatprep.subr.mxu0 0.0
    %794 = vmatpush1.msra.mxu0 0.0
    %795 = vmatprep.subr.mxu0 0.0
    %796 = vmatpush1.msra.mxu0 0.0
    %797 = vmatprep.subr.mxu0 0.0
    %798 = vmatpush1.msra.mxu0 0.0
    %799 = vmatprep.subr.mxu0 0.0
    %800 = vmatpush1.msra.mxu0 0.0
    %801 = vmatprep.subr.mxu0 0.0
    %802 = vmatpush1.msra.mxu0 0.0
    %803 = vmatprep.subr.mxu0 0.0
    %804 = vmatpush1.msra.mxu0 0.0
    %805 = vmatprep.subr.mxu0 0.0
    %806 = vmatpush1.msra.mxu0 0.0
    %807 = vmatprep.subr.mxu0 0.0
    %808 = vmatpush1.msra.mxu0 0.0
    %809 = vmatprep.subr.mxu0 0.0
    %810 = vmatpush1.msra.mxu0 0.0
    %811 = vmatprep.subr.mxu0 0.0
    %812 = vmatpush1.msra.mxu0 0.0
    %813 = vmatprep.subr.mxu0 0.0
    %814 = vmatpush1.msra.mxu0 0.0
    %815 = vmatprep.subr.mxu0 0.0
    %816 = vmatpush1.msra.mxu0 0.0
    %817 = vmatprep.subr.mxu0 0.0
    %818 = vmatpush1.msra.mxu0 0.0
    %819 = vmatprep.subr.mxu0 0.0
    %820 = vmatpush1.msra.mxu0 0.0
    %821 = vmatprep.subr.mxu0 0.0
    %822 = vmatpush1.msra.mxu0 0.0
    %823 = vmatprep.subr.mxu0 0.0
    %824 = vmatpush1.msra.mxu0 0.0
    %825 = vmatprep.subr.mxu0 0.0
    %826 = vmatpush1.msra.mxu0 0.0
    %827 = vmatprep.subr.mxu0 0.0
    %828 = vmatpush1.msra.mxu0 0.0
    %829 = vmatprep.subr.mxu0 0.0
    %830 = vmatpush1.msra.mxu0 0.0
    %831 = vmatprep.subr.mxu0 0.0
    %832 = vmatpush1.msra.mxu0 0.0
    %833 = vmatprep.mubr.f32.mxu0 0.0
    %834 = vmatmul.mubr.f32.gmra.mrb[0].mxu0 %v764
    %v835 = vpop.f32.mrb[0].mxu0
    %v836 = vadd.f32 0.0, %v835
    %v837 = vpop.f32.mrb[0].mxu0
    %838 = vmatprep.mubr.f32.mxu0 0.0
    %839 = vmatmul.mubr.f32.gmra.mrb[0].mxu0 %v767
    %v840 = vpop.f32.mrb[0].mxu0
    %v841 = vadd.f32 0.0, %v840
    %v842 = vpop.f32.mrb[0].mxu0
    %843 = vdwg.mxu0
    %v844 = vadd.f32 %v439, %v836
    %v845 = vadd.f32 %v439, %v841
    %846 = vrot.lane.b32.xlu0 %v416, 112
    %v847 = vpop.permute.xlu0 %846
    %848 = vrot.lane.b32.xlu0 %v310, 112
    %v849 = vpop.permute.xlu0 %848
    %v850 = vsel %vm441, %v847, 0
    %v852 = vsel %vm441, %v849, 0
    %854 = vmatprep.subr.mxu0 0.0
    %855 = vmatpush1.xpose.msra.mxu0 %v852
    %856 = vmatprep.subr.mxu0 0.0
    %857 = vmatpush1.xpose.msra.mxu0 0.0
    %858 = vmatprep.subr.mxu0 0.0
    %859 = vmatpush1.xpose.msra.mxu0 0.0
    %860 = vmatprep.subr.mxu0 0.0
    %861 = vmatpush1.xpose.msra.mxu0 0.0
    %862 = vmatprep.subr.mxu0 0.0
    %863 = vmatpush1.xpose.msra.mxu0 0.0
    %864 = vmatprep.subr.mxu0 0.0
    %865 = vmatpush1.xpose.msra.mxu0 0.0
    %866 = vmatprep.subr.mxu0 0.0
    %867 = vmatpush1.xpose.msra.mxu0 0.0
    %868 = vmatprep.subr.mxu0 0.0
    %869 = vmatpush1.xpose.msra.mxu0 0.0
    %870 = vmatprep.subr.mxu0 0.0
    %871 = vmatpush1.xpose.msra.mxu0 0.0
    %872 = vmatprep.subr.mxu0 0.0
    %873 = vmatpush1.xpose.msra.mxu0 0.0
    %874 = vmatprep.subr.mxu0 0.0
    %875 = vmatpush1.xpose.msra.mxu0 0.0
    %876 = vmatprep.subr.mxu0 0.0
    %877 = vmatpush1.xpose.msra.mxu0 0.0
    %878 = vmatprep.subr.mxu0 0.0
    %879 = vmatpush1.xpose.msra.mxu0 0.0
    %880 = vmatprep.subr.mxu0 0.0
    %881 = vmatpush1.xpose.msra.mxu0 0.0
    %882 = vmatprep.subr.mxu0 0.0
    %883 = vmatpush1.xpose.msra.mxu0 0.0
    %884 = vmatprep.subr.mxu0 0.0
    %885 = vmatpush1.xpose.msra.mxu0 0.0
    %886 = vmatprep.subr.mxu0 0.0
    %887 = vmatpush1.xpose.msra.mxu0 0.0
    %888 = vmatprep.subr.mxu0 0.0
    %889 = vmatpush1.xpose.msra.mxu0 0.0
    %890 = vmatprep.subr.mxu0 0.0
    %891 = vmatpush1.xpose.msra.mxu0 0.0
    %892 = vmatprep.subr.mxu0 0.0
    %893 = vmatpush1.xpose.msra.mxu0 0.0
    %894 = vmatprep.subr.mxu0 0.0
    %895 = vmatpush1.xpose.msra.mxu0 0.0
    %896 = vmatprep.subr.mxu0 0.0
    %897 = vmatpush1.xpose.msra.mxu0 0.0
    %898 = vmatprep.subr.mxu0 0.0
    %899 = vmatpush1.xpose.msra.mxu0 0.0
    %900 = vmatprep.subr.mxu0 0.0
    %901 = vmatpush1.xpose.msra.mxu0 0.0
    %902 = vmatprep.subr.mxu0 0.0
    %903 = vmatpush1.xpose.msra.mxu0 0.0
    %904 = vmatprep.subr.mxu0 0.0
    %905 = vmatpush1.xpose.msra.mxu0 0.0
    %906 = vmatprep.subr.mxu0 0.0
    %907 = vmatpush1.xpose.msra.mxu0 0.0
    %908 = vmatprep.subr.mxu0 0.0
    %909 = vmatpush1.xpose.msra.mxu0 0.0
    %910 = vmatprep.subr.mxu0 0.0
    %911 = vmatpush1.xpose.msra.mxu0 0.0
    %912 = vmatprep.subr.mxu0 0.0
    %913 = vmatpush1.xpose.msra.mxu0 0.0
    %914 = vmatprep.subr.mxu0 0.0
    %915 = vmatpush1.xpose.msra.mxu0 0.0
    %916 = vmatprep.subr.mxu0 0.0
    %917 = vmatpush1.xpose.msra.mxu0 0.0
    %918 = vmatprep.mubr.f32.mxu0 0.0
    %919 = vmatmul.mubr.f32.gmra.mrb[0].mxu0 %v850
    %v920 = vpop.f32.mrb[0].mxu0
    %v921 = vadd.f32 0.0, %v920
    %v922 = vpop.f32.mrb[0].mxu0
    %923 = vdwg.mxu0
    %924 = vrot.lane.b32.xlu0 %v417, 112
    %v925 = vpop.permute.xlu0 %924
    %926 = vrot.lane.b32.xlu0 %v315, 112
    %v927 = vpop.permute.xlu0 %926
    %v928 = vsel %vm441, %v925, 0
    %v930 = vsel %vm441, %v927, 0
    %932 = vmatprep.subr.mxu0 0.0
    %933 = vmatpush1.xpose.msra.mxu0 %v930
    %934 = vmatprep.subr.mxu0 0.0
    %935 = vmatpush1.xpose.msra.mxu0 0.0
    %936 = vmatprep.subr.mxu0 0.0
    %937 = vmatpush1.xpose.msra.mxu0 0.0
    %938 = vmatprep.subr.mxu0 0.0
    %939 = vmatpush1.xpose.msra.mxu0 0.0
    %940 = vmatprep.subr.mxu0 0.0
    %941 = vmatpush1.xpose.msra.mxu0 0.0
    %942 = vmatprep.subr.mxu0 0.0
    %943 = vmatpush1.xpose.msra.mxu0 0.0
    %944 = vmatprep.subr.mxu0 0.0
    %945 = vmatpush1.xpose.msra.mxu0 0.0
    %946 = vmatprep.subr.mxu0 0.0
    %947 = vmatpush1.xpose.msra.mxu0 0.0
    %948 = vmatprep.subr.mxu0 0.0
    %949 = vmatpush1.xpose.msra.mxu0 0.0
    %950 = vmatprep.subr.mxu0 0.0
    %951 = vmatpush1.xpose.msra.mxu0 0.0
    %952 = vmatprep.subr.mxu0 0.0
    %953 = vmatpush1.xpose.msra.mxu0 0.0
    %954 = vmatprep.subr.mxu0 0.0
    %955 = vmatpush1.xpose.msra.mxu0 0.0
    %956 = vmatprep.subr.mxu0 0.0
    %957 = vmatpush1.xpose.msra.mxu0 0.0
    %958 = vmatprep.subr.mxu0 0.0
    %959 = vmatpush1.xpose.msra.mxu0 0.0
    %960 = vmatprep.subr.mxu0 0.0
    %961 = vmatpush1.xpose.msra.mxu0 0.0
    %962 = vmatprep.subr.mxu0 0.0
    %963 = vmatpush1.xpose.msra.mxu0 0.0
    %964 = vmatprep.subr.mxu0 0.0
    %965 = vmatpush1.xpose.msra.mxu0 0.0
    %966 = vmatprep.subr.mxu0 0.0
    %967 = vmatpush1.xpose.msra.mxu0 0.0
    %968 = vmatprep.subr.mxu0 0.0
    %969 = vmatpush1.xpose.msra.mxu0 0.0
    %970 = vmatprep.subr.mxu0 0.0
    %971 = vmatpush1.xpose.msra.mxu0 0.0
    %972 = vmatprep.subr.mxu0 0.0
    %973 = vmatpush1.xpose.msra.mxu0 0.0
    %974 = vmatprep.subr.mxu0 0.0
    %975 = vmatpush1.xpose.msra.mxu0 0.0
    %976 = vmatprep.subr.mxu0 0.0
    %977 = vmatpush1.xpose.msra.mxu0 0.0
    %978 = vmatprep.subr.mxu0 0.0
    %979 = vmatpush1.xpose.msra.mxu0 0.0
    %980 = vmatprep.subr.mxu0 0.0
    %981 = vmatpush1.xpose.msra.mxu0 0.0
    %982 = vmatprep.subr.mxu0 0.0
    %983 = vmatpush1.xpose.msra.mxu0 0.0
    %984 = vmatprep.subr.mxu0 0.0
    %985 = vmatpush1.xpose.msra.mxu0 0.0
    %986 = vmatprep.subr.mxu0 0.0
    %987 = vmatpush1.xpose.msra.mxu0 0.0
    %988 = vmatprep.subr.mxu0 0.0
    %989 = vmatpush1.xpose.msra.mxu0 0.0
    %990 = vmatprep.subr.mxu0 0.0
    %991 = vmatpush1.xpose.msra.mxu0 0.0
    %992 = vmatprep.subr.mxu0 0.0
    %993 = vmatpush1.xpose.msra.mxu0 0.0
    %994 = vmatprep.subr.mxu0 0.0
    %995 = vmatpush1.xpose.msra.mxu0 0.0
    %996 = vmatprep.mubr.f32.mxu0 0.0
    %997 = vmatmul.mubr.f32.gmra.mrb[0].mxu0 %v928
    %v998 = vpop.f32.mrb[0].mxu0
    %v999 = vadd.f32 0.0, %v998
    %v1000 = vpop.f32.mrb[0].mxu0
    %1001 = vdwg.mxu0
    %v1002 = vsel %vm594, %v921, -inf
    %1003 = vmax.xlane.f32.xlu0 %v1002
    %v1004 = vpop.xlane.xlu0 %1003
    %v1005 = vsel %vm594, %v999, -inf
    %1006 = vmax.xlane.f32.xlu0 %v1005
    %v1007 = vpop.xlane.xlu0 %1006
    %v1008 = vsub.f32 %v921, %v1004
    %v1009 = vsub.f32 %v999, %v1007
    %v1010 = vmul.f32 %v1008, 1.442695
    %v1011 = vpow.pop %v1010
    %v1012 = vmul.f32 %v1009, 1.442695
    %v1013 = vpow.pop %v1012
    %v1014 = vsel %vm594, %v1011, 0.0
    %1015 = vadd.xlane.f32.xlu0 %v1014
    %v1016 = vpop.xlane.xlu0 %1015
    %v1017 = vsel %vm594, %v1013, 0.0
    %1018 = vadd.xlane.f32.xlu0 %v1017
    %v1019 = vpop.xlane.xlu0 %1018
    %v1020 = vrcp.pop %v1016
    %v1021 = vrcp.pop %v1019
    %v1022 = vmul.f32 %v1011, %v1020
    %v1023 = vmul.f32 %v1013, %v1021
    %1025 = vrot.lane.b32.xlu0 %v408, 112
    %v1026 = vpop.permute.xlu0 %1025
    %v1029 = vsel %vm594, %v1022, 0
    %1031 = vmatprep.subr.mxu0 0.0
    %1032 = vmatpush1.msra.mxu0 %v1026
    %1033 = vmatprep.subr.mxu0 0.0
    %1034 = vmatpush1.msra.mxu0 0.0
    %1035 = vmatprep.subr.mxu0 0.0
    %1036 = vmatpush1.msra.mxu0 0.0
    %1037 = vmatprep.subr.mxu0 0.0
    %1038 = vmatpush1.msra.mxu0 0.0
    %1039 = vmatprep.subr.mxu0 0.0
    %1040 = vmatpush1.msra.mxu0 0.0
    %1041 = vmatprep.subr.mxu0 0.0
    %1042 = vmatpush1.msra.mxu0 0.0
    %1043 = vmatprep.subr.mxu0 0.0
    %1044 = vmatpush1.msra.mxu0 0.0
    %1045 = vmatprep.subr.mxu0 0.0
    %1046 = vmatpush1.msra.mxu0 0.0
    %1047 = vmatprep.subr.mxu0 0.0
    %1048 = vmatpush1.msra.mxu0 0.0
    %1049 = vmatprep.subr.mxu0 0.0
    %1050 = vmatpush1.msra.mxu0 0.0
    %1051 = vmatprep.subr.mxu0 0.0
    %1052 = vmatpush1.msra.mxu0 0.0
    %1053 = vmatprep.subr.mxu0 0.0
    %1054 = vmatpush1.msra.mxu0 0.0
    %1055 = vmatprep.subr.mxu0 0.0
    %1056 = vmatpush1.msra.mxu0 0.0
    %1057 = vmatprep.subr.mxu0 0.0
    %1058 = vmatpush1.msra.mxu0 0.0
    %1059 = vmatprep.subr.mxu0 0.0
    %1060 = vmatpush1.msra.mxu0 0.0
    %1061 = vmatprep.subr.mxu0 0.0
    %1062 = vmatpush1.msra.mxu0 0.0
    %1063 = vmatprep.subr.mxu0 0.0
    %1064 = vmatpush1.msra.mxu0 0.0
    %1065 = vmatprep.subr.mxu0 0.0
    %1066 = vmatpush1.msra.mxu0 0.0
    %1067 = vmatprep.subr.mxu0 0.0
    %1068 = vmatpush1.msra.mxu0 0.0
    %1069 = vmatprep.subr.mxu0 0.0
    %1070 = vmatpush1.msra.mxu0 0.0
    %1071 = vmatprep.subr.mxu0 0.0
    %1072 = vmatpush1.msra.mxu0 0.0
    %1073 = vmatprep.subr.mxu0 0.0
    %1074 = vmatpush1.msra.mxu0 0.0
    %1075 = vmatprep.subr.mxu0 0.0
    %1076 = vmatpush1.msra.mxu0 0.0
    %1077 = vmatprep.subr.mxu0 0.0
    %1078 = vmatpush1.msra.mxu0 0.0
    %1079 = vmatprep.subr.mxu0 0.0
    %1080 = vmatpush1.msra.mxu0 0.0
    %1081 = vmatprep.subr.mxu0 0.0
    %1082 = vmatpush1.msra.mxu0 0.0
    %1083 = vmatprep.subr.mxu0 0.0
    %1084 = vmatpush1.msra.mxu0 0.0
    %1085 = vmatprep.subr.mxu0 0.0
    %1086 = vmatpush1.msra.mxu0 0.0
    %1087 = vmatprep.subr.mxu0 0.0
    %1088 = vmatpush1.msra.mxu0 0.0
    %1089 = vmatprep.subr.mxu0 0.0
    %1090 = vmatpush1.msra.mxu0 0.0
    %1091 = vmatprep.subr.mxu0 0.0
    %1092 = vmatpush1.msra.mxu0 0.0
    %1093 = vmatprep.subr.mxu0 0.0
    %1094 = vmatpush1.msra.mxu0 0.0
    %1095 = vmatprep.mubr.f32.mxu0 0.0
    %1096 = vmatmul.mubr.f32.gmra.mrb[0].mxu0 %v1029
    %v1097 = vpop.f32.mrb[0].mxu0
    %v1098 = vadd.f32 0.0, %v1097
    %v1099 = vpop.f32.mrb[0].mxu0
    %1100 = vdwg.mxu0
    %1102 = vrot.lane.b32.xlu0 %v413, 112
    %v1103 = vpop.permute.xlu0 %1102
    %v1106 = vsel %vm594, %v1023, 0
    %1108 = vmatprep.subr.mxu0 0.0
    %1109 = vmatpush1.msra.mxu0 %v1103
    %1110 = vmatprep.subr.mxu0 0.0
    %1111 = vmatpush1.msra.mxu0 0.0
    %1112 = vmatprep.subr.mxu0 0.0
    %1113 = vmatpush1.msra.mxu0 0.0
    %1114 = vmatprep.subr.mxu0 0.0
    %1115 = vmatpush1.msra.mxu0 0.0
    %1116 = vmatprep.subr.mxu0 0.0
    %1117 = vmatpush1.msra.mxu0 0.0
    %1118 = vmatprep.subr.mxu0 0.0
    %1119 = vmatpush1.msra.mxu0 0.0
    %1120 = vmatprep.subr.mxu0 0.0
    %1121 = vmatpush1.msra.mxu0 0.0
    %1122 = vmatprep.subr.mxu0 0.0
    %1123 = vmatpush1.msra.mxu0 0.0
    %1124 = vmatprep.subr.mxu0 0.0
    %1125 = vmatpush1.msra.mxu0 0.0
    %1126 = vmatprep.subr.mxu0 0.0
    %1127 = vmatpush1.msra.mxu0 0.0
    %1128 = vmatprep.subr.mxu0 0.0
    %1129 = vmatpush1.msra.mxu0 0.0
    %1130 = vmatprep.subr.mxu0 0.0
    %1131 = vmatpush1.msra.mxu0 0.0
    %1132 = vmatprep.subr.mxu0 0.0
    %1133 = vmatpush1.msra.mxu0 0.0
    %1134 = vmatprep.subr.mxu0 0.0
    %1135 = vmatpush1.msra.mxu0 0.0
    %1136 = vmatprep.subr.mxu0 0.0
    %1137 = vmatpush1.msra.mxu0 0.0
    %1138 = vmatprep.subr.mxu0 0.0
    %1139 = vmatpush1.msra.mxu0 0.0
    %1140 = vmatprep.subr.mxu0 0.0
    %1141 = vmatpush1.msra.mxu0 0.0
    %1142 = vmatprep.subr.mxu0 0.0
    %1143 = vmatpush1.msra.mxu0 0.0
    %1144 = vmatprep.subr.mxu0 0.0
    %1145 = vmatpush1.msra.mxu0 0.0
    %1146 = vmatprep.subr.mxu0 0.0
    %1147 = vmatpush1.msra.mxu0 0.0
    %1148 = vmatprep.subr.mxu0 0.0
    %1149 = vmatpush1.msra.mxu0 0.0
    %1150 = vmatprep.subr.mxu0 0.0
    %1151 = vmatpush1.msra.mxu0 0.0
    %1152 = vmatprep.subr.mxu0 0.0
    %1153 = vmatpush1.msra.mxu0 0.0
    %1154 = vmatprep.subr.mxu0 0.0
    %1155 = vmatpush1.msra.mxu0 0.0
    %1156 = vmatprep.subr.mxu0 0.0
    %1157 = vmatpush1.msra.mxu0 0.0
    %1158 = vmatprep.subr.mxu0 0.0
    %1159 = vmatpush1.msra.mxu0 0.0
    %1160 = vmatprep.subr.mxu0 0.0
    %1161 = vmatpush1.msra.mxu0 0.0
    %1162 = vmatprep.subr.mxu0 0.0
    %1163 = vmatpush1.msra.mxu0 0.0
    %1164 = vmatprep.subr.mxu0 0.0
    %1165 = vmatpush1.msra.mxu0 0.0
    %1166 = vmatprep.subr.mxu0 0.0
    %1167 = vmatpush1.msra.mxu0 0.0
    %1168 = vmatprep.subr.mxu0 0.0
    %1169 = vmatpush1.msra.mxu0 0.0
    %1170 = vmatprep.subr.mxu0 0.0
    %1171 = vmatpush1.msra.mxu0 0.0
    %1172 = vmatprep.mubr.f32.mxu0 0.0
    %1173 = vmatmul.mubr.f32.gmra.mrb[0].mxu0 %v1106
    %v1174 = vpop.f32.mrb[0].mxu0
    %v1175 = vadd.f32 0.0, %v1174
    %v1176 = vpop.f32.mrb[0].mxu0
    %1177 = vdwg.mxu0
    %v1179 = vsel %vm441, %v1098, 0
    %v1182 = vsel %vm441, %v1175, 0
    %1184 = vmatprep.subr.mxu0 0.0
    %1185 = vmatpush1.msra.mxu0 %v420
    %1186 = vmatprep.subr.mxu0 0.0
    %1187 = vmatpush1.msra.mxu0 %v421
    %1188 = vmatprep.subr.mxu0 0.0
    %1189 = vmatpush1.msra.mxu0 0.0
    %1190 = vmatprep.subr.mxu0 0.0
    %1191 = vmatpush1.msra.mxu0 0.0
    %1192 = vmatprep.subr.mxu0 0.0
    %1193 = vmatpush1.msra.mxu0 0.0
    %1194 = vmatprep.subr.mxu0 0.0
    %1195 = vmatpush1.msra.mxu0 0.0
    %1196 = vmatprep.subr.mxu0 0.0
    %1197 = vmatpush1.msra.mxu0 0.0
    %1198 = vmatprep.subr.mxu0 0.0
    %1199 = vmatpush1.msra.mxu0 0.0
    %1200 = vmatprep.subr.mxu0 0.0
    %1201 = vmatpush1.msra.mxu0 0.0
    %1202 = vmatprep.subr.mxu0 0.0
    %1203 = vmatpush1.msra.mxu0 0.0
    %1204 = vmatprep.subr.mxu0 0.0
    %1205 = vmatpush1.msra.mxu0 0.0
    %1206 = vmatprep.subr.mxu0 0.0
    %1207 = vmatpush1.msra.mxu0 0.0
    %1208 = vmatprep.subr.mxu0 0.0
    %1209 = vmatpush1.msra.mxu0 0.0
    %1210 = vmatprep.subr.mxu0 0.0
    %1211 = vmatpush1.msra.mxu0 0.0
    %1212 = vmatprep.subr.mxu0 0.0
    %1213 = vmatpush1.msra.mxu0 0.0
    %1214 = vmatprep.subr.mxu0 0.0
    %1215 = vmatpush1.msra.mxu0 0.0
    %1216 = vmatprep.subr.mxu0 0.0
    %1217 = vmatpush1.msra.mxu0 0.0
    %1218 = vmatprep.subr.mxu0 0.0
    %1219 = vmatpush1.msra.mxu0 0.0
    %1220 = vmatprep.subr.mxu0 0.0
    %1221 = vmatpush1.msra.mxu0 0.0
    %1222 = vmatprep.subr.mxu0 0.0
    %1223 = vmatpush1.msra.mxu0 0.0
    %1224 = vmatprep.subr.mxu0 0.0
    %1225 = vmatpush1.msra.mxu0 0.0
    %1226 = vmatprep.subr.mxu0 0.0
    %1227 = vmatpush1.msra.mxu0 0.0
    %1228 = vmatprep.subr.mxu0 0.0
    %1229 = vmatpush1.msra.mxu0 0.0
    %1230 = vmatprep.subr.mxu0 0.0
    %1231 = vmatpush1.msra.mxu0 0.0
    %1232 = vmatprep.subr.mxu0 0.0
    %1233 = vmatpush1.msra.mxu0 0.0
    %1234 = vmatprep.subr.mxu0 0.0
    %1235 = vmatpush1.msra.mxu0 0.0
    %1236 = vmatprep.subr.mxu0 0.0
    %1237 = vmatpush1.msra.mxu0 0.0
    %1238 = vmatprep.subr.mxu0 0.0
    %1239 = vmatpush1.msra.mxu0 0.0
    %1240 = vmatprep.subr.mxu0 0.0
    %1241 = vmatpush1.msra.mxu0 0.0
    %1242 = vmatprep.subr.mxu0 0.0
    %1243 = vmatpush1.msra.mxu0 0.0
    %1244 = vmatprep.subr.mxu0 0.0
    %1245 = vmatpush1.msra.mxu0 0.0
    %1246 = vmatprep.subr.mxu0 0.0
    %1247 = vmatpush1.msra.mxu0 0.0
    %1248 = vmatprep.mubr.f32.mxu0 0.0
    %1249 = vmatmul.mubr.f32.gmra.mrb[0].mxu0 %v1179
    %v1250 = vpop.f32.mrb[0].mxu0
    %v1251 = vadd.f32 0.0, %v1250
    %v1252 = vpop.f32.mrb[0].mxu0
    %1253 = vmatprep.mubr.f32.mxu0 0.0
    %1254 = vmatmul.mubr.f32.gmra.mrb[0].mxu0 %v1182
    %v1255 = vpop.f32.mrb[0].mxu0
    %v1256 = vadd.f32 0.0, %v1255
    %v1257 = vpop.f32.mrb[0].mxu0
    %1258 = vdwg.mxu0
    %v1259 = vadd.f32 %v844, %v1251
    %v1260 = vadd.f32 %v845, %v1256
    %1261 = vrot.lane.b32.xlu0 %v416, 96
    %v1262 = vpop.permute.xlu0 %1261
    %1263 = vrot.lane.b32.xlu0 %v310, 96
    %v1264 = vpop.permute.xlu0 %1263
    %v1265 = vsel %vm441, %v1262, 0
    %v1267 = vsel %vm441, %v1264, 0
    %1269 = vmatprep.subr.mxu0 0.0
    %1270 = vmatpush1.xpose.msra.mxu0 %v1267
    %1271 = vmatprep.subr.mxu0 0.0
    %1272 = vmatpush1.xpose.msra.mxu0 0.0
    %1273 = vmatprep.subr.mxu0 0.0
    %1274 = vmatpush1.xpose.msra.mxu0 0.0
    %1275 = vmatprep.subr.mxu0 0.0
    %1276 = vmatpush1.xpose.msra.mxu0 0.0
    %1277 = vmatprep.subr.mxu0 0.0
    %1278 = vmatpush1.xpose.msra.mxu0 0.0
    %1279 = vmatprep.subr.mxu0 0.0
    %1280 = vmatpush1.xpose.msra.mxu0 0.0
    %1281 = vmatprep.subr.mxu0 0.0
    %1282 = vmatpush1.xpose.msra.mxu0 0.0
    %1283 = vmatprep.subr.mxu0 0.0
    %1284 = vmatpush1.xpose.msra.mxu0 0.0
    %1285 = vmatprep.subr.mxu0 0.0
    %1286 = vmatpush1.xpose.msra.mxu0 0.0
    %1287 = vmatprep.subr.mxu0 0.0
    %1288 = vmatpush1.xpose.msra.mxu0 0.0
    %1289 = vmatprep.subr.mxu0 0.0
    %1290 = vmatpush1.xpose.msra.mxu0 0.0
    %1291 = vmatprep.subr.mxu0 0.0
    %1292 = vmatpush1.xpose.msra.mxu0 0.0
    %1293 = vmatprep.subr.mxu0 0.0
    %1294 = vmatpush1.xpose.msra.mxu0 0.0
    %1295 = vmatprep.subr.mxu0 0.0
    %1296 = vmatpush1.xpose.msra.mxu0 0.0
    %1297 = vmatprep.subr.mxu0 0.0
    %1298 = vmatpush1.xpose.msra.mxu0 0.0
    %1299 = vmatprep.subr.mxu0 0.0
    %1300 = vmatpush1.xpose.msra.mxu0 0.0
    %1301 = vmatprep.subr.mxu0 0.0
    %1302 = vmatpush1.xpose.msra.mxu0 0.0
    %1303 = vmatprep.subr.mxu0 0.0
    %1304 = vmatpush1.xpose.msra.mxu0 0.0
    %1305 = vmatprep.subr.mxu0 0.0
    %1306 = vmatpush1.xpose.msra.mxu0 0.0
    %1307 = vmatprep.subr.mxu0 0.0
    %1308 = vmatpush1.xpose.msra.mxu0 0.0
    %1309 = vmatprep.subr.mxu0 0.0
    %1310 = vmatpush1.xpose.msra.mxu0 0.0
    %1311 = vmatprep.subr.mxu0 0.0
    %1312 = vmatpush1.xpose.msra.mxu0 0.0
    %1313 = vmatprep.subr.mxu0 0.0
    %1314 = vmatpush1.xpose.msra.mxu0 0.0
    %1315 = vmatprep.subr.mxu0 0.0
    %1316 = vmatpush1.xpose.msra.mxu0 0.0
    %1317 = vmatprep.subr.mxu0 0.0
    %1318 = vmatpush1.xpose.msra.mxu0 0.0
    %1319 = vmatprep.subr.mxu0 0.0
    %1320 = vmatpush1.xpose.msra.mxu0 0.0
    %1321 = vmatprep.subr.mxu0 0.0
    %1322 = vmatpush1.xpose.msra.mxu0 0.0
    %1323 = vmatprep.subr.mxu0 0.0
    %1324 = vmatpush1.xpose.msra.mxu0 0.0
    %1325 = vmatprep.subr.mxu0 0.0
    %1326 = vmatpush1.xpose.msra.mxu0 0.0
    %1327 = vmatprep.subr.mxu0 0.0
    %1328 = vmatpush1.xpose.msra.mxu0 0.0
    %1329 = vmatprep.subr.mxu0 0.0
    %1330 = vmatpush1.xpose.msra.mxu0 0.0
    %1331 = vmatprep.subr.mxu0 0.0
    %1332 = vmatpush1.xpose.msra.mxu0 0.0
    %1333 = vmatprep.mubr.f32.mxu0 0.0
    %1334 = vmatmul.mubr.f32.gmra.mrb[0].mxu0 %v1265
    %v1335 = vpop.f32.mrb[0].mxu0
    %v1336 = vadd.f32 0.0, %v1335
    %v1337 = vpop.f32.mrb[0].mxu0
    %1338 = vdwg.mxu0
    %1339 = vrot.lane.b32.xlu0 %v417, 96
    %v1340 = vpop.permute.xlu0 %1339
    %1341 = vrot.lane.b32.xlu0 %v315, 96
    %v1342 = vpop.permute.xlu0 %1341
    %v1343 = vsel %vm441, %v1340, 0
    %v1345 = vsel %vm441, %v1342, 0
    %1347 = vmatprep.subr.mxu0 0.0
    %1348 = vmatpush1.xpose.msra.mxu0 %v1345
    %1349 = vmatprep.subr.mxu0 0.0
    %1350 = vmatpush1.xpose.msra.mxu0 0.0
    %1351 = vmatprep.subr.mxu0 0.0
    %1352 = vmatpush1.xpose.msra.mxu0 0.0
    %1353 = vmatprep.subr.mxu0 0.0
    %1354 = vmatpush1.xpose.msra.mxu0 0.0
    %1355 = vmatprep.subr.mxu0 0.0
    %1356 = vmatpush1.xpose.msra.mxu0 0.0
    %1357 = vmatprep.subr.mxu0 0.0
    %1358 = vmatpush1.xpose.msra.mxu0 0.0
    %1359 = vmatprep.subr.mxu0 0.0
    %1360 = vmatpush1.xpose.msra.mxu0 0.0
    %1361 = vmatprep.subr.mxu0 0.0
    %1362 = vmatpush1.xpose.msra.mxu0 0.0
    %1363 = vmatprep.subr.mxu0 0.0
    %1364 = vmatpush1.xpose.msra.mxu0 0.0
    %1365 = vmatprep.subr.mxu0 0.0
    %1366 = vmatpush1.xpose.msra.mxu0 0.0
    %1367 = vmatprep.subr.mxu0 0.0
    %1368 = vmatpush1.xpose.msra.mxu0 0.0
    %1369 = vmatprep.subr.mxu0 0.0
    %1370 = vmatpush1.xpose.msra.mxu0 0.0
    %1371 = vmatprep.subr.mxu0 0.0
    %1372 = vmatpush1.xpose.msra.mxu0 0.0
    %1373 = vmatprep.subr.mxu0 0.0
    %1374 = vmatpush1.xpose.msra.mxu0 0.0
    %1375 = vmatprep.subr.mxu0 0.0
    %1376 = vmatpush1.xpose.msra.mxu0 0.0
    %1377 = vmatprep.subr.mxu0 0.0
    %1378 = vmatpush1.xpose.msra.mxu0 0.0
    %1379 = vmatprep.subr.mxu0 0.0
    %1380 = vmatpush1.xpose.msra.mxu0 0.0
    %1381 = vmatprep.subr.mxu0 0.0
    %1382 = vmatpush1.xpose.msra.mxu0 0.0
    %1383 = vmatprep.subr.mxu0 0.0
    %1384 = vmatpush1.xpose.msra.mxu0 0.0
    %1385 = vmatprep.subr.mxu0 0.0
    %1386 = vmatpush1.xpose.msra.mxu0 0.0
    %1387 = vmatprep.subr.mxu0 0.0
    %1388 = vmatpush1.xpose.msra.mxu0 0.0
    %1389 = vmatprep.subr.mxu0 0.0
    %1390 = vmatpush1.xpose.msra.mxu0 0.0
    %1391 = vmatprep.subr.mxu0 0.0
    %1392 = vmatpush1.xpose.msra.mxu0 0.0
    %1393 = vmatprep.subr.mxu0 0.0
    %1394 = vmatpush1.xpose.msra.mxu0 0.0
    %1395 = vmatprep.subr.mxu0 0.0
    %1396 = vmatpush1.xpose.msra.mxu0 0.0
    %1397 = vmatprep.subr.mxu0 0.0
    %1398 = vmatpush1.xpose.msra.mxu0 0.0
    %1399 = vmatprep.subr.mxu0 0.0
    %1400 = vmatpush1.xpose.msra.mxu0 0.0
    %1401 = vmatprep.subr.mxu0 0.0
    %1402 = vmatpush1.xpose.msra.mxu0 0.0
    %1403 = vmatprep.subr.mxu0 0.0
    %1404 = vmatpush1.xpose.msra.mxu0 0.0
    %1405 = vmatprep.subr.mxu0 0.0
    %1406 = vmatpush1.xpose.msra.mxu0 0.0
    %1407 = vmatprep.subr.mxu0 0.0
    %1408 = vmatpush1.xpose.msra.mxu0 0.0
    %1409 = vmatprep.subr.mxu0 0.0
    %1410 = vmatpush1.xpose.msra.mxu0 0.0
    %1411 = vmatprep.mubr.f32.mxu0 0.0
    %1412 = vmatmul.mubr.f32.gmra.mrb[0].mxu0 %v1343
    %v1413 = vpop.f32.mrb[0].mxu0
    %v1414 = vadd.f32 0.0, %v1413
    %v1415 = vpop.f32.mrb[0].mxu0
    %1416 = vdwg.mxu0
    %v1417 = vsel %vm594, %v1336, -inf
    %1418 = vmax.xlane.f32.xlu0 %v1417
    %v1419 = vpop.xlane.xlu0 %1418
    %v1420 = vsel %vm594, %v1414, -inf
    %1421 = vmax.xlane.f32.xlu0 %v1420
    %v1422 = vpop.xlane.xlu0 %1421
    %v1423 = vsub.f32 %v1336, %v1419
    %v1424 = vsub.f32 %v1414, %v1422
    %v1425 = vmul.f32 %v1423, 1.442695
    %v1426 = vpow.pop %v1425
    %v1427 = vmul.f32 %v1424, 1.442695
    %v1428 = vpow.pop %v1427
    %v1429 = vsel %vm594, %v1426, 0.0
    %1430 = vadd.xlane.f32.xlu0 %v1429
    %v1431 = vpop.xlane.xlu0 %1430
    %v1432 = vsel %vm594, %v1428, 0.0
    %1433 = vadd.xlane.f32.xlu0 %v1432
    %v1434 = vpop.xlane.xlu0 %1433
    %v1435 = vrcp.pop %v1431
    %v1436 = vrcp.pop %v1434
    %v1437 = vmul.f32 %v1426, %v1435
    %v1438 = vmul.f32 %v1428, %v1436
    %1439 = vrot.lane.b32.xlu0 %v408, 96
    %v1440 = vpop.permute.xlu0 %1439
    %v1443 = vsel %vm594, %v1437, 0
    %1445 = vmatprep.subr.mxu0 0.0
    %1446 = vmatpush1.msra.mxu0 %v1440
    %1447 = vmatprep.subr.mxu0 0.0
    %1448 = vmatpush1.msra.mxu0 0.0
    %1449 = vmatprep.subr.mxu0 0.0
    %1450 = vmatpush1.msra.mxu0 0.0
    %1451 = vmatprep.subr.mxu0 0.0
    %1452 = vmatpush1.msra.mxu0 0.0
    %1453 = vmatprep.subr.mxu0 0.0
    %1454 = vmatpush1.msra.mxu0 0.0
    %1455 = vmatprep.subr.mxu0 0.0
    %1456 = vmatpush1.msra.mxu0 0.0
    %1457 = vmatprep.subr.mxu0 0.0
    %1458 = vmatpush1.msra.mxu0 0.0
    %1459 = vmatprep.subr.mxu0 0.0
    %1460 = vmatpush1.msra.mxu0 0.0
    %1461 = vmatprep.subr.mxu0 0.0
    %1462 = vmatpush1.msra.mxu0 0.0
    %1463 = vmatprep.subr.mxu0 0.0
    %1464 = vmatpush1.msra.mxu0 0.0
    %1465 = vmatprep.subr.mxu0 0.0
    %1466 = vmatpush1.msra.mxu0 0.0
    %1467 = vmatprep.subr.mxu0 0.0
    %1468 = vmatpush1.msra.mxu0 0.0
    %1469 = vmatprep.subr.mxu0 0.0
    %1470 = vmatpush1.msra.mxu0 0.0
    %1471 = vmatprep.subr.mxu0 0.0
    %1472 = vmatpush1.msra.mxu0 0.0
    %1473 = vmatprep.subr.mxu0 0.0
    %1474 = vmatpush1.msra.mxu0 0.0
    %1475 = vmatprep.subr.mxu0 0.0
    %1476 = vmatpush1.msra.mxu0 0.0
    %1477 = vmatprep.subr.mxu0 0.0
    %1478 = vmatpush1.msra.mxu0 0.0
    %1479 = vmatprep.subr.mxu0 0.0
    %1480 = vmatpush1.msra.mxu0 0.0
    %1481 = vmatprep.subr.mxu0 0.0
    %1482 = vmatpush1.msra.mxu0 0.0
    %1483 = vmatprep.subr.mxu0 0.0
    %1484 = vmatpush1.msra.mxu0 0.0
    %1485 = vmatprep.subr.mxu0 0.0
    %1486 = vmatpush1.msra.mxu0 0.0
    %1487 = vmatprep.subr.mxu0 0.0
    %1488 = vmatpush1.msra.mxu0 0.0
    %1489 = vmatprep.subr.mxu0 0.0
    %1490 = vmatpush1.msra.mxu0 0.0
    %1491 = vmatprep.subr.mxu0 0.0
    %1492 = vmatpush1.msra.mxu0 0.0
    %1493 = vmatprep.subr.mxu0 0.0
    %1494 = vmatpush1.msra.mxu0 0.0
    %1495 = vmatprep.subr.mxu0 0.0
    %1496 = vmatpush1.msra.mxu0 0.0
    %1497 = vmatprep.subr.mxu0 0.0
    %1498 = vmatpush1.msra.mxu0 0.0
    %1499 = vmatprep.subr.mxu0 0.0
    %1500 = vmatpush1.msra.mxu0 0.0
    %1501 = vmatprep.subr.mxu0 0.0
    %1502 = vmatpush1.msra.mxu0 0.0
    %1503 = vmatprep.subr.mxu0 0.0
    %1504 = vmatpush1.msra.mxu0 0.0
    %1505 = vmatprep.subr.mxu0 0.0
    %1506 = vmatpush1.msra.mxu0 0.0
    %1507 = vmatprep.subr.mxu0 0.0
    %1508 = vmatpush1.msra.mxu0 0.0
    %1509 = vmatprep.mubr.f32.mxu0 0.0
    %1510 = vmatmul.mubr.f32.gmra.mrb[0].mxu0 %v1443
    %v1511 = vpop.f32.mrb[0].mxu0
    %v1512 = vadd.f32 0.0, %v1511
    %v1513 = vpop.f32.mrb[0].mxu0
    %1514 = vdwg.mxu0
    %1515 = vrot.lane.b32.xlu0 %v413, 96
    %v1516 = vpop.permute.xlu0 %1515
    %v1519 = vsel %vm594, %v1438, 0
    %1521 = vmatprep.subr.mxu0 0.0
    %1522 = vmatpush1.msra.mxu0 %v1516
    %1523 = vmatprep.subr.mxu0 0.0
    %1524 = vmatpush1.msra.mxu0 0.0
    %1525 = vmatprep.subr.mxu0 0.0
    %1526 = vmatpush1.msra.mxu0 0.0
    %1527 = vmatprep.subr.mxu0 0.0
    %1528 = vmatpush1.msra.mxu0 0.0
    %1529 = vmatprep.subr.mxu0 0.0
    %1530 = vmatpush1.msra.mxu0 0.0
    %1531 = vmatprep.subr.mxu0 0.0
    %1532 = vmatpush1.msra.mxu0 0.0
    %1533 = vmatprep.subr.mxu0 0.0
    %1534 = vmatpush1.msra.mxu0 0.0
    %1535 = vmatprep.subr.mxu0 0.0
    %1536 = vmatpush1.msra.mxu0 0.0
    %1537 = vmatprep.subr.mxu0 0.0
    %1538 = vmatpush1.msra.mxu0 0.0
    %1539 = vmatprep.subr.mxu0 0.0
    %1540 = vmatpush1.msra.mxu0 0.0
    %1541 = vmatprep.subr.mxu0 0.0
    %1542 = vmatpush1.msra.mxu0 0.0
    %1543 = vmatprep.subr.mxu0 0.0
    %1544 = vmatpush1.msra.mxu0 0.0
    %1545 = vmatprep.subr.mxu0 0.0
    %1546 = vmatpush1.msra.mxu0 0.0
    %1547 = vmatprep.subr.mxu0 0.0
    %1548 = vmatpush1.msra.mxu0 0.0
    %1549 = vmatprep.subr.mxu0 0.0
    %1550 = vmatpush1.msra.mxu0 0.0
    %1551 = vmatprep.subr.mxu0 0.0
    %1552 = vmatpush1.msra.mxu0 0.0
    %1553 = vmatprep.subr.mxu0 0.0
    %1554 = vmatpush1.msra.mxu0 0.0
    %1555 = vmatprep.subr.mxu0 0.0
    %1556 = vmatpush1.msra.mxu0 0.0
    %1557 = vmatprep.subr.mxu0 0.0
    %1558 = vmatpush1.msra.mxu0 0.0
    %1559 = vmatprep.subr.mxu0 0.0
    %1560 = vmatpush1.msra.mxu0 0.0
    %1561 = vmatprep.subr.mxu0 0.0
    %1562 = vmatpush1.msra.mxu0 0.0
    %1563 = vmatprep.subr.mxu0 0.0
    %1564 = vmatpush1.msra.mxu0 0.0
    %1565 = vmatprep.subr.mxu0 0.0
    %1566 = vmatpush1.msra.mxu0 0.0
    %1567 = vmatprep.subr.mxu0 0.0
    %1568 = vmatpush1.msra.mxu0 0.0
    %1569 = vmatprep.subr.mxu0 0.0
    %1570 = vmatpush1.msra.mxu0 0.0
    %1571 = vmatprep.subr.mxu0 0.0
    %1572 = vmatpush1.msra.mxu0 0.0
    %1573 = vmatprep.subr.mxu0 0.0
    %1574 = vmatpush1.msra.mxu0 0.0
    %1575 = vmatprep.subr.mxu0 0.0
    %1576 = vmatpush1.msra.mxu0 0.0
    %1577 = vmatprep.subr.mxu0 0.0
    %1578 = vmatpush1.msra.mxu0 0.0
    %1579 = vmatprep.subr.mxu0 0.0
    %1580 = vmatpush1.msra.mxu0 0.0
    %1581 = vmatprep.subr.mxu0 0.0
    %1582 = vmatpush1.msra.mxu0 0.0
    %1583 = vmatprep.subr.mxu0 0.0
    %1584 = vmatpush1.msra.mxu0 0.0
    %1585 = vmatprep.mubr.f32.mxu0 0.0
    %1586 = vmatmul.mubr.f32.gmra.mrb[0].mxu0 %v1519
    %v1587 = vpop.f32.mrb[0].mxu0
    %v1588 = vadd.f32 0.0, %v1587
    %v1589 = vpop.f32.mrb[0].mxu0
    %1590 = vdwg.mxu0
    %v1592 = vsel %vm441, %v1512, 0
    %v1595 = vsel %vm441, %v1588, 0
    %1597 = vmatprep.subr.mxu0 0.0
    %1598 = vmatpush1.msra.mxu0 %v422
    %1599 = vmatprep.subr.mxu0 0.0
    %1600 = vmatpush1.msra.mxu0 %v423
    %1601 = vmatprep.subr.mxu0 0.0
    %1602 = vmatpush1.msra.mxu0 0.0
    %1603 = vmatprep.subr.mxu0 0.0
    %1604 = vmatpush1.msra.mxu0 0.0
    %1605 = vmatprep.subr.mxu0 0.0
    %1606 = vmatpush1.msra.mxu0 0.0
    %1607 = vmatprep.subr.mxu0 0.0
    %1608 = vmatpush1.msra.mxu0 0.0
    %1609 = vmatprep.subr.mxu0 0.0
    %1610 = vmatpush1.msra.mxu0 0.0
    %1611 = vmatprep.subr.mxu0 0.0
    %1612 = vmatpush1.msra.mxu0 0.0
    %1613 = vmatprep.subr.mxu0 0.0
    %1614 = vmatpush1.msra.mxu0 0.0
    %1615 = vmatprep.subr.mxu0 0.0
    %1616 = vmatpush1.msra.mxu0 0.0
    %1617 = vmatprep.subr.mxu0 0.0
    %1618 = vmatpush1.msra.mxu0 0.0
    %1619 = vmatprep.subr.mxu0 0.0
    %1620 = vmatpush1.msra.mxu0 0.0
    %1621 = vmatprep.subr.mxu0 0.0
    %1622 = vmatpush1.msra.mxu0 0.0
    %1623 = vmatprep.subr.mxu0 0.0
    %1624 = vmatpush1.msra.mxu0 0.0
    %1625 = vmatprep.subr.mxu0 0.0
    %1626 = vmatpush1.msra.mxu0 0.0
    %1627 = vmatprep.subr.mxu0 0.0
    %1628 = vmatpush1.msra.mxu0 0.0
    %1629 = vmatprep.subr.mxu0 0.0
    %1630 = vmatpush1.msra.mxu0 0.0
    %1631 = vmatprep.subr.mxu0 0.0
    %1632 = vmatpush1.msra.mxu0 0.0
    %1633 = vmatprep.subr.mxu0 0.0
    %1634 = vmatpush1.msra.mxu0 0.0
    %1635 = vmatprep.subr.mxu0 0.0
    %1636 = vmatpush1.msra.mxu0 0.0
    %1637 = vmatprep.subr.mxu0 0.0
    %1638 = vmatpush1.msra.mxu0 0.0
    %1639 = vmatprep.subr.mxu0 0.0
    %1640 = vmatpush1.msra.mxu0 0.0
    %1641 = vmatprep.subr.mxu0 0.0
    %1642 = vmatpush1.msra.mxu0 0.0
    %1643 = vmatprep.subr.mxu0 0.0
    %1644 = vmatpush1.msra.mxu0 0.0
    %1645 = vmatprep.subr.mxu0 0.0
    %1646 = vmatpush1.msra.mxu0 0.0
    %1647 = vmatprep.subr.mxu0 0.0
    %1648 = vmatpush1.msra.mxu0 0.0
    %1649 = vmatprep.subr.mxu0 0.0
    %1650 = vmatpush1.msra.mxu0 0.0
    %1651 = vmatprep.subr.mxu0 0.0
    %1652 = vmatpush1.msra.mxu0 0.0
    %1653 = vmatprep.subr.mxu0 0.0
    %1654 = vmatpush1.msra.mxu0 0.0
    %1655 = vmatprep.subr.mxu0 0.0
    %1656 = vmatpush1.msra.mxu0 0.0
    %1657 = vmatprep.subr.mxu0 0.0
    %1658 = vmatpush1.msra.mxu0 0.0
    %1659 = vmatprep.subr.mxu0 0.0
    %1660 = vmatpush1.msra.mxu0 0.0
    %1661 = vmatprep.mubr.f32.mxu0 0.0
    %1662 = vmatmul.mubr.f32.gmra.mrb[0].mxu0 %v1592
    %v1663 = vpop.f32.mrb[0].mxu0
    %v1664 = vadd.f32 0.0, %v1663
    %v1665 = vpop.f32.mrb[0].mxu0
    %1666 = vmatprep.mubr.f32.mxu0 0.0
    %1667 = vmatmul.mubr.f32.gmra.mrb[0].mxu0 %v1595
    %v1668 = vpop.f32.mrb[0].mxu0
    %v1669 = vadd.f32 0.0, %v1668
    %v1670 = vpop.f32.mrb[0].mxu0
    %1671 = vdwg.mxu0
    %v1672 = vadd.f32 %v1259, %v1664
    %v1673 = vadd.f32 %v1260, %v1669
    %1674 = vrot.lane.b32.xlu0 %v416, 80
    %v1675 = vpop.permute.xlu0 %1674
    %1676 = vrot.lane.b32.xlu0 %v310, 80
    %v1677 = vpop.permute.xlu0 %1676
    %v1678 = vsel %vm441, %v1675, 0
    %v1680 = vsel %vm441, %v1677, 0
    %1682 = vmatprep.subr.mxu0 0.0
    %1683 = vmatpush1.xpose.msra.mxu0 %v1680
    %1684 = vmatprep.subr.mxu0 0.0
    %1685 = vmatpush1.xpose.msra.mxu0 0.0
    %1686 = vmatprep.subr.mxu0 0.0
    %1687 = vmatpush1.xpose.msra.mxu0 0.0
    %1688 = vmatprep.subr.mxu0 0.0
    %1689 = vmatpush1.xpose.msra.mxu0 0.0
    %1690 = vmatprep.subr.mxu0 0.0
    %1691 = vmatpush1.xpose.msra.mxu0 0.0
    %1692 = vmatprep.subr.mxu0 0.0
    %1693 = vmatpush1.xpose.msra.mxu0 0.0
    %1694 = vmatprep.subr.mxu0 0.0
    %1695 = vmatpush1.xpose.msra.mxu0 0.0
    %1696 = vmatprep.subr.mxu0 0.0
    %1697 = vmatpush1.xpose.msra.mxu0 0.0
    %1698 = vmatprep.subr.mxu0 0.0
    %1699 = vmatpush1.xpose.msra.mxu0 0.0
    %1700 = vmatprep.subr.mxu0 0.0
    %1701 = vmatpush1.xpose.msra.mxu0 0.0
    %1702 = vmatprep.subr.mxu0 0.0
    %1703 = vmatpush1.xpose.msra.mxu0 0.0
    %1704 = vmatprep.subr.mxu0 0.0
    %1705 = vmatpush1.xpose.msra.mxu0 0.0
    %1706 = vmatprep.subr.mxu0 0.0
    %1707 = vmatpush1.xpose.msra.mxu0 0.0
    %1708 = vmatprep.subr.mxu0 0.0
    %1709 = vmatpush1.xpose.msra.mxu0 0.0
    %1710 = vmatprep.subr.mxu0 0.0
    %1711 = vmatpush1.xpose.msra.mxu0 0.0
    %1712 = vmatprep.subr.mxu0 0.0
    %1713 = vmatpush1.xpose.msra.mxu0 0.0
    %1714 = vmatprep.subr.mxu0 0.0
    %1715 = vmatpush1.xpose.msra.mxu0 0.0
    %1716 = vmatprep.subr.mxu0 0.0
    %1717 = vmatpush1.xpose.msra.mxu0 0.0
    %1718 = vmatprep.subr.mxu0 0.0
    %1719 = vmatpush1.xpose.msra.mxu0 0.0
    %1720 = vmatprep.subr.mxu0 0.0
    %1721 = vmatpush1.xpose.msra.mxu0 0.0
    %1722 = vmatprep.subr.mxu0 0.0
    %1723 = vmatpush1.xpose.msra.mxu0 0.0
    %1724 = vmatprep.subr.mxu0 0.0
    %1725 = vmatpush1.xpose.msra.mxu0 0.0
    %1726 = vmatprep.subr.mxu0 0.0
    %1727 = vmatpush1.xpose.msra.mxu0 0.0
    %1728 = vmatprep.subr.mxu0 0.0
    %1729 = vmatpush1.xpose.msra.mxu0 0.0
    %1730 = vmatprep.subr.mxu0 0.0
    %1731 = vmatpush1.xpose.msra.mxu0 0.0
    %1732 = vmatprep.subr.mxu0 0.0
    %1733 = vmatpush1.xpose.msra.mxu0 0.0
    %1734 = vmatprep.subr.mxu0 0.0
    %1735 = vmatpush1.xpose.msra.mxu0 0.0
    %1736 = vmatprep.subr.mxu0 0.0
    %1737 = vmatpush1.xpose.msra.mxu0 0.0
    %1738 = vmatprep.subr.mxu0 0.0
    %1739 = vmatpush1.xpose.msra.mxu0 0.0
    %1740 = vmatprep.subr.mxu0 0.0
    %1741 = vmatpush1.xpose.msra.mxu0 0.0
    %1742 = vmatprep.subr.mxu0 0.0
    %1743 = vmatpush1.xpose.msra.mxu0 0.0
    %1744 = vmatprep.subr.mxu0 0.0
    %1745 = vmatpush1.xpose.msra.mxu0 0.0
    %1746 = vmatprep.mubr.f32.mxu0 0.0
    %1747 = vmatmul.mubr.f32.gmra.mrb[0].mxu0 %v1678
    %v1748 = vpop.f32.mrb[0].mxu0
    %v1749 = vadd.f32 0.0, %v1748
    %v1750 = vpop.f32.mrb[0].mxu0
    %1751 = vdwg.mxu0
    %1752 = vrot.lane.b32.xlu0 %v417, 80
    %v1753 = vpop.permute.xlu0 %1752
    %1754 = vrot.lane.b32.xlu0 %v315, 80
    %v1755 = vpop.permute.xlu0 %1754
    %v1756 = vsel %vm441, %v1753, 0
    %v1758 = vsel %vm441, %v1755, 0
    %1760 = vmatprep.subr.mxu0 0.0
    %1761 = vmatpush1.xpose.msra.mxu0 %v1758
    %1762 = vmatprep.subr.mxu0 0.0
    %1763 = vmatpush1.xpose.msra.mxu0 0.0
    %1764 = vmatprep.subr.mxu0 0.0
    %1765 = vmatpush1.xpose.msra.mxu0 0.0
    %1766 = vmatprep.subr.mxu0 0.0
    %1767 = vmatpush1.xpose.msra.mxu0 0.0
    %1768 = vmatprep.subr.mxu0 0.0
    %1769 = vmatpush1.xpose.msra.mxu0 0.0
    %1770 = vmatprep.subr.mxu0 0.0
    %1771 = vmatpush1.xpose.msra.mxu0 0.0
    %1772 = vmatprep.subr.mxu0 0.0
    %1773 = vmatpush1.xpose.msra.mxu0 0.0
    %1774 = vmatprep.subr.mxu0 0.0
    %1775 = vmatpush1.xpose.msra.mxu0 0.0
    %1776 = vmatprep.subr.mxu0 0.0
    %1777 = vmatpush1.xpose.msra.mxu0 0.0
    %1778 = vmatprep.subr.mxu0 0.0
    %1779 = vmatpush1.xpose.msra.mxu0 0.0
    %1780 = vmatprep.subr.mxu0 0.0
    %1781 = vmatpush1.xpose.msra.mxu0 0.0
    %1782 = vmatprep.subr.mxu0 0.0
    %1783 = vmatpush1.xpose.msra.mxu0 0.0
    %1784 = vmatprep.subr.mxu0 0.0
    %1785 = vmatpush1.xpose.msra.mxu0 0.0
    %1786 = vmatprep.subr.mxu0 0.0
    %1787 = vmatpush1.xpose.msra.mxu0 0.0
    %1788 = vmatprep.subr.mxu0 0.0
    %1789 = vmatpush1.xpose.msra.mxu0 0.0
    %1790 = vmatprep.subr.mxu0 0.0
    %1791 = vmatpush1.xpose.msra.mxu0 0.0
    %1792 = vmatprep.subr.mxu0 0.0
    %1793 = vmatpush1.xpose.msra.mxu0 0.0
    %1794 = vmatprep.subr.mxu0 0.0
    %1795 = vmatpush1.xpose.msra.mxu0 0.0
    %1796 = vmatprep.subr.mxu0 0.0
    %1797 = vmatpush1.xpose.msra.mxu0 0.0
    %1798 = vmatprep.subr.mxu0 0.0
    %1799 = vmatpush1.xpose.msra.mxu0 0.0
    %1800 = vmatprep.subr.mxu0 0.0
    %1801 = vmatpush1.xpose.msra.mxu0 0.0
    %1802 = vmatprep.subr.mxu0 0.0
    %1803 = vmatpush1.xpose.msra.mxu0 0.0
    %1804 = vmatprep.subr.mxu0 0.0
    %1805 = vmatpush1.xpose.msra.mxu0 0.0
    %1806 = vmatprep.subr.mxu0 0.0
    %1807 = vmatpush1.xpose.msra.mxu0 0.0
    %1808 = vmatprep.subr.mxu0 0.0
    %1809 = vmatpush1.xpose.msra.mxu0 0.0
    %1810 = vmatprep.subr.mxu0 0.0
    %1811 = vmatpush1.xpose.msra.mxu0 0.0
    %1812 = vmatprep.subr.mxu0 0.0
    %1813 = vmatpush1.xpose.msra.mxu0 0.0
    %1814 = vmatprep.subr.mxu0 0.0
    %1815 = vmatpush1.xpose.msra.mxu0 0.0
    %1816 = vmatprep.subr.mxu0 0.0
    %1817 = vmatpush1.xpose.msra.mxu0 0.0
    %1818 = vmatprep.subr.mxu0 0.0
    %1819 = vmatpush1.xpose.msra.mxu0 0.0
    %1820 = vmatprep.subr.mxu0 0.0
    %1821 = vmatpush1.xpose.msra.mxu0 0.0
    %1822 = vmatprep.subr.mxu0 0.0
    %1823 = vmatpush1.xpose.msra.mxu0 0.0
    %1824 = vmatprep.mubr.f32.mxu0 0.0
    %1825 = vmatmul.mubr.f32.gmra.mrb[0].mxu0 %v1756
    %v1826 = vpop.f32.mrb[0].mxu0
    %v1827 = vadd.f32 0.0, %v1826
    %v1828 = vpop.f32.mrb[0].mxu0
    %1829 = vdwg.mxu0
    %v1830 = vsel %vm594, %v1749, -inf
    %1831 = vmax.xlane.f32.xlu0 %v1830
    %v1832 = vpop.xlane.xlu0 %1831
    %v1833 = vsel %vm594, %v1827, -inf
    %1834 = vmax.xlane.f32.xlu0 %v1833
    %v1835 = vpop.xlane.xlu0 %1834
    %v1836 = vsub.f32 %v1749, %v1832
    %v1837 = vsub.f32 %v1827, %v1835
    %v1838 = vmul.f32 %v1836, 1.442695
    %v1839 = vpow.pop %v1838
    %v1840 = vmul.f32 %v1837, 1.442695
    %v1841 = vpow.pop %v1840
    %v1842 = vsel %vm594, %v1839, 0.0
    %1843 = vadd.xlane.f32.xlu0 %v1842
    %v1844 = vpop.xlane.xlu0 %1843
    %v1845 = vsel %vm594, %v1841, 0.0
    %1846 = vadd.xlane.f32.xlu0 %v1845
    %v1847 = vpop.xlane.xlu0 %1846
    %v1848 = vrcp.pop %v1844
    %v1849 = vrcp.pop %v1847
    %v1850 = vmul.f32 %v1839, %v1848
    %v1851 = vmul.f32 %v1841, %v1849
    %1852 = vrot.lane.b32.xlu0 %v408, 80
    %v1853 = vpop.permute.xlu0 %1852
    %v1856 = vsel %vm594, %v1850, 0
    %1858 = vmatprep.subr.mxu0 0.0
    %1859 = vmatpush1.msra.mxu0 %v1853
    %1860 = vmatprep.subr.mxu0 0.0
    %1861 = vmatpush1.msra.mxu0 0.0
    %1862 = vmatprep.subr.mxu0 0.0
    %1863 = vmatpush1.msra.mxu0 0.0
    %1864 = vmatprep.subr.mxu0 0.0
    %1865 = vmatpush1.msra.mxu0 0.0
    %1866 = vmatprep.subr.mxu0 0.0
    %1867 = vmatpush1.msra.mxu0 0.0
    %1868 = vmatprep.subr.mxu0 0.0
    %1869 = vmatpush1.msra.mxu0 0.0
    %1870 = vmatprep.subr.mxu0 0.0
    %1871 = vmatpush1.msra.mxu0 0.0
    %1872 = vmatprep.subr.mxu0 0.0
    %1873 = vmatpush1.msra.mxu0 0.0
    %1874 = vmatprep.subr.mxu0 0.0
    %1875 = vmatpush1.msra.mxu0 0.0
    %1876 = vmatprep.subr.mxu0 0.0
    %1877 = vmatpush1.msra.mxu0 0.0
    %1878 = vmatprep.subr.mxu0 0.0
    %1879 = vmatpush1.msra.mxu0 0.0
    %1880 = vmatprep.subr.mxu0 0.0
    %1881 = vmatpush1.msra.mxu0 0.0
    %1882 = vmatprep.subr.mxu0 0.0
    %1883 = vmatpush1.msra.mxu0 0.0
    %1884 = vmatprep.subr.mxu0 0.0
    %1885 = vmatpush1.msra.mxu0 0.0
    %1886 = vmatprep.subr.mxu0 0.0
    %1887 = vmatpush1.msra.mxu0 0.0
    %1888 = vmatprep.subr.mxu0 0.0
    %1889 = vmatpush1.msra.mxu0 0.0
    %1890 = vmatprep.subr.mxu0 0.0
    %1891 = vmatpush1.msra.mxu0 0.0
    %1892 = vmatprep.subr.mxu0 0.0
    %1893 = vmatpush1.msra.mxu0 0.0
    %1894 = vmatprep.subr.mxu0 0.0
    %1895 = vmatpush1.msra.mxu0 0.0
    %1896 = vmatprep.subr.mxu0 0.0
    %1897 = vmatpush1.msra.mxu0 0.0
    %1898 = vmatprep.subr.mxu0 0.0
    %1899 = vmatpush1.msra.mxu0 0.0
    %1900 = vmatprep.subr.mxu0 0.0
    %1901 = vmatpush1.msra.mxu0 0.0
    %1902 = vmatprep.subr.mxu0 0.0
    %1903 = vmatpush1.msra.mxu0 0.0
    %1904 = vmatprep.subr.mxu0 0.0
    %1905 = vmatpush1.msra.mxu0 0.0
    %1906 = vmatprep.subr.mxu0 0.0
    %1907 = vmatpush1.msra.mxu0 0.0
    %1908 = vmatprep.subr.mxu0 0.0
    %1909 = vmatpush1.msra.mxu0 0.0
    %1910 = vmatprep.subr.mxu0 0.0
    %1911 = vmatpush1.msra.mxu0 0.0
    %1912 = vmatprep.subr.mxu0 0.0
    %1913 = vmatpush1.msra.mxu0 0.0
    %1914 = vmatprep.subr.mxu0 0.0
    %1915 = vmatpush1.msra.mxu0 0.0
    %1916 = vmatprep.subr.mxu0 0.0
    %1917 = vmatpush1.msra.mxu0 0.0
    %1918 = vmatprep.subr.mxu0 0.0
    %1919 = vmatpush1.msra.mxu0 0.0
    %1920 = vmatprep.subr.mxu0 0.0
    %1921 = vmatpush1.msra.mxu0 0.0
    %1922 = vmatprep.mubr.f32.mxu0 0.0
    %1923 = vmatmul.mubr.f32.gmra.mrb[0].mxu0 %v1856
    %v1924 = vpop.f32.mrb[0].mxu0
    %v1925 = vadd.f32 0.0, %v1924
    %v1926 = vpop.f32.mrb[0].mxu0
    %1927 = vdwg.mxu0
    %1928 = vrot.lane.b32.xlu0 %v413, 80
    %v1929 = vpop.permute.xlu0 %1928
    %v1932 = vsel %vm594, %v1851, 0
    %1934 = vmatprep.subr.mxu0 0.0
    %1935 = vmatpush1.msra.mxu0 %v1929
    %1936 = vmatprep.subr.mxu0 0.0
    %1937 = vmatpush1.msra.mxu0 0.0
    %1938 = vmatprep.subr.mxu0 0.0
    %1939 = vmatpush1.msra.mxu0 0.0
    %1940 = vmatprep.subr.mxu0 0.0
    %1941 = vmatpush1.msra.mxu0 0.0
    %1942 = vmatprep.subr.mxu0 0.0
    %1943 = vmatpush1.msra.mxu0 0.0
    %1944 = vmatprep.subr.mxu0 0.0
    %1945 = vmatpush1.msra.mxu0 0.0
    %1946 = vmatprep.subr.mxu0 0.0
    %1947 = vmatpush1.msra.mxu0 0.0
    %1948 = vmatprep.subr.mxu0 0.0
    %1949 = vmatpush1.msra.mxu0 0.0
    %1950 = vmatprep.subr.mxu0 0.0
    %1951 = vmatpush1.msra.mxu0 0.0
    %1952 = vmatprep.subr.mxu0 0.0
    %1953 = vmatpush1.msra.mxu0 0.0
    %1954 = vmatprep.subr.mxu0 0.0
    %1955 = vmatpush1.msra.mxu0 0.0
    %1956 = vmatprep.subr.mxu0 0.0
    %1957 = vmatpush1.msra.mxu0 0.0
    %1958 = vmatprep.subr.mxu0 0.0
    %1959 = vmatpush1.msra.mxu0 0.0
    %1960 = vmatprep.subr.mxu0 0.0
    %1961 = vmatpush1.msra.mxu0 0.0
    %1962 = vmatprep.subr.mxu0 0.0
    %1963 = vmatpush1.msra.mxu0 0.0
    %1964 = vmatprep.subr.mxu0 0.0
    %1965 = vmatpush1.msra.mxu0 0.0
    %1966 = vmatprep.subr.mxu0 0.0
    %1967 = vmatpush1.msra.mxu0 0.0
    %1968 = vmatprep.subr.mxu0 0.0
    %1969 = vmatpush1.msra.mxu0 0.0
    %1970 = vmatprep.subr.mxu0 0.0
    %1971 = vmatpush1.msra.mxu0 0.0
    %1972 = vmatprep.subr.mxu0 0.0
    %1973 = vmatpush1.msra.mxu0 0.0
    %1974 = vmatprep.subr.mxu0 0.0
    %1975 = vmatpush1.msra.mxu0 0.0
    %1976 = vmatprep.subr.mxu0 0.0
    %1977 = vmatpush1.msra.mxu0 0.0
    %1978 = vmatprep.subr.mxu0 0.0
    %1979 = vmatpush1.msra.mxu0 0.0
    %1980 = vmatprep.subr.mxu0 0.0
    %1981 = vmatpush1.msra.mxu0 0.0
    %1982 = vmatprep.subr.mxu0 0.0
    %1983 = vmatpush1.msra.mxu0 0.0
    %1984 = vmatprep.subr.mxu0 0.0
    %1985 = vmatpush1.msra.mxu0 0.0
    %1986 = vmatprep.subr.mxu0 0.0
    %1987 = vmatpush1.msra.mxu0 0.0
    %1988 = vmatprep.subr.mxu0 0.0
    %1989 = vmatpush1.msra.mxu0 0.0
    %1990 = vmatprep.subr.mxu0 0.0
    %1991 = vmatpush1.msra.mxu0 0.0
    %1992 = vmatprep.subr.mxu0 0.0
    %1993 = vmatpush1.msra.mxu0 0.0
    %1994 = vmatprep.subr.mxu0 0.0
    %1995 = vmatpush1.msra.mxu0 0.0
    %1996 = vmatprep.subr.mxu0 0.0
    %1997 = vmatpush1.msra.mxu0 0.0
    %1998 = vmatprep.mubr.f32.mxu0 0.0
    %1999 = vmatmul.mubr.f32.gmra.mrb[0].mxu0 %v1932
    %v2000 = vpop.f32.mrb[0].mxu0
    %v2001 = vadd.f32 0.0, %v2000
    %v2002 = vpop.f32.mrb[0].mxu0
    %2003 = vdwg.mxu0
    %v2005 = vsel %vm441, %v1925, 0
    %v2008 = vsel %vm441, %v2001, 0
    %2010 = vmatprep.subr.mxu0 0.0
    %2011 = vmatpush1.msra.mxu0 %v424
    %2012 = vmatprep.subr.mxu0 0.0
    %2013 = vmatpush1.msra.mxu0 %v425
    %2014 = vmatprep.subr.mxu0 0.0
    %2015 = vmatpush1.msra.mxu0 0.0
    %2016 = vmatprep.subr.mxu0 0.0
    %2017 = vmatpush1.msra.mxu0 0.0
    %2018 = vmatprep.subr.mxu0 0.0
    %2019 = vmatpush1.msra.mxu0 0.0
    %2020 = vmatprep.subr.mxu0 0.0
    %2021 = vmatpush1.msra.mxu0 0.0
    %2022 = vmatprep.subr.mxu0 0.0
    %2023 = vmatpush1.msra.mxu0 0.0
    %2024 = vmatprep.subr.mxu0 0.0
    %2025 = vmatpush1.msra.mxu0 0.0
    %2026 = vmatprep.subr.mxu0 0.0
    %2027 = vmatpush1.msra.mxu0 0.0
    %2028 = vmatprep.subr.mxu0 0.0
    %2029 = vmatpush1.msra.mxu0 0.0
    %2030 = vmatprep.subr.mxu0 0.0
    %2031 = vmatpush1.msra.mxu0 0.0
    %2032 = vmatprep.subr.mxu0 0.0
    %2033 = vmatpush1.msra.mxu0 0.0
    %2034 = vmatprep.subr.mxu0 0.0
    %2035 = vmatpush1.msra.mxu0 0.0
    %2036 = vmatprep.subr.mxu0 0.0
    %2037 = vmatpush1.msra.mxu0 0.0
    %2038 = vmatprep.subr.mxu0 0.0
    %2039 = vmatpush1.msra.mxu0 0.0
    %2040 = vmatprep.subr.mxu0 0.0
    %2041 = vmatpush1.msra.mxu0 0.0
    %2042 = vmatprep.subr.mxu0 0.0
    %2043 = vmatpush1.msra.mxu0 0.0
    %2044 = vmatprep.subr.mxu0 0.0
    %2045 = vmatpush1.msra.mxu0 0.0
    %2046 = vmatprep.subr.mxu0 0.0
    %2047 = vmatpush1.msra.mxu0 0.0
    %2048 = vmatprep.subr.mxu0 0.0
    %2049 = vmatpush1.msra.mxu0 0.0
    %2050 = vmatprep.subr.mxu0 0.0
    %2051 = vmatpush1.msra.mxu0 0.0
    %2052 = vmatprep.subr.mxu0 0.0
    %2053 = vmatpush1.msra.mxu0 0.0
    %2054 = vmatprep.subr.mxu0 0.0
    %2055 = vmatpush1.msra.mxu0 0.0
    %2056 = vmatprep.subr.mxu0 0.0
    %2057 = vmatpush1.msra.mxu0 0.0
    %2058 = vmatprep.subr.mxu0 0.0
    %2059 = vmatpush1.msra.mxu0 0.0
    %2060 = vmatprep.subr.mxu0 0.0
    %2061 = vmatpush1.msra.mxu0 0.0
    %2062 = vmatprep.subr.mxu0 0.0
    %2063 = vmatpush1.msra.mxu0 0.0
    %2064 = vmatprep.subr.mxu0 0.0
    %2065 = vmatpush1.msra.mxu0 0.0
    %2066 = vmatprep.subr.mxu0 0.0
    %2067 = vmatpush1.msra.mxu0 0.0
    %2068 = vmatprep.subr.mxu0 0.0
    %2069 = vmatpush1.msra.mxu0 0.0
    %2070 = vmatprep.subr.mxu0 0.0
    %2071 = vmatpush1.msra.mxu0 0.0
    %2072 = vmatprep.subr.mxu0 0.0
    %2073 = vmatpush1.msra.mxu0 0.0
    %2074 = vmatprep.mubr.f32.mxu0 0.0
    %2075 = vmatmul.mubr.f32.gmra.mrb[0].mxu0 %v2005
    %v2076 = vpop.f32.mrb[0].mxu0
    %v2077 = vadd.f32 0.0, %v2076
    %v2078 = vpop.f32.mrb[0].mxu0
    %2079 = vmatprep.mubr.f32.mxu0 0.0
    %2080 = vmatmul.mubr.f32.gmra.mrb[0].mxu0 %v2008
    %v2081 = vpop.f32.mrb[0].mxu0
    %v2082 = vadd.f32 0.0, %v2081
    %v2083 = vpop.f32.mrb[0].mxu0
    %2084 = vdwg.mxu0
    %v2085 = vadd.f32 %v1672, %v2077
    %v2086 = vadd.f32 %v1673, %v2082
    %2087 = vrot.lane.b32.xlu0 %v416, 64
    %v2088 = vpop.permute.xlu0 %2087
    %2089 = vrot.lane.b32.xlu0 %v310, 64
    %v2090 = vpop.permute.xlu0 %2089
    %v2091 = vsel %vm441, %v2088, 0
    %v2093 = vsel %vm441, %v2090, 0
    %2095 = vmatprep.subr.mxu0 0.0
    %2096 = vmatpush1.xpose.msra.mxu0 %v2093
    %2097 = vmatprep.subr.mxu0 0.0
    %2098 = vmatpush1.xpose.msra.mxu0 0.0
    %2099 = vmatprep.subr.mxu0 0.0
    %2100 = vmatpush1.xpose.msra.mxu0 0.0
    %2101 = vmatprep.subr.mxu0 0.0
    %2102 = vmatpush1.xpose.msra.mxu0 0.0
    %2103 = vmatprep.subr.mxu0 0.0
    %2104 = vmatpush1.xpose.msra.mxu0 0.0
    %2105 = vmatprep.subr.mxu0 0.0
    %2106 = vmatpush1.xpose.msra.mxu0 0.0
    %2107 = vmatprep.subr.mxu0 0.0
    %2108 = vmatpush1.xpose.msra.mxu0 0.0
    %2109 = vmatprep.subr.mxu0 0.0
    %2110 = vmatpush1.xpose.msra.mxu0 0.0
    %2111 = vmatprep.subr.mxu0 0.0
    %2112 = vmatpush1.xpose.msra.mxu0 0.0
    %2113 = vmatprep.subr.mxu0 0.0
    %2114 = vmatpush1.xpose.msra.mxu0 0.0
    %2115 = vmatprep.subr.mxu0 0.0
    %2116 = vmatpush1.xpose.msra.mxu0 0.0
    %2117 = vmatprep.subr.mxu0 0.0
    %2118 = vmatpush1.xpose.msra.mxu0 0.0
    %2119 = vmatprep.subr.mxu0 0.0
    %2120 = vmatpush1.xpose.msra.mxu0 0.0
    %2121 = vmatprep.subr.mxu0 0.0
    %2122 = vmatpush1.xpose.msra.mxu0 0.0
    %2123 = vmatprep.subr.mxu0 0.0
    %2124 = vmatpush1.xpose.msra.mxu0 0.0
    %2125 = vmatprep.subr.mxu0 0.0
    %2126 = vmatpush1.xpose.msra.mxu0 0.0
    %2127 = vmatprep.subr.mxu0 0.0
    %2128 = vmatpush1.xpose.msra.mxu0 0.0
    %2129 = vmatprep.subr.mxu0 0.0
    %2130 = vmatpush1.xpose.msra.mxu0 0.0
    %2131 = vmatprep.subr.mxu0 0.0
    %2132 = vmatpush1.xpose.msra.mxu0 0.0
    %2133 = vmatprep.subr.mxu0 0.0
    %2134 = vmatpush1.xpose.msra.mxu0 0.0
    %2135 = vmatprep.subr.mxu0 0.0
    %2136 = vmatpush1.xpose.msra.mxu0 0.0
    %2137 = vmatprep.subr.mxu0 0.0
    %2138 = vmatpush1.xpose.msra.mxu0 0.0
    %2139 = vmatprep.subr.mxu0 0.0
    %2140 = vmatpush1.xpose.msra.mxu0 0.0
    %2141 = vmatprep.subr.mxu0 0.0
    %2142 = vmatpush1.xpose.msra.mxu0 0.0
    %2143 = vmatprep.subr.mxu0 0.0
    %2144 = vmatpush1.xpose.msra.mxu0 0.0
    %2145 = vmatprep.subr.mxu0 0.0
    %2146 = vmatpush1.xpose.msra.mxu0 0.0
    %2147 = vmatprep.subr.mxu0 0.0
    %2148 = vmatpush1.xpose.msra.mxu0 0.0
    %2149 = vmatprep.subr.mxu0 0.0
    %2150 = vmatpush1.xpose.msra.mxu0 0.0
    %2151 = vmatprep.subr.mxu0 0.0
    %2152 = vmatpush1.xpose.msra.mxu0 0.0
    %2153 = vmatprep.subr.mxu0 0.0
    %2154 = vmatpush1.xpose.msra.mxu0 0.0
    %2155 = vmatprep.subr.mxu0 0.0
    %2156 = vmatpush1.xpose.msra.mxu0 0.0
    %2157 = vmatprep.subr.mxu0 0.0
    %2158 = vmatpush1.xpose.msra.mxu0 0.0
    %2159 = vmatprep.mubr.f32.mxu0 0.0
    %2160 = vmatmul.mubr.f32.gmra.mrb[0].mxu0 %v2091
    %v2161 = vpop.f32.mrb[0].mxu0
    %v2162 = vadd.f32 0.0, %v2161
    %v2163 = vpop.f32.mrb[0].mxu0
    %2164 = vdwg.mxu0
    %2165 = vrot.lane.b32.xlu0 %v417, 64
    %v2166 = vpop.permute.xlu0 %2165
    %2167 = vrot.lane.b32.xlu0 %v315, 64
    %v2168 = vpop.permute.xlu0 %2167
    %v2169 = vsel %vm441, %v2166, 0
    %v2171 = vsel %vm441, %v2168, 0
    %2173 = vmatprep.subr.mxu0 0.0
    %2174 = vmatpush1.xpose.msra.mxu0 %v2171
    %2175 = vmatprep.subr.mxu0 0.0
    %2176 = vmatpush1.xpose.msra.mxu0 0.0
    %2177 = vmatprep.subr.mxu0 0.0
    %2178 = vmatpush1.xpose.msra.mxu0 0.0
    %2179 = vmatprep.subr.mxu0 0.0
    %2180 = vmatpush1.xpose.msra.mxu0 0.0
    %2181 = vmatprep.subr.mxu0 0.0
    %2182 = vmatpush1.xpose.msra.mxu0 0.0
    %2183 = vmatprep.subr.mxu0 0.0
    %2184 = vmatpush1.xpose.msra.mxu0 0.0
    %2185 = vmatprep.subr.mxu0 0.0
    %2186 = vmatpush1.xpose.msra.mxu0 0.0
    %2187 = vmatprep.subr.mxu0 0.0
    %2188 = vmatpush1.xpose.msra.mxu0 0.0
    %2189 = vmatprep.subr.mxu0 0.0
    %2190 = vmatpush1.xpose.msra.mxu0 0.0
    %2191 = vmatprep.subr.mxu0 0.0
    %2192 = vmatpush1.xpose.msra.mxu0 0.0
    %2193 = vmatprep.subr.mxu0 0.0
    %2194 = vmatpush1.xpose.msra.mxu0 0.0
    %2195 = vmatprep.subr.mxu0 0.0
    %2196 = vmatpush1.xpose.msra.mxu0 0.0
    %2197 = vmatprep.subr.mxu0 0.0
    %2198 = vmatpush1.xpose.msra.mxu0 0.0
    %2199 = vmatprep.subr.mxu0 0.0
    %2200 = vmatpush1.xpose.msra.mxu0 0.0
    %2201 = vmatprep.subr.mxu0 0.0
    %2202 = vmatpush1.xpose.msra.mxu0 0.0
    %2203 = vmatprep.subr.mxu0 0.0
    %2204 = vmatpush1.xpose.msra.mxu0 0.0
    %2205 = vmatprep.subr.mxu0 0.0
    %2206 = vmatpush1.xpose.msra.mxu0 0.0
    %2207 = vmatprep.subr.mxu0 0.0
    %2208 = vmatpush1.xpose.msra.mxu0 0.0
    %2209 = vmatprep.subr.mxu0 0.0
    %2210 = vmatpush1.xpose.msra.mxu0 0.0
    %2211 = vmatprep.subr.mxu0 0.0
    %2212 = vmatpush1.xpose.msra.mxu0 0.0
    %2213 = vmatprep.subr.mxu0 0.0
    %2214 = vmatpush1.xpose.msra.mxu0 0.0
    %2215 = vmatprep.subr.mxu0 0.0
    %2216 = vmatpush1.xpose.msra.mxu0 0.0
    %2217 = vmatprep.subr.mxu0 0.0
    %2218 = vmatpush1.xpose.msra.mxu0 0.0
    %2219 = vmatprep.subr.mxu0 0.0
    %2220 = vmatpush1.xpose.msra.mxu0 0.0
    %2221 = vmatprep.subr.mxu0 0.0
    %2222 = vmatpush1.xpose.msra.mxu0 0.0
    %2223 = vmatprep.subr.mxu0 0.0
    %2224 = vmatpush1.xpose.msra.mxu0 0.0
    %2225 = vmatprep.subr.mxu0 0.0
    %2226 = vmatpush1.xpose.msra.mxu0 0.0
    %2227 = vmatprep.subr.mxu0 0.0
    %2228 = vmatpush1.xpose.msra.mxu0 0.0
    %2229 = vmatprep.subr.mxu0 0.0
    %2230 = vmatpush1.xpose.msra.mxu0 0.0
    %2231 = vmatprep.subr.mxu0 0.0
    %2232 = vmatpush1.xpose.msra.mxu0 0.0
    %2233 = vmatprep.subr.mxu0 0.0
    %2234 = vmatpush1.xpose.msra.mxu0 0.0
    %2235 = vmatprep.subr.mxu0 0.0
    %2236 = vmatpush1.xpose.msra.mxu0 0.0
    %2237 = vmatprep.mubr.f32.mxu0 0.0
    %2238 = vmatmul.mubr.f32.gmra.mrb[0].mxu0 %v2169
    %v2239 = vpop.f32.mrb[0].mxu0
    %v2240 = vadd.f32 0.0, %v2239
    %v2241 = vpop.f32.mrb[0].mxu0
    %2242 = vdwg.mxu0
    %v2243 = vsel %vm594, %v2162, -inf
    %2244 = vmax.xlane.f32.xlu0 %v2243
    %v2245 = vpop.xlane.xlu0 %2244
    %v2246 = vsel %vm594, %v2240, -inf
    %2247 = vmax.xlane.f32.xlu0 %v2246
    %v2248 = vpop.xlane.xlu0 %2247
    %v2249 = vsub.f32 %v2162, %v2245
    %v2250 = vsub.f32 %v2240, %v2248
    %v2251 = vmul.f32 %v2249, 1.442695
    %v2252 = vpow.pop %v2251
    %v2253 = vmul.f32 %v2250, 1.442695
    %v2254 = vpow.pop %v2253
    %v2255 = vsel %vm594, %v2252, 0.0
    %2256 = vadd.xlane.f32.xlu0 %v2255
    %v2257 = vpop.xlane.xlu0 %2256
    %v2258 = vsel %vm594, %v2254, 0.0
    %2259 = vadd.xlane.f32.xlu0 %v2258
    %v2260 = vpop.xlane.xlu0 %2259
    %v2261 = vrcp.pop %v2257
    %v2262 = vrcp.pop %v2260
    %v2263 = vmul.f32 %v2252, %v2261
    %v2264 = vmul.f32 %v2254, %v2262
    %2265 = vrot.lane.b32.xlu0 %v408, 64
    %v2266 = vpop.permute.xlu0 %2265
    %v2269 = vsel %vm594, %v2263, 0
    %2271 = vmatprep.subr.mxu0 0.0
    %2272 = vmatpush1.msra.mxu0 %v2266
    %2273 = vmatprep.subr.mxu0 0.0
    %2274 = vmatpush1.msra.mxu0 0.0
    %2275 = vmatprep.subr.mxu0 0.0
    %2276 = vmatpush1.msra.mxu0 0.0
    %2277 = vmatprep.subr.mxu0 0.0
    %2278 = vmatpush1.msra.mxu0 0.0
    %2279 = vmatprep.subr.mxu0 0.0
    %2280 = vmatpush1.msra.mxu0 0.0
    %2281 = vmatprep.subr.mxu0 0.0
    %2282 = vmatpush1.msra.mxu0 0.0
    %2283 = vmatprep.subr.mxu0 0.0
    %2284 = vmatpush1.msra.mxu0 0.0
    %2285 = vmatprep.subr.mxu0 0.0
    %2286 = vmatpush1.msra.mxu0 0.0
    %2287 = vmatprep.subr.mxu0 0.0
    %2288 = vmatpush1.msra.mxu0 0.0
    %2289 = vmatprep.subr.mxu0 0.0
    %2290 = vmatpush1.msra.mxu0 0.0
    %2291 = vmatprep.subr.mxu0 0.0
    %2292 = vmatpush1.msra.mxu0 0.0
    %2293 = vmatprep.subr.mxu0 0.0
    %2294 = vmatpush1.msra.mxu0 0.0
    %2295 = vmatprep.subr.mxu0 0.0
    %2296 = vmatpush1.msra.mxu0 0.0
    %2297 = vmatprep.subr.mxu0 0.0
    %2298 = vmatpush1.msra.mxu0 0.0
    %2299 = vmatprep.subr.mxu0 0.0
    %2300 = vmatpush1.msra.mxu0 0.0
    %2301 = vmatprep.subr.mxu0 0.0
    %2302 = vmatpush1.msra.mxu0 0.0
    %2303 = vmatprep.subr.mxu0 0.0
    %2304 = vmatpush1.msra.mxu0 0.0
    %2305 = vmatprep.subr.mxu0 0.0
    %2306 = vmatpush1.msra.mxu0 0.0
    %2307 = vmatprep.subr.mxu0 0.0
    %2308 = vmatpush1.msra.mxu0 0.0
    %2309 = vmatprep.subr.mxu0 0.0
    %2310 = vmatpush1.msra.mxu0 0.0
    %2311 = vmatprep.subr.mxu0 0.0
    %2312 = vmatpush1.msra.mxu0 0.0
    %2313 = vmatprep.subr.mxu0 0.0
    %2314 = vmatpush1.msra.mxu0 0.0
    %2315 = vmatprep.subr.mxu0 0.0
    %2316 = vmatpush1.msra.mxu0 0.0
    %2317 = vmatprep.subr.mxu0 0.0
    %2318 = vmatpush1.msra.mxu0 0.0
    %2319 = vmatprep.subr.mxu0 0.0
    %2320 = vmatpush1.msra.mxu0 0.0
    %2321 = vmatprep.subr.mxu0 0.0
    %2322 = vmatpush1.msra.mxu0 0.0
    %2323 = vmatprep.subr.mxu0 0.0
    %2324 = vmatpush1.msra.mxu0 0.0
    %2325 = vmatprep.subr.mxu0 0.0
    %2326 = vmatpush1.msra.mxu0 0.0
    %2327 = vmatprep.subr.mxu0 0.0
    %2328 = vmatpush1.msra.mxu0 0.0
    %2329 = vmatprep.subr.mxu0 0.0
    %2330 = vmatpush1.msra.mxu0 0.0
    %2331 = vmatprep.subr.mxu0 0.0
    %2332 = vmatpush1.msra.mxu0 0.0
    %2333 = vmatprep.subr.mxu0 0.0
    %2334 = vmatpush1.msra.mxu0 0.0
    %2335 = vmatprep.mubr.f32.mxu0 0.0
    %2336 = vmatmul.mubr.f32.gmra.mrb[0].mxu0 %v2269
    %v2337 = vpop.f32.mrb[0].mxu0
    %v2338 = vadd.f32 0.0, %v2337
    %v2339 = vpop.f32.mrb[0].mxu0
    %2340 = vdwg.mxu0
    %2341 = vrot.lane.b32.xlu0 %v413, 64
    %v2342 = vpop.permute.xlu0 %2341
    %v2345 = vsel %vm594, %v2264, 0
    %2347 = vmatprep.subr.mxu0 0.0
    %2348 = vmatpush1.msra.mxu0 %v2342
    %2349 = vmatprep.subr.mxu0 0.0
    %2350 = vmatpush1.msra.mxu0 0.0
    %2351 = vmatprep.subr.mxu0 0.0
    %2352 = vmatpush1.msra.mxu0 0.0
    %2353 = vmatprep.subr.mxu0 0.0
    %2354 = vmatpush1.msra.mxu0 0.0
    %2355 = vmatprep.subr.mxu0 0.0
    %2356 = vmatpush1.msra.mxu0 0.0
    %2357 = vmatprep.subr.mxu0 0.0
    %2358 = vmatpush1.msra.mxu0 0.0
    %2359 = vmatprep.subr.mxu0 0.0
    %2360 = vmatpush1.msra.mxu0 0.0
    %2361 = vmatprep.subr.mxu0 0.0
    %2362 = vmatpush1.msra.mxu0 0.0
    %2363 = vmatprep.subr.mxu0 0.0
    %2364 = vmatpush1.msra.mxu0 0.0
    %2365 = vmatprep.subr.mxu0 0.0
    %2366 = vmatpush1.msra.mxu0 0.0
    %2367 = vmatprep.subr.mxu0 0.0
    %2368 = vmatpush1.msra.mxu0 0.0
    %2369 = vmatprep.subr.mxu0 0.0
    %2370 = vmatpush1.msra.mxu0 0.0
    %2371 = vmatprep.subr.mxu0 0.0
    %2372 = vmatpush1.msra.mxu0 0.0
    %2373 = vmatprep.subr.mxu0 0.0
    %2374 = vmatpush1.msra.mxu0 0.0
    %2375 = vmatprep.subr.mxu0 0.0
    %2376 = vmatpush1.msra.mxu0 0.0
    %2377 = vmatprep.subr.mxu0 0.0
    %2378 = vmatpush1.msra.mxu0 0.0
    %2379 = vmatprep.subr.mxu0 0.0
    %2380 = vmatpush1.msra.mxu0 0.0
    %2381 = vmatprep.subr.mxu0 0.0
    %2382 = vmatpush1.msra.mxu0 0.0
    %2383 = vmatprep.subr.mxu0 0.0
    %2384 = vmatpush1.msra.mxu0 0.0
    %2385 = vmatprep.subr.mxu0 0.0
    %2386 = vmatpush1.msra.mxu0 0.0
    %2387 = vmatprep.subr.mxu0 0.0
    %2388 = vmatpush1.msra.mxu0 0.0
    %2389 = vmatprep.subr.mxu0 0.0
    %2390 = vmatpush1.msra.mxu0 0.0
    %2391 = vmatprep.subr.mxu0 0.0
    %2392 = vmatpush1.msra.mxu0 0.0
    %2393 = vmatprep.subr.mxu0 0.0
    %2394 = vmatpush1.msra.mxu0 0.0
    %2395 = vmatprep.subr.mxu0 0.0
    %2396 = vmatpush1.msra.mxu0 0.0
    %2397 = vmatprep.subr.mxu0 0.0
    %2398 = vmatpush1.msra.mxu0 0.0
    %2399 = vmatprep.subr.mxu0 0.0
    %2400 = vmatpush1.msra.mxu0 0.0
    %2401 = vmatprep.subr.mxu0 0.0
    %2402 = vmatpush1.msra.mxu0 0.0
    %2403 = vmatprep.subr.mxu0 0.0
    %2404 = vmatpush1.msra.mxu0 0.0
    %2405 = vmatprep.subr.mxu0 0.0
    %2406 = vmatpush1.msra.mxu0 0.0
    %2407 = vmatprep.subr.mxu0 0.0
    %2408 = vmatpush1.msra.mxu0 0.0
    %2409 = vmatprep.subr.mxu0 0.0
    %2410 = vmatpush1.msra.mxu0 0.0
    %2411 = vmatprep.mubr.f32.mxu0 0.0
    %2412 = vmatmul.mubr.f32.gmra.mrb[0].mxu0 %v2345
    %v2413 = vpop.f32.mrb[0].mxu0
    %v2414 = vadd.f32 0.0, %v2413
    %v2415 = vpop.f32.mrb[0].mxu0
    %2416 = vdwg.mxu0
    %v2418 = vsel %vm441, %v2338, 0
    %v2421 = vsel %vm441, %v2414, 0
    %2423 = vmatprep.subr.mxu0 0.0
    %2424 = vmatpush1.msra.mxu0 %v426
    %2425 = vmatprep.subr.mxu0 0.0
    %2426 = vmatpush1.msra.mxu0 %v427
    %2427 = vmatprep.subr.mxu0 0.0
    %2428 = vmatpush1.msra.mxu0 0.0
    %2429 = vmatprep.subr.mxu0 0.0
    %2430 = vmatpush1.msra.mxu0 0.0
    %2431 = vmatprep.subr.mxu0 0.0
    %2432 = vmatpush1.msra.mxu0 0.0
    %2433 = vmatprep.subr.mxu0 0.0
    %2434 = vmatpush1.msra.mxu0 0.0
    %2435 = vmatprep.subr.mxu0 0.0
    %2436 = vmatpush1.msra.mxu0 0.0
    %2437 = vmatprep.subr.mxu0 0.0
    %2438 = vmatpush1.msra.mxu0 0.0
    %2439 = vmatprep.subr.mxu0 0.0
    %2440 = vmatpush1.msra.mxu0 0.0
    %2441 = vmatprep.subr.mxu0 0.0
    %2442 = vmatpush1.msra.mxu0 0.0
    %2443 = vmatprep.subr.mxu0 0.0
    %2444 = vmatpush1.msra.mxu0 0.0
    %2445 = vmatprep.subr.mxu0 0.0
    %2446 = vmatpush1.msra.mxu0 0.0
    %2447 = vmatprep.subr.mxu0 0.0
    %2448 = vmatpush1.msra.mxu0 0.0
    %2449 = vmatprep.subr.mxu0 0.0
    %2450 = vmatpush1.msra.mxu0 0.0
    %2451 = vmatprep.subr.mxu0 0.0
    %2452 = vmatpush1.msra.mxu0 0.0
    %2453 = vmatprep.subr.mxu0 0.0
    %2454 = vmatpush1.msra.mxu0 0.0
    %2455 = vmatprep.subr.mxu0 0.0
    %2456 = vmatpush1.msra.mxu0 0.0
    %2457 = vmatprep.subr.mxu0 0.0
    %2458 = vmatpush1.msra.mxu0 0.0
    %2459 = vmatprep.subr.mxu0 0.0
    %2460 = vmatpush1.msra.mxu0 0.0
    %2461 = vmatprep.subr.mxu0 0.0
    %2462 = vmatpush1.msra.mxu0 0.0
    %2463 = vmatprep.subr.mxu0 0.0
    %2464 = vmatpush1.msra.mxu0 0.0
    %2465 = vmatprep.subr.mxu0 0.0
    %2466 = vmatpush1.msra.mxu0 0.0
    %2467 = vmatprep.subr.mxu0 0.0
    %2468 = vmatpush1.msra.mxu0 0.0
    %2469 = vmatprep.subr.mxu0 0.0
    %2470 = vmatpush1.msra.mxu0 0.0
    %2471 = vmatprep.subr.mxu0 0.0
    %2472 = vmatpush1.msra.mxu0 0.0
    %2473 = vmatprep.subr.mxu0 0.0
    %2474 = vmatpush1.msra.mxu0 0.0
    %2475 = vmatprep.subr.mxu0 0.0
    %2476 = vmatpush1.msra.mxu0 0.0
    %2477 = vmatprep.subr.mxu0 0.0
    %2478 = vmatpush1.msra.mxu0 0.0
    %2479 = vmatprep.subr.mxu0 0.0
    %2480 = vmatpush1.msra.mxu0 0.0
    %2481 = vmatprep.subr.mxu0 0.0
    %2482 = vmatpush1.msra.mxu0 0.0
    %2483 = vmatprep.subr.mxu0 0.0
    %2484 = vmatpush1.msra.mxu0 0.0
    %2485 = vmatprep.subr.mxu0 0.0
    %2486 = vmatpush1.msra.mxu0 0.0
    %2487 = vmatprep.mubr.f32.mxu0 0.0
    %2488 = vmatmul.mubr.f32.gmra.mrb[0].mxu0 %v2418
    %v2489 = vpop.f32.mrb[0].mxu0
    %v2490 = vadd.f32 0.0, %v2489
    %v2491 = vpop.f32.mrb[0].mxu0
    %2492 = vmatprep.mubr.f32.mxu0 0.0
    %2493 = vmatmul.mubr.f32.gmra.mrb[0].mxu0 %v2421
    %v2494 = vpop.f32.mrb[0].mxu0
    %v2495 = vadd.f32 0.0, %v2494
    %v2496 = vpop.f32.mrb[0].mxu0
    %2497 = vdwg.mxu0
    %v2498 = vadd.f32 %v2085, %v2490
    %v2499 = vadd.f32 %v2086, %v2495
    %2500 = vrot.lane.b32.xlu0 %v416, 48
    %v2501 = vpop.permute.xlu0 %2500
    %2502 = vrot.lane.b32.xlu0 %v310, 48
    %v2503 = vpop.permute.xlu0 %2502
    %v2504 = vsel %vm441, %v2501, 0
    %v2506 = vsel %vm441, %v2503, 0
    %2508 = vmatprep.subr.mxu0 0.0
    %2509 = vmatpush1.xpose.msra.mxu0 %v2506
    %2510 = vmatprep.subr.mxu0 0.0
    %2511 = vmatpush1.xpose.msra.mxu0 0.0
    %2512 = vmatprep.subr.mxu0 0.0
    %2513 = vmatpush1.xpose.msra.mxu0 0.0
    %2514 = vmatprep.subr.mxu0 0.0
    %2515 = vmatpush1.xpose.msra.mxu0 0.0
    %2516 = vmatprep.subr.mxu0 0.0
    %2517 = vmatpush1.xpose.msra.mxu0 0.0
    %2518 = vmatprep.subr.mxu0 0.0
    %2519 = vmatpush1.xpose.msra.mxu0 0.0
    %2520 = vmatprep.subr.mxu0 0.0
    %2521 = vmatpush1.xpose.msra.mxu0 0.0
    %2522 = vmatprep.subr.mxu0 0.0
    %2523 = vmatpush1.xpose.msra.mxu0 0.0
    %2524 = vmatprep.subr.mxu0 0.0
    %2525 = vmatpush1.xpose.msra.mxu0 0.0
    %2526 = vmatprep.subr.mxu0 0.0
    %2527 = vmatpush1.xpose.msra.mxu0 0.0
    %2528 = vmatprep.subr.mxu0 0.0
    %2529 = vmatpush1.xpose.msra.mxu0 0.0
    %2530 = vmatprep.subr.mxu0 0.0
    %2531 = vmatpush1.xpose.msra.mxu0 0.0
    %2532 = vmatprep.subr.mxu0 0.0
    %2533 = vmatpush1.xpose.msra.mxu0 0.0
    %2534 = vmatprep.subr.mxu0 0.0
    %2535 = vmatpush1.xpose.msra.mxu0 0.0
    %2536 = vmatprep.subr.mxu0 0.0
    %2537 = vmatpush1.xpose.msra.mxu0 0.0
    %2538 = vmatprep.subr.mxu0 0.0
    %2539 = vmatpush1.xpose.msra.mxu0 0.0
    %2540 = vmatprep.subr.mxu0 0.0
    %2541 = vmatpush1.xpose.msra.mxu0 0.0
    %2542 = vmatprep.subr.mxu0 0.0
    %2543 = vmatpush1.xpose.msra.mxu0 0.0
    %2544 = vmatprep.subr.mxu0 0.0
    %2545 = vmatpush1.xpose.msra.mxu0 0.0
    %2546 = vmatprep.subr.mxu0 0.0
    %2547 = vmatpush1.xpose.msra.mxu0 0.0
    %2548 = vmatprep.subr.mxu0 0.0
    %2549 = vmatpush1.xpose.msra.mxu0 0.0
    %2550 = vmatprep.subr.mxu0 0.0
    %2551 = vmatpush1.xpose.msra.mxu0 0.0
    %2552 = vmatprep.subr.mxu0 0.0
    %2553 = vmatpush1.xpose.msra.mxu0 0.0
    %2554 = vmatprep.subr.mxu0 0.0
    %2555 = vmatpush1.xpose.msra.mxu0 0.0
    %2556 = vmatprep.subr.mxu0 0.0
    %2557 = vmatpush1.xpose.msra.mxu0 0.0
    %2558 = vmatprep.subr.mxu0 0.0
    %2559 = vmatpush1.xpose.msra.mxu0 0.0
    %2560 = vmatprep.subr.mxu0 0.0
    %2561 = vmatpush1.xpose.msra.mxu0 0.0
    %2562 = vmatprep.subr.mxu0 0.0
    %2563 = vmatpush1.xpose.msra.mxu0 0.0
    %2564 = vmatprep.subr.mxu0 0.0
    %2565 = vmatpush1.xpose.msra.mxu0 0.0
    %2566 = vmatprep.subr.mxu0 0.0
    %2567 = vmatpush1.xpose.msra.mxu0 0.0
    %2568 = vmatprep.subr.mxu0 0.0
    %2569 = vmatpush1.xpose.msra.mxu0 0.0
    %2570 = vmatprep.subr.mxu0 0.0
    %2571 = vmatpush1.xpose.msra.mxu0 0.0
    %2572 = vmatprep.mubr.f32.mxu0 0.0
    %2573 = vmatmul.mubr.f32.gmra.mrb[0].mxu0 %v2504
    %v2574 = vpop.f32.mrb[0].mxu0
    %v2575 = vadd.f32 0.0, %v2574
    %v2576 = vpop.f32.mrb[0].mxu0
    %2577 = vdwg.mxu0
    %2578 = vrot.lane.b32.xlu0 %v417, 48
    %v2579 = vpop.permute.xlu0 %2578
    %2580 = vrot.lane.b32.xlu0 %v315, 48
    %v2581 = vpop.permute.xlu0 %2580
    %v2582 = vsel %vm441, %v2579, 0
    %v2584 = vsel %vm441, %v2581, 0
    %2586 = vmatprep.subr.mxu0 0.0
    %2587 = vmatpush1.xpose.msra.mxu0 %v2584
    %2588 = vmatprep.subr.mxu0 0.0
    %2589 = vmatpush1.xpose.msra.mxu0 0.0
    %2590 = vmatprep.subr.mxu0 0.0
    %2591 = vmatpush1.xpose.msra.mxu0 0.0
    %2592 = vmatprep.subr.mxu0 0.0
    %2593 = vmatpush1.xpose.msra.mxu0 0.0
    %2594 = vmatprep.subr.mxu0 0.0
    %2595 = vmatpush1.xpose.msra.mxu0 0.0
    %2596 = vmatprep.subr.mxu0 0.0
    %2597 = vmatpush1.xpose.msra.mxu0 0.0
    %2598 = vmatprep.subr.mxu0 0.0
    %2599 = vmatpush1.xpose.msra.mxu0 0.0
    %2600 = vmatprep.subr.mxu0 0.0
    %2601 = vmatpush1.xpose.msra.mxu0 0.0
    %2602 = vmatprep.subr.mxu0 0.0
    %2603 = vmatpush1.xpose.msra.mxu0 0.0
    %2604 = vmatprep.subr.mxu0 0.0
    %2605 = vmatpush1.xpose.msra.mxu0 0.0
    %2606 = vmatprep.subr.mxu0 0.0
    %2607 = vmatpush1.xpose.msra.mxu0 0.0
    %2608 = vmatprep.subr.mxu0 0.0
    %2609 = vmatpush1.xpose.msra.mxu0 0.0
    %2610 = vmatprep.subr.mxu0 0.0
    %2611 = vmatpush1.xpose.msra.mxu0 0.0
    %2612 = vmatprep.subr.mxu0 0.0
    %2613 = vmatpush1.xpose.msra.mxu0 0.0
    %2614 = vmatprep.subr.mxu0 0.0
    %2615 = vmatpush1.xpose.msra.mxu0 0.0
    %2616 = vmatprep.subr.mxu0 0.0
    %2617 = vmatpush1.xpose.msra.mxu0 0.0
    %2618 = vmatprep.subr.mxu0 0.0
    %2619 = vmatpush1.xpose.msra.mxu0 0.0
    %2620 = vmatprep.subr.mxu0 0.0
    %2621 = vmatpush1.xpose.msra.mxu0 0.0
    %2622 = vmatprep.subr.mxu0 0.0
    %2623 = vmatpush1.xpose.msra.mxu0 0.0
    %2624 = vmatprep.subr.mxu0 0.0
    %2625 = vmatpush1.xpose.msra.mxu0 0.0
    %2626 = vmatprep.subr.mxu0 0.0
    %2627 = vmatpush1.xpose.msra.mxu0 0.0
    %2628 = vmatprep.subr.mxu0 0.0
    %2629 = vmatpush1.xpose.msra.mxu0 0.0
    %2630 = vmatprep.subr.mxu0 0.0
    %2631 = vmatpush1.xpose.msra.mxu0 0.0
    %2632 = vmatprep.subr.mxu0 0.0
    %2633 = vmatpush1.xpose.msra.mxu0 0.0
    %2634 = vmatprep.subr.mxu0 0.0
    %2635 = vmatpush1.xpose.msra.mxu0 0.0
    %2636 = vmatprep.subr.mxu0 0.0
    %2637 = vmatpush1.xpose.msra.mxu0 0.0
    %2638 = vmatprep.subr.mxu0 0.0
    %2639 = vmatpush1.xpose.msra.mxu0 0.0
    %2640 = vmatprep.subr.mxu0 0.0
    %2641 = vmatpush1.xpose.msra.mxu0 0.0
    %2642 = vmatprep.subr.mxu0 0.0
    %2643 = vmatpush1.xpose.msra.mxu0 0.0
    %2644 = vmatprep.subr.mxu0 0.0
    %2645 = vmatpush1.xpose.msra.mxu0 0.0
    %2646 = vmatprep.subr.mxu0 0.0
    %2647 = vmatpush1.xpose.msra.mxu0 0.0
    %2648 = vmatprep.subr.mxu0 0.0
    %2649 = vmatpush1.xpose.msra.mxu0 0.0
    %2650 = vmatprep.mubr.f32.mxu0 0.0
    %2651 = vmatmul.mubr.f32.gmra.mrb[0].mxu0 %v2582
    %v2652 = vpop.f32.mrb[0].mxu0
    %v2653 = vadd.f32 0.0, %v2652
    %v2654 = vpop.f32.mrb[0].mxu0
    %2655 = vdwg.mxu0
    %v2656 = vsel %vm594, %v2575, -inf
    %2657 = vmax.xlane.f32.xlu0 %v2656
    %v2658 = vpop.xlane.xlu0 %2657
    %v2659 = vsel %vm594, %v2653, -inf
    %2660 = vmax.xlane.f32.xlu0 %v2659
    %v2661 = vpop.xlane.xlu0 %2660
    %v2662 = vsub.f32 %v2575, %v2658
    %v2663 = vsub.f32 %v2653, %v2661
    %v2664 = vmul.f32 %v2662, 1.442695
    %v2665 = vpow.pop %v2664
    %v2666 = vmul.f32 %v2663, 1.442695
    %v2667 = vpow.pop %v2666
    %v2668 = vsel %vm594, %v2665, 0.0
    %2669 = vadd.xlane.f32.xlu0 %v2668
    %v2670 = vpop.xlane.xlu0 %2669
    %v2671 = vsel %vm594, %v2667, 0.0
    %2672 = vadd.xlane.f32.xlu0 %v2671
    %v2673 = vpop.xlane.xlu0 %2672
    %v2674 = vrcp.pop %v2670
    %v2675 = vrcp.pop %v2673
    %v2676 = vmul.f32 %v2665, %v2674
    %v2677 = vmul.f32 %v2667, %v2675
    %2678 = vrot.lane.b32.xlu0 %v408, 48
    %v2679 = vpop.permute.xlu0 %2678
    %v2682 = vsel %vm594, %v2676, 0
    %2684 = vmatprep.subr.mxu0 0.0
    %2685 = vmatpush1.msra.mxu0 %v2679
    %2686 = vmatprep.subr.mxu0 0.0
    %2687 = vmatpush1.msra.mxu0 0.0
    %2688 = vmatprep.subr.mxu0 0.0
    %2689 = vmatpush1.msra.mxu0 0.0
    %2690 = vmatprep.subr.mxu0 0.0
    %2691 = vmatpush1.msra.mxu0 0.0
    %2692 = vmatprep.subr.mxu0 0.0
    %2693 = vmatpush1.msra.mxu0 0.0
    %2694 = vmatprep.subr.mxu0 0.0
    %2695 = vmatpush1.msra.mxu0 0.0
    %2696 = vmatprep.subr.mxu0 0.0
    %2697 = vmatpush1.msra.mxu0 0.0
    %2698 = vmatprep.subr.mxu0 0.0
    %2699 = vmatpush1.msra.mxu0 0.0
    %2700 = vmatprep.subr.mxu0 0.0
    %2701 = vmatpush1.msra.mxu0 0.0
    %2702 = vmatprep.subr.mxu0 0.0
    %2703 = vmatpush1.msra.mxu0 0.0
    %2704 = vmatprep.subr.mxu0 0.0
    %2705 = vmatpush1.msra.mxu0 0.0
    %2706 = vmatprep.subr.mxu0 0.0
    %2707 = vmatpush1.msra.mxu0 0.0
    %2708 = vmatprep.subr.mxu0 0.0
    %2709 = vmatpush1.msra.mxu0 0.0
    %2710 = vmatprep.subr.mxu0 0.0
    %2711 = vmatpush1.msra.mxu0 0.0
    %2712 = vmatprep.subr.mxu0 0.0
    %2713 = vmatpush1.msra.mxu0 0.0
    %2714 = vmatprep.subr.mxu0 0.0
    %2715 = vmatpush1.msra.mxu0 0.0
    %2716 = vmatprep.subr.mxu0 0.0
    %2717 = vmatpush1.msra.mxu0 0.0
    %2718 = vmatprep.subr.mxu0 0.0
    %2719 = vmatpush1.msra.mxu0 0.0
    %2720 = vmatprep.subr.mxu0 0.0
    %2721 = vmatpush1.msra.mxu0 0.0
    %2722 = vmatprep.subr.mxu0 0.0
    %2723 = vmatpush1.msra.mxu0 0.0
    %2724 = vmatprep.subr.mxu0 0.0
    %2725 = vmatpush1.msra.mxu0 0.0
    %2726 = vmatprep.subr.mxu0 0.0
    %2727 = vmatpush1.msra.mxu0 0.0
    %2728 = vmatprep.subr.mxu0 0.0
    %2729 = vmatpush1.msra.mxu0 0.0
    %2730 = vmatprep.subr.mxu0 0.0
    %2731 = vmatpush1.msra.mxu0 0.0
    %2732 = vmatprep.subr.mxu0 0.0
    %2733 = vmatpush1.msra.mxu0 0.0
    %2734 = vmatprep.subr.mxu0 0.0
    %2735 = vmatpush1.msra.mxu0 0.0
    %2736 = vmatprep.subr.mxu0 0.0
    %2737 = vmatpush1.msra.mxu0 0.0
    %2738 = vmatprep.subr.mxu0 0.0
    %2739 = vmatpush1.msra.mxu0 0.0
    %2740 = vmatprep.subr.mxu0 0.0
    %2741 = vmatpush1.msra.mxu0 0.0
    %2742 = vmatprep.subr.mxu0 0.0
    %2743 = vmatpush1.msra.mxu0 0.0
    %2744 = vmatprep.subr.mxu0 0.0
    %2745 = vmatpush1.msra.mxu0 0.0
    %2746 = vmatprep.subr.mxu0 0.0
    %2747 = vmatpush1.msra.mxu0 0.0
    %2748 = vmatprep.mubr.f32.mxu0 0.0
    %2749 = vmatmul.mubr.f32.gmra.mrb[0].mxu0 %v2682
    %v2750 = vpop.f32.mrb[0].mxu0
    %v2751 = vadd.f32 0.0, %v2750
    %v2752 = vpop.f32.mrb[0].mxu0
    %2753 = vdwg.mxu0
    %2754 = vrot.lane.b32.xlu0 %v413, 48
    %v2755 = vpop.permute.xlu0 %2754
    %v2758 = vsel %vm594, %v2677, 0
    %2760 = vmatprep.subr.mxu0 0.0
    %2761 = vmatpush1.msra.mxu0 %v2755
    %2762 = vmatprep.subr.mxu0 0.0
    %2763 = vmatpush1.msra.mxu0 0.0
    %2764 = vmatprep.subr.mxu0 0.0
    %2765 = vmatpush1.msra.mxu0 0.0
    %2766 = vmatprep.subr.mxu0 0.0
    %2767 = vmatpush1.msra.mxu0 0.0
    %2768 = vmatprep.subr.mxu0 0.0
    %2769 = vmatpush1.msra.mxu0 0.0
    %2770 = vmatprep.subr.mxu0 0.0
    %2771 = vmatpush1.msra.mxu0 0.0
    %2772 = vmatprep.subr.mxu0 0.0
    %2773 = vmatpush1.msra.mxu0 0.0
    %2774 = vmatprep.subr.mxu0 0.0
    %2775 = vmatpush1.msra.mxu0 0.0
    %2776 = vmatprep.subr.mxu0 0.0
    %2777 = vmatpush1.msra.mxu0 0.0
    %2778 = vmatprep.subr.mxu0 0.0
    %2779 = vmatpush1.msra.mxu0 0.0
    %2780 = vmatprep.subr.mxu0 0.0
    %2781 = vmatpush1.msra.mxu0 0.0
    %2782 = vmatprep.subr.mxu0 0.0
    %2783 = vmatpush1.msra.mxu0 0.0
    %2784 = vmatprep.subr.mxu0 0.0
    %2785 = vmatpush1.msra.mxu0 0.0
    %2786 = vmatprep.subr.mxu0 0.0
    %2787 = vmatpush1.msra.mxu0 0.0
    %2788 = vmatprep.subr.mxu0 0.0
    %2789 = vmatpush1.msra.mxu0 0.0
    %2790 = vmatprep.subr.mxu0 0.0
    %2791 = vmatpush1.msra.mxu0 0.0
    %2792 = vmatprep.subr.mxu0 0.0
    %2793 = vmatpush1.msra.mxu0 0.0
    %2794 = vmatprep.subr.mxu0 0.0
    %2795 = vmatpush1.msra.mxu0 0.0
    %2796 = vmatprep.subr.mxu0 0.0
    %2797 = vmatpush1.msra.mxu0 0.0
    %2798 = vmatprep.subr.mxu0 0.0
    %2799 = vmatpush1.msra.mxu0 0.0
    %2800 = vmatprep.subr.mxu0 0.0
    %2801 = vmatpush1.msra.mxu0 0.0
    %2802 = vmatprep.subr.mxu0 0.0
    %2803 = vmatpush1.msra.mxu0 0.0
    %2804 = vmatprep.subr.mxu0 0.0
    %2805 = vmatpush1.msra.mxu0 0.0
    %2806 = vmatprep.subr.mxu0 0.0
    %2807 = vmatpush1.msra.mxu0 0.0
    %2808 = vmatprep.subr.mxu0 0.0
    %2809 = vmatpush1.msra.mxu0 0.0
    %2810 = vmatprep.subr.mxu0 0.0
    %2811 = vmatpush1.msra.mxu0 0.0
    %2812 = vmatprep.subr.mxu0 0.0
    %2813 = vmatpush1.msra.mxu0 0.0
    %2814 = vmatprep.subr.mxu0 0.0
    %2815 = vmatpush1.msra.mxu0 0.0
    %2816 = vmatprep.subr.mxu0 0.0
    %2817 = vmatpush1.msra.mxu0 0.0
    %2818 = vmatprep.subr.mxu0 0.0
    %2819 = vmatpush1.msra.mxu0 0.0
    %2820 = vmatprep.subr.mxu0 0.0
    %2821 = vmatpush1.msra.mxu0 0.0
    %2822 = vmatprep.subr.mxu0 0.0
    %2823 = vmatpush1.msra.mxu0 0.0
    %2824 = vmatprep.mubr.f32.mxu0 0.0
    %2825 = vmatmul.mubr.f32.gmra.mrb[0].mxu0 %v2758
    %v2826 = vpop.f32.mrb[0].mxu0
    %v2827 = vadd.f32 0.0, %v2826
    %v2828 = vpop.f32.mrb[0].mxu0
    %2829 = vdwg.mxu0
    %v2831 = vsel %vm441, %v2751, 0
    %v2834 = vsel %vm441, %v2827, 0
    %2836 = vmatprep.subr.mxu0 0.0
    %2837 = vmatpush1.msra.mxu0 %v428
    %2838 = vmatprep.subr.mxu0 0.0
    %2839 = vmatpush1.msra.mxu0 %v429
    %2840 = vmatprep.subr.mxu0 0.0
    %2841 = vmatpush1.msra.mxu0 0.0
    %2842 = vmatprep.subr.mxu0 0.0
    %2843 = vmatpush1.msra.mxu0 0.0
    %2844 = vmatprep.subr.mxu0 0.0
    %2845 = vmatpush1.msra.mxu0 0.0
    %2846 = vmatprep.subr.mxu0 0.0
    %2847 = vmatpush1.msra.mxu0 0.0
    %2848 = vmatprep.subr.mxu0 0.0
    %2849 = vmatpush1.msra.mxu0 0.0
    %2850 = vmatprep.subr.mxu0 0.0
    %2851 = vmatpush1.msra.mxu0 0.0
    %2852 = vmatprep.subr.mxu0 0.0
    %2853 = vmatpush1.msra.mxu0 0.0
    %2854 = vmatprep.subr.mxu0 0.0
    %2855 = vmatpush1.msra.mxu0 0.0
    %2856 = vmatprep.subr.mxu0 0.0
    %2857 = vmatpush1.msra.mxu0 0.0
    %2858 = vmatprep.subr.mxu0 0.0
    %2859 = vmatpush1.msra.mxu0 0.0
    %2860 = vmatprep.subr.mxu0 0.0
    %2861 = vmatpush1.msra.mxu0 0.0
    %2862 = vmatprep.subr.mxu0 0.0
    %2863 = vmatpush1.msra.mxu0 0.0
    %2864 = vmatprep.subr.mxu0 0.0
    %2865 = vmatpush1.msra.mxu0 0.0
    %2866 = vmatprep.subr.mxu0 0.0
    %2867 = vmatpush1.msra.mxu0 0.0
    %2868 = vmatprep.subr.mxu0 0.0
    %2869 = vmatpush1.msra.mxu0 0.0
    %2870 = vmatprep.subr.mxu0 0.0
    %2871 = vmatpush1.msra.mxu0 0.0
    %2872 = vmatprep.subr.mxu0 0.0
    %2873 = vmatpush1.msra.mxu0 0.0
    %2874 = vmatprep.subr.mxu0 0.0
    %2875 = vmatpush1.msra.mxu0 0.0
    %2876 = vmatprep.subr.mxu0 0.0
    %2877 = vmatpush1.msra.mxu0 0.0
    %2878 = vmatprep.subr.mxu0 0.0
    %2879 = vmatpush1.msra.mxu0 0.0
    %2880 = vmatprep.subr.mxu0 0.0
    %2881 = vmatpush1.msra.mxu0 0.0
    %2882 = vmatprep.subr.mxu0 0.0
    %2883 = vmatpush1.msra.mxu0 0.0
    %2884 = vmatprep.subr.mxu0 0.0
    %2885 = vmatpush1.msra.mxu0 0.0
    %2886 = vmatprep.subr.mxu0 0.0
    %2887 = vmatpush1.msra.mxu0 0.0
    %2888 = vmatprep.subr.mxu0 0.0
    %2889 = vmatpush1.msra.mxu0 0.0
    %2890 = vmatprep.subr.mxu0 0.0
    %2891 = vmatpush1.msra.mxu0 0.0
    %2892 = vmatprep.subr.mxu0 0.0
    %2893 = vmatpush1.msra.mxu0 0.0
    %2894 = vmatprep.subr.mxu0 0.0
    %2895 = vmatpush1.msra.mxu0 0.0
    %2896 = vmatprep.subr.mxu0 0.0
    %2897 = vmatpush1.msra.mxu0 0.0
    %2898 = vmatprep.subr.mxu0 0.0
    %2899 = vmatpush1.msra.mxu0 0.0
    %2900 = vmatprep.mubr.f32.mxu0 0.0
    %2901 = vmatmul.mubr.f32.gmra.mrb[0].mxu0 %v2831
    %v2902 = vpop.f32.mrb[0].mxu0
    %v2903 = vadd.f32 0.0, %v2902
    %v2904 = vpop.f32.mrb[0].mxu0
    %2905 = vmatprep.mubr.f32.mxu0 0.0
    %2906 = vmatmul.mubr.f32.gmra.mrb[0].mxu0 %v2834
    %v2907 = vpop.f32.mrb[0].mxu0
    %v2908 = vadd.f32 0.0, %v2907
    %v2909 = vpop.f32.mrb[0].mxu0
    %2910 = vdwg.mxu0
    %v2911 = vadd.f32 %v2498, %v2903
    %v2912 = vadd.f32 %v2499, %v2908
    %2913 = vrot.lane.b32.xlu0 %v416, 32
    %v2914 = vpop.permute.xlu0 %2913
    %2915 = vrot.lane.b32.xlu0 %v310, 32
    %v2916 = vpop.permute.xlu0 %2915
    %v2917 = vsel %vm441, %v2914, 0
    %v2919 = vsel %vm441, %v2916, 0
    %2921 = vmatprep.subr.mxu0 0.0
    %2922 = vmatpush1.xpose.msra.mxu0 %v2919
    %2923 = vmatprep.subr.mxu0 0.0
    %2924 = vmatpush1.xpose.msra.mxu0 0.0
    %2925 = vmatprep.subr.mxu0 0.0
    %2926 = vmatpush1.xpose.msra.mxu0 0.0
    %2927 = vmatprep.subr.mxu0 0.0
    %2928 = vmatpush1.xpose.msra.mxu0 0.0
    %2929 = vmatprep.subr.mxu0 0.0
    %2930 = vmatpush1.xpose.msra.mxu0 0.0
    %2931 = vmatprep.subr.mxu0 0.0
    %2932 = vmatpush1.xpose.msra.mxu0 0.0
    %2933 = vmatprep.subr.mxu0 0.0
    %2934 = vmatpush1.xpose.msra.mxu0 0.0
    %2935 = vmatprep.subr.mxu0 0.0
    %2936 = vmatpush1.xpose.msra.mxu0 0.0
    %2937 = vmatprep.subr.mxu0 0.0
    %2938 = vmatpush1.xpose.msra.mxu0 0.0
    %2939 = vmatprep.subr.mxu0 0.0
    %2940 = vmatpush1.xpose.msra.mxu0 0.0
    %2941 = vmatprep.subr.mxu0 0.0
    %2942 = vmatpush1.xpose.msra.mxu0 0.0
    %2943 = vmatprep.subr.mxu0 0.0
    %2944 = vmatpush1.xpose.msra.mxu0 0.0
    %2945 = vmatprep.subr.mxu0 0.0
    %2946 = vmatpush1.xpose.msra.mxu0 0.0
    %2947 = vmatprep.subr.mxu0 0.0
    %2948 = vmatpush1.xpose.msra.mxu0 0.0
    %2949 = vmatprep.subr.mxu0 0.0
    %2950 = vmatpush1.xpose.msra.mxu0 0.0
    %2951 = vmatprep.subr.mxu0 0.0
    %2952 = vmatpush1.xpose.msra.mxu0 0.0
    %2953 = vmatprep.subr.mxu0 0.0
    %2954 = vmatpush1.xpose.msra.mxu0 0.0
    %2955 = vmatprep.subr.mxu0 0.0
    %2956 = vmatpush1.xpose.msra.mxu0 0.0
    %2957 = vmatprep.subr.mxu0 0.0
    %2958 = vmatpush1.xpose.msra.mxu0 0.0
    %2959 = vmatprep.subr.mxu0 0.0
    %2960 = vmatpush1.xpose.msra.mxu0 0.0
    %2961 = vmatprep.subr.mxu0 0.0
    %2962 = vmatpush1.xpose.msra.mxu0 0.0
    %2963 = vmatprep.subr.mxu0 0.0
    %2964 = vmatpush1.xpose.msra.mxu0 0.0
    %2965 = vmatprep.subr.mxu0 0.0
    %2966 = vmatpush1.xpose.msra.mxu0 0.0
    %2967 = vmatprep.subr.mxu0 0.0
    %2968 = vmatpush1.xpose.msra.mxu0 0.0
    %2969 = vmatprep.subr.mxu0 0.0
    %2970 = vmatpush1.xpose.msra.mxu0 0.0
    %2971 = vmatprep.subr.mxu0 0.0
    %2972 = vmatpush1.xpose.msra.mxu0 0.0
    %2973 = vmatprep.subr.mxu0 0.0
    %2974 = vmatpush1.xpose.msra.mxu0 0.0
    %2975 = vmatprep.subr.mxu0 0.0
    %2976 = vmatpush1.xpose.msra.mxu0 0.0
    %2977 = vmatprep.subr.mxu0 0.0
    %2978 = vmatpush1.xpose.msra.mxu0 0.0
    %2979 = vmatprep.subr.mxu0 0.0
    %2980 = vmatpush1.xpose.msra.mxu0 0.0
    %2981 = vmatprep.subr.mxu0 0.0
    %2982 = vmatpush1.xpose.msra.mxu0 0.0
    %2983 = vmatprep.subr.mxu0 0.0
    %2984 = vmatpush1.xpose.msra.mxu0 0.0
    %2985 = vmatprep.mubr.f32.mxu0 0.0
    %2986 = vmatmul.mubr.f32.gmra.mrb[0].mxu0 %v2917
    %v2987 = vpop.f32.mrb[0].mxu0
    %v2988 = vadd.f32 0.0, %v2987
    %v2989 = vpop.f32.mrb[0].mxu0
    %2990 = vdwg.mxu0
    %2991 = vrot.lane.b32.xlu0 %v417, 32
    %v2992 = vpop.permute.xlu0 %2991
    %2993 = vrot.lane.b32.xlu0 %v315, 32
    %v2994 = vpop.permute.xlu0 %2993
    %v2995 = vsel %vm441, %v2992, 0
    %v2997 = vsel %vm441, %v2994, 0
    %2999 = vmatprep.subr.mxu0 0.0
    %3000 = vmatpush1.xpose.msra.mxu0 %v2997
    %3001 = vmatprep.subr.mxu0 0.0
    %3002 = vmatpush1.xpose.msra.mxu0 0.0
    %3003 = vmatprep.subr.mxu0 0.0
    %3004 = vmatpush1.xpose.msra.mxu0 0.0
    %3005 = vmatprep.subr.mxu0 0.0
    %3006 = vmatpush1.xpose.msra.mxu0 0.0
    %3007 = vmatprep.subr.mxu0 0.0
    %3008 = vmatpush1.xpose.msra.mxu0 0.0
    %3009 = vmatprep.subr.mxu0 0.0
    %3010 = vmatpush1.xpose.msra.mxu0 0.0
    %3011 = vmatprep.subr.mxu0 0.0
    %3012 = vmatpush1.xpose.msra.mxu0 0.0
    %3013 = vmatprep.subr.mxu0 0.0
    %3014 = vmatpush1.xpose.msra.mxu0 0.0
    %3015 = vmatprep.subr.mxu0 0.0
    %3016 = vmatpush1.xpose.msra.mxu0 0.0
    %3017 = vmatprep.subr.mxu0 0.0
    %3018 = vmatpush1.xpose.msra.mxu0 0.0
    %3019 = vmatprep.subr.mxu0 0.0
    %3020 = vmatpush1.xpose.msra.mxu0 0.0
    %3021 = vmatprep.subr.mxu0 0.0
    %3022 = vmatpush1.xpose.msra.mxu0 0.0
    %3023 = vmatprep.subr.mxu0 0.0
    %3024 = vmatpush1.xpose.msra.mxu0 0.0
    %3025 = vmatprep.subr.mxu0 0.0
    %3026 = vmatpush1.xpose.msra.mxu0 0.0
    %3027 = vmatprep.subr.mxu0 0.0
    %3028 = vmatpush1.xpose.msra.mxu0 0.0
    %3029 = vmatprep.subr.mxu0 0.0
    %3030 = vmatpush1.xpose.msra.mxu0 0.0
    %3031 = vmatprep.subr.mxu0 0.0
    %3032 = vmatpush1.xpose.msra.mxu0 0.0
    %3033 = vmatprep.subr.mxu0 0.0
    %3034 = vmatpush1.xpose.msra.mxu0 0.0
    %3035 = vmatprep.subr.mxu0 0.0
    %3036 = vmatpush1.xpose.msra.mxu0 0.0
    %3037 = vmatprep.subr.mxu0 0.0
    %3038 = vmatpush1.xpose.msra.mxu0 0.0
    %3039 = vmatprep.subr.mxu0 0.0
    %3040 = vmatpush1.xpose.msra.mxu0 0.0
    %3041 = vmatprep.subr.mxu0 0.0
    %3042 = vmatpush1.xpose.msra.mxu0 0.0
    %3043 = vmatprep.subr.mxu0 0.0
    %3044 = vmatpush1.xpose.msra.mxu0 0.0
    %3045 = vmatprep.subr.mxu0 0.0
    %3046 = vmatpush1.xpose.msra.mxu0 0.0
    %3047 = vmatprep.subr.mxu0 0.0
    %3048 = vmatpush1.xpose.msra.mxu0 0.0
    %3049 = vmatprep.subr.mxu0 0.0
    %3050 = vmatpush1.xpose.msra.mxu0 0.0
    %3051 = vmatprep.subr.mxu0 0.0
    %3052 = vmatpush1.xpose.msra.mxu0 0.0
    %3053 = vmatprep.subr.mxu0 0.0
    %3054 = vmatpush1.xpose.msra.mxu0 0.0
    %3055 = vmatprep.subr.mxu0 0.0
    %3056 = vmatpush1.xpose.msra.mxu0 0.0
    %3057 = vmatprep.subr.mxu0 0.0
    %3058 = vmatpush1.xpose.msra.mxu0 0.0
    %3059 = vmatprep.subr.mxu0 0.0
    %3060 = vmatpush1.xpose.msra.mxu0 0.0
    %3061 = vmatprep.subr.mxu0 0.0
    %3062 = vmatpush1.xpose.msra.mxu0 0.0
    %3063 = vmatprep.mubr.f32.mxu0 0.0
    %3064 = vmatmul.mubr.f32.gmra.mrb[0].mxu0 %v2995
    %v3065 = vpop.f32.mrb[0].mxu0
    %v3066 = vadd.f32 0.0, %v3065
    %v3067 = vpop.f32.mrb[0].mxu0
    %3068 = vdwg.mxu0
    %v3069 = vsel %vm594, %v2988, -inf
    %3070 = vmax.xlane.f32.xlu0 %v3069
    %v3071 = vpop.xlane.xlu0 %3070
    %v3072 = vsel %vm594, %v3066, -inf
    %3073 = vmax.xlane.f32.xlu0 %v3072
    %v3074 = vpop.xlane.xlu0 %3073
    %v3075 = vsub.f32 %v2988, %v3071
    %v3076 = vsub.f32 %v3066, %v3074
    %v3077 = vmul.f32 %v3075, 1.442695
    %v3078 = vpow.pop %v3077
    %v3079 = vmul.f32 %v3076, 1.442695
    %v3080 = vpow.pop %v3079
    %v3081 = vsel %vm594, %v3078, 0.0
    %3082 = vadd.xlane.f32.xlu0 %v3081
    %v3083 = vpop.xlane.xlu0 %3082
    %v3084 = vsel %vm594, %v3080, 0.0
    %3085 = vadd.xlane.f32.xlu0 %v3084
    %v3086 = vpop.xlane.xlu0 %3085
    %v3087 = vrcp.pop %v3083
    %v3088 = vrcp.pop %v3086
    %v3089 = vmul.f32 %v3078, %v3087
    %v3090 = vmul.f32 %v3080, %v3088
    %3091 = vrot.lane.b32.xlu0 %v408, 32
    %v3092 = vpop.permute.xlu0 %3091
    %v3095 = vsel %vm594, %v3089, 0
    %3097 = vmatprep.subr.mxu0 0.0
    %3098 = vmatpush1.msra.mxu0 %v3092
    %3099 = vmatprep.subr.mxu0 0.0
    %3100 = vmatpush1.msra.mxu0 0.0
    %3101 = vmatprep.subr.mxu0 0.0
    %3102 = vmatpush1.msra.mxu0 0.0
    %3103 = vmatprep.subr.mxu0 0.0
    %3104 = vmatpush1.msra.mxu0 0.0
    %3105 = vmatprep.subr.mxu0 0.0
    %3106 = vmatpush1.msra.mxu0 0.0
    %3107 = vmatprep.subr.mxu0 0.0
    %3108 = vmatpush1.msra.mxu0 0.0
    %3109 = vmatprep.subr.mxu0 0.0
    %3110 = vmatpush1.msra.mxu0 0.0
    %3111 = vmatprep.subr.mxu0 0.0
    %3112 = vmatpush1.msra.mxu0 0.0
    %3113 = vmatprep.subr.mxu0 0.0
    %3114 = vmatpush1.msra.mxu0 0.0
    %3115 = vmatprep.subr.mxu0 0.0
    %3116 = vmatpush1.msra.mxu0 0.0
    %3117 = vmatprep.subr.mxu0 0.0
    %3118 = vmatpush1.msra.mxu0 0.0
    %3119 = vmatprep.subr.mxu0 0.0
    %3120 = vmatpush1.msra.mxu0 0.0
    %3121 = vmatprep.subr.mxu0 0.0
    %3122 = vmatpush1.msra.mxu0 0.0
    %3123 = vmatprep.subr.mxu0 0.0
    %3124 = vmatpush1.msra.mxu0 0.0
    %3125 = vmatprep.subr.mxu0 0.0
    %3126 = vmatpush1.msra.mxu0 0.0
    %3127 = vmatprep.subr.mxu0 0.0
    %3128 = vmatpush1.msra.mxu0 0.0
    %3129 = vmatprep.subr.mxu0 0.0
    %3130 = vmatpush1.msra.mxu0 0.0
    %3131 = vmatprep.subr.mxu0 0.0
    %3132 = vmatpush1.msra.mxu0 0.0
    %3133 = vmatprep.subr.mxu0 0.0
    %3134 = vmatpush1.msra.mxu0 0.0
    %3135 = vmatprep.subr.mxu0 0.0
    %3136 = vmatpush1.msra.mxu0 0.0
    %3137 = vmatprep.subr.mxu0 0.0
    %3138 = vmatpush1.msra.mxu0 0.0
    %3139 = vmatprep.subr.mxu0 0.0
    %3140 = vmatpush1.msra.mxu0 0.0
    %3141 = vmatprep.subr.mxu0 0.0
    %3142 = vmatpush1.msra.mxu0 0.0
    %3143 = vmatprep.subr.mxu0 0.0
    %3144 = vmatpush1.msra.mxu0 0.0
    %3145 = vmatprep.subr.mxu0 0.0
    %3146 = vmatpush1.msra.mxu0 0.0
    %3147 = vmatprep.subr.mxu0 0.0
    %3148 = vmatpush1.msra.mxu0 0.0
    %3149 = vmatprep.subr.mxu0 0.0
    %3150 = vmatpush1.msra.mxu0 0.0
    %3151 = vmatprep.subr.mxu0 0.0
    %3152 = vmatpush1.msra.mxu0 0.0
    %3153 = vmatprep.subr.mxu0 0.0
    %3154 = vmatpush1.msra.mxu0 0.0
    %3155 = vmatprep.subr.mxu0 0.0
    %3156 = vmatpush1.msra.mxu0 0.0
    %3157 = vmatprep.subr.mxu0 0.0
    %3158 = vmatpush1.msra.mxu0 0.0
    %3159 = vmatprep.subr.mxu0 0.0
    %3160 = vmatpush1.msra.mxu0 0.0
    %3161 = vmatprep.mubr.f32.mxu0 0.0
    %3162 = vmatmul.mubr.f32.gmra.mrb[0].mxu0 %v3095
    %v3163 = vpop.f32.mrb[0].mxu0
    %v3164 = vadd.f32 0.0, %v3163
    %v3165 = vpop.f32.mrb[0].mxu0
    %3166 = vdwg.mxu0
    %3167 = vrot.lane.b32.xlu0 %v413, 32
    %v3168 = vpop.permute.xlu0 %3167
    %v3171 = vsel %vm594, %v3090, 0
    %3173 = vmatprep.subr.mxu0 0.0
    %3174 = vmatpush1.msra.mxu0 %v3168
    %3175 = vmatprep.subr.mxu0 0.0
    %3176 = vmatpush1.msra.mxu0 0.0
    %3177 = vmatprep.subr.mxu0 0.0
    %3178 = vmatpush1.msra.mxu0 0.0
    %3179 = vmatprep.subr.mxu0 0.0
    %3180 = vmatpush1.msra.mxu0 0.0
    %3181 = vmatprep.subr.mxu0 0.0
    %3182 = vmatpush1.msra.mxu0 0.0
    %3183 = vmatprep.subr.mxu0 0.0
    %3184 = vmatpush1.msra.mxu0 0.0
    %3185 = vmatprep.subr.mxu0 0.0
    %3186 = vmatpush1.msra.mxu0 0.0
    %3187 = vmatprep.subr.mxu0 0.0
    %3188 = vmatpush1.msra.mxu0 0.0
    %3189 = vmatprep.subr.mxu0 0.0
    %3190 = vmatpush1.msra.mxu0 0.0
    %3191 = vmatprep.subr.mxu0 0.0
    %3192 = vmatpush1.msra.mxu0 0.0
    %3193 = vmatprep.subr.mxu0 0.0
    %3194 = vmatpush1.msra.mxu0 0.0
    %3195 = vmatprep.subr.mxu0 0.0
    %3196 = vmatpush1.msra.mxu0 0.0
    %3197 = vmatprep.subr.mxu0 0.0
    %3198 = vmatpush1.msra.mxu0 0.0
    %3199 = vmatprep.subr.mxu0 0.0
    %3200 = vmatpush1.msra.mxu0 0.0
    %3201 = vmatprep.subr.mxu0 0.0
    %3202 = vmatpush1.msra.mxu0 0.0
    %3203 = vmatprep.subr.mxu0 0.0
    %3204 = vmatpush1.msra.mxu0 0.0
    %3205 = vmatprep.subr.mxu0 0.0
    %3206 = vmatpush1.msra.mxu0 0.0
    %3207 = vmatprep.subr.mxu0 0.0
    %3208 = vmatpush1.msra.mxu0 0.0
    %3209 = vmatprep.subr.mxu0 0.0
    %3210 = vmatpush1.msra.mxu0 0.0
    %3211 = vmatprep.subr.mxu0 0.0
    %3212 = vmatpush1.msra.mxu0 0.0
    %3213 = vmatprep.subr.mxu0 0.0
    %3214 = vmatpush1.msra.mxu0 0.0
    %3215 = vmatprep.subr.mxu0 0.0
    %3216 = vmatpush1.msra.mxu0 0.0
    %3217 = vmatprep.subr.mxu0 0.0
    %3218 = vmatpush1.msra.mxu0 0.0
    %3219 = vmatprep.subr.mxu0 0.0
    %3220 = vmatpush1.msra.mxu0 0.0
    %3221 = vmatprep.subr.mxu0 0.0
    %3222 = vmatpush1.msra.mxu0 0.0
    %3223 = vmatprep.subr.mxu0 0.0
    %3224 = vmatpush1.msra.mxu0 0.0
    %3225 = vmatprep.subr.mxu0 0.0
    %3226 = vmatpush1.msra.mxu0 0.0
    %3227 = vmatprep.subr.mxu0 0.0
    %3228 = vmatpush1.msra.mxu0 0.0
    %3229 = vmatprep.subr.mxu0 0.0
    %3230 = vmatpush1.msra.mxu0 0.0
    %3231 = vmatprep.subr.mxu0 0.0
    %3232 = vmatpush1.msra.mxu0 0.0
    %3233 = vmatprep.subr.mxu0 0.0
    %3234 = vmatpush1.msra.mxu0 0.0
    %3235 = vmatprep.subr.mxu0 0.0
    %3236 = vmatpush1.msra.mxu0 0.0
    %3237 = vmatprep.mubr.f32.mxu0 0.0
    %3238 = vmatmul.mubr.f32.gmra.mrb[0].mxu0 %v3171
    %v3239 = vpop.f32.mrb[0].mxu0
    %v3240 = vadd.f32 0.0, %v3239
    %v3241 = vpop.f32.mrb[0].mxu0
    %3242 = vdwg.mxu0
    %v3244 = vsel %vm441, %v3164, 0
    %v3247 = vsel %vm441, %v3240, 0
    %3249 = vmatprep.subr.mxu0 0.0
    %3250 = vmatpush1.msra.mxu0 %v430
    %3251 = vmatprep.subr.mxu0 0.0
    %3252 = vmatpush1.msra.mxu0 %v431
    %3253 = vmatprep.subr.mxu0 0.0
    %3254 = vmatpush1.msra.mxu0 0.0
    %3255 = vmatprep.subr.mxu0 0.0
    %3256 = vmatpush1.msra.mxu0 0.0
    %3257 = vmatprep.subr.mxu0 0.0
    %3258 = vmatpush1.msra.mxu0 0.0
    %3259 = vmatprep.subr.mxu0 0.0
    %3260 = vmatpush1.msra.mxu0 0.0
    %3261 = vmatprep.subr.mxu0 0.0
    %3262 = vmatpush1.msra.mxu0 0.0
    %3263 = vmatprep.subr.mxu0 0.0
    %3264 = vmatpush1.msra.mxu0 0.0
    %3265 = vmatprep.subr.mxu0 0.0
    %3266 = vmatpush1.msra.mxu0 0.0
    %3267 = vmatprep.subr.mxu0 0.0
    %3268 = vmatpush1.msra.mxu0 0.0
    %3269 = vmatprep.subr.mxu0 0.0
    %3270 = vmatpush1.msra.mxu0 0.0
    %3271 = vmatprep.subr.mxu0 0.0
    %3272 = vmatpush1.msra.mxu0 0.0
    %3273 = vmatprep.subr.mxu0 0.0
    %3274 = vmatpush1.msra.mxu0 0.0
    %3275 = vmatprep.subr.mxu0 0.0
    %3276 = vmatpush1.msra.mxu0 0.0
    %3277 = vmatprep.subr.mxu0 0.0
    %3278 = vmatpush1.msra.mxu0 0.0
    %3279 = vmatprep.subr.mxu0 0.0
    %3280 = vmatpush1.msra.mxu0 0.0
    %3281 = vmatprep.subr.mxu0 0.0
    %3282 = vmatpush1.msra.mxu0 0.0
    %3283 = vmatprep.subr.mxu0 0.0
    %3284 = vmatpush1.msra.mxu0 0.0
    %3285 = vmatprep.subr.mxu0 0.0
    %3286 = vmatpush1.msra.mxu0 0.0
    %3287 = vmatprep.subr.mxu0 0.0
    %3288 = vmatpush1.msra.mxu0 0.0
    %3289 = vmatprep.subr.mxu0 0.0
    %3290 = vmatpush1.msra.mxu0 0.0
    %3291 = vmatprep.subr.mxu0 0.0
    %3292 = vmatpush1.msra.mxu0 0.0
    %3293 = vmatprep.subr.mxu0 0.0
    %3294 = vmatpush1.msra.mxu0 0.0
    %3295 = vmatprep.subr.mxu0 0.0
    %3296 = vmatpush1.msra.mxu0 0.0
    %3297 = vmatprep.subr.mxu0 0.0
    %3298 = vmatpush1.msra.mxu0 0.0
    %3299 = vmatprep.subr.mxu0 0.0
    %3300 = vmatpush1.msra.mxu0 0.0
    %3301 = vmatprep.subr.mxu0 0.0
    %3302 = vmatpush1.msra.mxu0 0.0
    %3303 = vmatprep.subr.mxu0 0.0
    %3304 = vmatpush1.msra.mxu0 0.0
    %3305 = vmatprep.subr.mxu0 0.0
    %3306 = vmatpush1.msra.mxu0 0.0
    %3307 = vmatprep.subr.mxu0 0.0
    %3308 = vmatpush1.msra.mxu0 0.0
    %3309 = vmatprep.subr.mxu0 0.0
    %3310 = vmatpush1.msra.mxu0 0.0
    %3311 = vmatprep.subr.mxu0 0.0
    %3312 = vmatpush1.msra.mxu0 0.0
    %3313 = vmatprep.mubr.f32.mxu0 0.0
    %3314 = vmatmul.mubr.f32.gmra.mrb[0].mxu0 %v3244
    %v3315 = vpop.f32.mrb[0].mxu0
    %v3316 = vadd.f32 0.0, %v3315
    %v3317 = vpop.f32.mrb[0].mxu0
    %3318 = vmatprep.mubr.f32.mxu0 0.0
    %3319 = vmatmul.mubr.f32.gmra.mrb[0].mxu0 %v3247
    %v3320 = vpop.f32.mrb[0].mxu0
    %v3321 = vadd.f32 0.0, %v3320
    %v3322 = vpop.f32.mrb[0].mxu0
    %3323 = vdwg.mxu0
    %v3324 = vadd.f32 %v2911, %v3316
    %v3325 = vadd.f32 %v2912, %v3321
    %3326 = vrot.lane.b32.xlu0 %v416, 16
    %v3327 = vpop.permute.xlu0 %3326
    %3328 = vrot.lane.b32.xlu0 %v310, 16
    %v3329 = vpop.permute.xlu0 %3328
    %v3330 = vsel %vm441, %v3327, 0
    %v3332 = vsel %vm441, %v3329, 0
    %3334 = vmatprep.subr.mxu0 0.0
    %3335 = vmatpush1.xpose.msra.mxu0 %v3332
    %3336 = vmatprep.subr.mxu0 0.0
    %3337 = vmatpush1.xpose.msra.mxu0 0.0
    %3338 = vmatprep.subr.mxu0 0.0
    %3339 = vmatpush1.xpose.msra.mxu0 0.0
    %3340 = vmatprep.subr.mxu0 0.0
    %3341 = vmatpush1.xpose.msra.mxu0 0.0
    %3342 = vmatprep.subr.mxu0 0.0
    %3343 = vmatpush1.xpose.msra.mxu0 0.0
    %3344 = vmatprep.subr.mxu0 0.0
    %3345 = vmatpush1.xpose.msra.mxu0 0.0
    %3346 = vmatprep.subr.mxu0 0.0
    %3347 = vmatpush1.xpose.msra.mxu0 0.0
    %3348 = vmatprep.subr.mxu0 0.0
    %3349 = vmatpush1.xpose.msra.mxu0 0.0
    %3350 = vmatprep.subr.mxu0 0.0
    %3351 = vmatpush1.xpose.msra.mxu0 0.0
    %3352 = vmatprep.subr.mxu0 0.0
    %3353 = vmatpush1.xpose.msra.mxu0 0.0
    %3354 = vmatprep.subr.mxu0 0.0
    %3355 = vmatpush1.xpose.msra.mxu0 0.0
    %3356 = vmatprep.subr.mxu0 0.0
    %3357 = vmatpush1.xpose.msra.mxu0 0.0
    %3358 = vmatprep.subr.mxu0 0.0
    %3359 = vmatpush1.xpose.msra.mxu0 0.0
    %3360 = vmatprep.subr.mxu0 0.0
    %3361 = vmatpush1.xpose.msra.mxu0 0.0
    %3362 = vmatprep.subr.mxu0 0.0
    %3363 = vmatpush1.xpose.msra.mxu0 0.0
    %3364 = vmatprep.subr.mxu0 0.0
    %3365 = vmatpush1.xpose.msra.mxu0 0.0
    %3366 = vmatprep.subr.mxu0 0.0
    %3367 = vmatpush1.xpose.msra.mxu0 0.0
    %3368 = vmatprep.subr.mxu0 0.0
    %3369 = vmatpush1.xpose.msra.mxu0 0.0
    %3370 = vmatprep.subr.mxu0 0.0
    %3371 = vmatpush1.xpose.msra.mxu0 0.0
    %3372 = vmatprep.subr.mxu0 0.0
    %3373 = vmatpush1.xpose.msra.mxu0 0.0
    %3374 = vmatprep.subr.mxu0 0.0
    %3375 = vmatpush1.xpose.msra.mxu0 0.0
    %3376 = vmatprep.subr.mxu0 0.0
    %3377 = vmatpush1.xpose.msra.mxu0 0.0
    %3378 = vmatprep.subr.mxu0 0.0
    %3379 = vmatpush1.xpose.msra.mxu0 0.0
    %3380 = vmatprep.subr.mxu0 0.0
    %3381 = vmatpush1.xpose.msra.mxu0 0.0
    %3382 = vmatprep.subr.mxu0 0.0
    %3383 = vmatpush1.xpose.msra.mxu0 0.0
    %3384 = vmatprep.subr.mxu0 0.0
    %3385 = vmatpush1.xpose.msra.mxu0 0.0
    %3386 = vmatprep.subr.mxu0 0.0
    %3387 = vmatpush1.xpose.msra.mxu0 0.0
    %3388 = vmatprep.subr.mxu0 0.0
    %3389 = vmatpush1.xpose.msra.mxu0 0.0
    %3390 = vmatprep.subr.mxu0 0.0
    %3391 = vmatpush1.xpose.msra.mxu0 0.0
    %3392 = vmatprep.subr.mxu0 0.0
    %3393 = vmatpush1.xpose.msra.mxu0 0.0
    %3394 = vmatprep.subr.mxu0 0.0
    %3395 = vmatpush1.xpose.msra.mxu0 0.0
    %3396 = vmatprep.subr.mxu0 0.0
    %3397 = vmatpush1.xpose.msra.mxu0 0.0
    %3398 = vmatprep.mubr.f32.mxu0 0.0
    %3399 = vmatmul.mubr.f32.gmra.mrb[0].mxu0 %v3330
    %v3400 = vpop.f32.mrb[0].mxu0
    %v3401 = vadd.f32 0.0, %v3400
    %v3402 = vpop.f32.mrb[0].mxu0
    %3403 = vdwg.mxu0
    %3404 = vrot.lane.b32.xlu0 %v417, 16
    %v3405 = vpop.permute.xlu0 %3404
    %3406 = vrot.lane.b32.xlu0 %v315, 16
    %v3407 = vpop.permute.xlu0 %3406
    %v3408 = vsel %vm441, %v3405, 0
    %v3410 = vsel %vm441, %v3407, 0
    %3412 = vmatprep.subr.mxu0 0.0
    %3413 = vmatpush1.xpose.msra.mxu0 %v3410
    %3414 = vmatprep.subr.mxu0 0.0
    %3415 = vmatpush1.xpose.msra.mxu0 0.0
    %3416 = vmatprep.subr.mxu0 0.0
    %3417 = vmatpush1.xpose.msra.mxu0 0.0
    %3418 = vmatprep.subr.mxu0 0.0
    %3419 = vmatpush1.xpose.msra.mxu0 0.0
    %3420 = vmatprep.subr.mxu0 0.0
    %3421 = vmatpush1.xpose.msra.mxu0 0.0
    %3422 = vmatprep.subr.mxu0 0.0
    %3423 = vmatpush1.xpose.msra.mxu0 0.0
    %3424 = vmatprep.subr.mxu0 0.0
    %3425 = vmatpush1.xpose.msra.mxu0 0.0
    %3426 = vmatprep.subr.mxu0 0.0
    %3427 = vmatpush1.xpose.msra.mxu0 0.0
    %3428 = vmatprep.subr.mxu0 0.0
    %3429 = vmatpush1.xpose.msra.mxu0 0.0
    %3430 = vmatprep.subr.mxu0 0.0
    %3431 = vmatpush1.xpose.msra.mxu0 0.0
    %3432 = vmatprep.subr.mxu0 0.0
    %3433 = vmatpush1.xpose.msra.mxu0 0.0
    %3434 = vmatprep.subr.mxu0 0.0
    %3435 = vmatpush1.xpose.msra.mxu0 0.0
    %3436 = vmatprep.subr.mxu0 0.0
    %3437 = vmatpush1.xpose.msra.mxu0 0.0
    %3438 = vmatprep.subr.mxu0 0.0
    %3439 = vmatpush1.xpose.msra.mxu0 0.0
    %3440 = vmatprep.subr.mxu0 0.0
    %3441 = vmatpush1.xpose.msra.mxu0 0.0
    %3442 = vmatprep.subr.mxu0 0.0
    %3443 = vmatpush1.xpose.msra.mxu0 0.0
    %3444 = vmatprep.subr.mxu0 0.0
    %3445 = vmatpush1.xpose.msra.mxu0 0.0
    %3446 = vmatprep.subr.mxu0 0.0
    %3447 = vmatpush1.xpose.msra.mxu0 0.0
    %3448 = vmatprep.subr.mxu0 0.0
    %3449 = vmatpush1.xpose.msra.mxu0 0.0
    %3450 = vmatprep.subr.mxu0 0.0
    %3451 = vmatpush1.xpose.msra.mxu0 0.0
    %3452 = vmatprep.subr.mxu0 0.0
    %3453 = vmatpush1.xpose.msra.mxu0 0.0
    %3454 = vmatprep.subr.mxu0 0.0
    %3455 = vmatpush1.xpose.msra.mxu0 0.0
    %3456 = vmatprep.subr.mxu0 0.0
    %3457 = vmatpush1.xpose.msra.mxu0 0.0
    %3458 = vmatprep.subr.mxu0 0.0
    %3459 = vmatpush1.xpose.msra.mxu0 0.0
    %3460 = vmatprep.subr.mxu0 0.0
    %3461 = vmatpush1.xpose.msra.mxu0 0.0
    %3462 = vmatprep.subr.mxu0 0.0
    %3463 = vmatpush1.xpose.msra.mxu0 0.0
    %3464 = vmatprep.subr.mxu0 0.0
    %3465 = vmatpush1.xpose.msra.mxu0 0.0
    %3466 = vmatprep.subr.mxu0 0.0
    %3467 = vmatpush1.xpose.msra.mxu0 0.0
    %3468 = vmatprep.subr.mxu0 0.0
    %3469 = vmatpush1.xpose.msra.mxu0 0.0
    %3470 = vmatprep.subr.mxu0 0.0
    %3471 = vmatpush1.xpose.msra.mxu0 0.0
    %3472 = vmatprep.subr.mxu0 0.0
    %3473 = vmatpush1.xpose.msra.mxu0 0.0
    %3474 = vmatprep.subr.mxu0 0.0
    %3475 = vmatpush1.xpose.msra.mxu0 0.0
    %3476 = vmatprep.mubr.f32.mxu0 0.0
    %3477 = vmatmul.mubr.f32.gmra.mrb[0].mxu0 %v3408
    %v3478 = vpop.f32.mrb[0].mxu0
    %v3479 = vadd.f32 0.0, %v3478
    %v3480 = vpop.f32.mrb[0].mxu0
    %3481 = vdwg.mxu0
    %v3482 = vsel %vm594, %v3401, -inf
    %3483 = vmax.xlane.f32.xlu0 %v3482
    %v3484 = vpop.xlane.xlu0 %3483
    %v3485 = vsel %vm594, %v3479, -inf
    %3486 = vmax.xlane.f32.xlu0 %v3485
    %v3487 = vpop.xlane.xlu0 %3486
    %v3488 = vsub.f32 %v3401, %v3484
    %v3489 = vsub.f32 %v3479, %v3487
    %v3490 = vmul.f32 %v3488, 1.442695
    %v3491 = vpow.pop %v3490
    %v3492 = vmul.f32 %v3489, 1.442695
    %v3493 = vpow.pop %v3492
    %v3494 = vsel %vm594, %v3491, 0.0
    %3495 = vadd.xlane.f32.xlu0 %v3494
    %v3496 = vpop.xlane.xlu0 %3495
    %v3497 = vsel %vm594, %v3493, 0.0
    %3498 = vadd.xlane.f32.xlu0 %v3497
    %v3499 = vpop.xlane.xlu0 %3498
    %v3500 = vrcp.pop %v3496
    %v3501 = vrcp.pop %v3499
    %v3502 = vmul.f32 %v3491, %v3500
    %v3503 = vmul.f32 %v3493, %v3501
    %3504 = vrot.lane.b32.xlu0 %v408, 16
    %v3505 = vpop.permute.xlu0 %3504
    %v3508 = vsel %vm594, %v3502, 0
    %3510 = vmatprep.subr.mxu0 0.0
    %3511 = vmatpush1.msra.mxu0 %v3505
    %3512 = vmatprep.subr.mxu0 0.0
    %3513 = vmatpush1.msra.mxu0 0.0
    %3514 = vmatprep.subr.mxu0 0.0
    %3515 = vmatpush1.msra.mxu0 0.0
    %3516 = vmatprep.subr.mxu0 0.0
    %3517 = vmatpush1.msra.mxu0 0.0
    %3518 = vmatprep.subr.mxu0 0.0
    %3519 = vmatpush1.msra.mxu0 0.0
    %3520 = vmatprep.subr.mxu0 0.0
    %3521 = vmatpush1.msra.mxu0 0.0
    %3522 = vmatprep.subr.mxu0 0.0
    %3523 = vmatpush1.msra.mxu0 0.0
    %3524 = vmatprep.subr.mxu0 0.0
    %3525 = vmatpush1.msra.mxu0 0.0
    %3526 = vmatprep.subr.mxu0 0.0
    %3527 = vmatpush1.msra.mxu0 0.0
    %3528 = vmatprep.subr.mxu0 0.0
    %3529 = vmatpush1.msra.mxu0 0.0
    %3530 = vmatprep.subr.mxu0 0.0
    %3531 = vmatpush1.msra.mxu0 0.0
    %3532 = vmatprep.subr.mxu0 0.0
    %3533 = vmatpush1.msra.mxu0 0.0
    %3534 = vmatprep.subr.mxu0 0.0
    %3535 = vmatpush1.msra.mxu0 0.0
    %3536 = vmatprep.subr.mxu0 0.0
    %3537 = vmatpush1.msra.mxu0 0.0
    %3538 = vmatprep.subr.mxu0 0.0
    %3539 = vmatpush1.msra.mxu0 0.0
    %3540 = vmatprep.subr.mxu0 0.0
    %3541 = vmatpush1.msra.mxu0 0.0
    %3542 = vmatprep.subr.mxu0 0.0
    %3543 = vmatpush1.msra.mxu0 0.0
    %3544 = vmatprep.subr.mxu0 0.0
    %3545 = vmatpush1.msra.mxu0 0.0
    %3546 = vmatprep.subr.mxu0 0.0
    %3547 = vmatpush1.msra.mxu0 0.0
    %3548 = vmatprep.subr.mxu0 0.0
    %3549 = vmatpush1.msra.mxu0 0.0
    %3550 = vmatprep.subr.mxu0 0.0
    %3551 = vmatpush1.msra.mxu0 0.0
    %3552 = vmatprep.subr.mxu0 0.0
    %3553 = vmatpush1.msra.mxu0 0.0
    %3554 = vmatprep.subr.mxu0 0.0
    %3555 = vmatpush1.msra.mxu0 0.0
    %3556 = vmatprep.subr.mxu0 0.0
    %3557 = vmatpush1.msra.mxu0 0.0
    %3558 = vmatprep.subr.mxu0 0.0
    %3559 = vmatpush1.msra.mxu0 0.0
    %3560 = vmatprep.subr.mxu0 0.0
    %3561 = vmatpush1.msra.mxu0 0.0
    %3562 = vmatprep.subr.mxu0 0.0
    %3563 = vmatpush1.msra.mxu0 0.0
    %3564 = vmatprep.subr.mxu0 0.0
    %3565 = vmatpush1.msra.mxu0 0.0
    %3566 = vmatprep.subr.mxu0 0.0
    %3567 = vmatpush1.msra.mxu0 0.0
    %3568 = vmatprep.subr.mxu0 0.0
    %3569 = vmatpush1.msra.mxu0 0.0
    %3570 = vmatprep.subr.mxu0 0.0
    %3571 = vmatpush1.msra.mxu0 0.0
    %3572 = vmatprep.subr.mxu0 0.0
    %3573 = vmatpush1.msra.mxu0 0.0
    %3574 = vmatprep.mubr.f32.mxu0 0.0
    %3575 = vmatmul.mubr.f32.gmra.mrb[0].mxu0 %v3508
    %v3576 = vpop.f32.mrb[0].mxu0
    %v3577 = vadd.f32 0.0, %v3576
    %v3578 = vpop.f32.mrb[0].mxu0
    %3579 = vdwg.mxu0
    %3580 = vrot.lane.b32.xlu0 %v413, 16
    %v3581 = vpop.permute.xlu0 %3580
    %v3584 = vsel %vm594, %v3503, 0
    %3586 = vmatprep.subr.mxu0 0.0
    %3587 = vmatpush1.msra.mxu0 %v3581
    %3588 = vmatprep.subr.mxu0 0.0
    %3589 = vmatpush1.msra.mxu0 0.0
    %3590 = vmatprep.subr.mxu0 0.0
    %3591 = vmatpush1.msra.mxu0 0.0
    %3592 = vmatprep.subr.mxu0 0.0
    %3593 = vmatpush1.msra.mxu0 0.0
    %3594 = vmatprep.subr.mxu0 0.0
    %3595 = vmatpush1.msra.mxu0 0.0
    %3596 = vmatprep.subr.mxu0 0.0
    %3597 = vmatpush1.msra.mxu0 0.0
    %3598 = vmatprep.subr.mxu0 0.0
    %3599 = vmatpush1.msra.mxu0 0.0
    %3600 = vmatprep.subr.mxu0 0.0
    %3601 = vmatpush1.msra.mxu0 0.0
    %3602 = vmatprep.subr.mxu0 0.0
    %3603 = vmatpush1.msra.mxu0 0.0
    %3604 = vmatprep.subr.mxu0 0.0
    %3605 = vmatpush1.msra.mxu0 0.0
    %3606 = vmatprep.subr.mxu0 0.0
    %3607 = vmatpush1.msra.mxu0 0.0
    %3608 = vmatprep.subr.mxu0 0.0
    %3609 = vmatpush1.msra.mxu0 0.0
    %3610 = vmatprep.subr.mxu0 0.0
    %3611 = vmatpush1.msra.mxu0 0.0
    %3612 = vmatprep.subr.mxu0 0.0
    %3613 = vmatpush1.msra.mxu0 0.0
    %3614 = vmatprep.subr.mxu0 0.0
    %3615 = vmatpush1.msra.mxu0 0.0
    %3616 = vmatprep.subr.mxu0 0.0
    %3617 = vmatpush1.msra.mxu0 0.0
    %3618 = vmatprep.subr.mxu0 0.0
    %3619 = vmatpush1.msra.mxu0 0.0
    %3620 = vmatprep.subr.mxu0 0.0
    %3621 = vmatpush1.msra.mxu0 0.0
    %3622 = vmatprep.subr.mxu0 0.0
    %3623 = vmatpush1.msra.mxu0 0.0
    %3624 = vmatprep.subr.mxu0 0.0
    %3625 = vmatpush1.msra.mxu0 0.0
    %3626 = vmatprep.subr.mxu0 0.0
    %3627 = vmatpush1.msra.mxu0 0.0
    %3628 = vmatprep.subr.mxu0 0.0
    %3629 = vmatpush1.msra.mxu0 0.0
    %3630 = vmatprep.subr.mxu0 0.0
    %3631 = vmatpush1.msra.mxu0 0.0
    %3632 = vmatprep.subr.mxu0 0.0
    %3633 = vmatpush1.msra.mxu0 0.0
    %3634 = vmatprep.subr.mxu0 0.0
    %3635 = vmatpush1.msra.mxu0 0.0
    %3636 = vmatprep.subr.mxu0 0.0
    %3637 = vmatpush1.msra.mxu0 0.0
    %3638 = vmatprep.subr.mxu0 0.0
    %3639 = vmatpush1.msra.mxu0 0.0
    %3640 = vmatprep.subr.mxu0 0.0
    %3641 = vmatpush1.msra.mxu0 0.0
    %3642 = vmatprep.subr.mxu0 0.0
    %3643 = vmatpush1.msra.mxu0 0.0
    %3644 = vmatprep.subr.mxu0 0.0
    %3645 = vmatpush1.msra.mxu0 0.0
    %3646 = vmatprep.subr.mxu0 0.0
    %3647 = vmatpush1.msra.mxu0 0.0
    %3648 = vmatprep.subr.mxu0 0.0
    %3649 = vmatpush1.msra.mxu0 0.0
    %3650 = vmatprep.mubr.f32.mxu0 0.0
    %3651 = vmatmul.mubr.f32.gmra.mrb[0].mxu0 %v3584
    %v3652 = vpop.f32.mrb[0].mxu0
    %v3653 = vadd.f32 0.0, %v3652
    %v3654 = vpop.f32.mrb[0].mxu0
    %3655 = vdwg.mxu0
    %v3657 = vsel %vm441, %v3577, 0
    %v3660 = vsel %vm441, %v3653, 0
    %3662 = vmatprep.subr.mxu0 0.0
    %3663 = vmatpush1.msra.mxu0 %v432
    %3664 = vmatprep.subr.mxu0 0.0
    %3665 = vmatpush1.msra.mxu0 %v433
    %3666 = vmatprep.subr.mxu0 0.0
    %3667 = vmatpush1.msra.mxu0 0.0
    %3668 = vmatprep.subr.mxu0 0.0
    %3669 = vmatpush1.msra.mxu0 0.0
    %3670 = vmatprep.subr.mxu0 0.0
    %3671 = vmatpush1.msra.mxu0 0.0
    %3672 = vmatprep.subr.mxu0 0.0
    %3673 = vmatpush1.msra.mxu0 0.0
    %3674 = vmatprep.subr.mxu0 0.0
    %3675 = vmatpush1.msra.mxu0 0.0
    %3676 = vmatprep.subr.mxu0 0.0
    %3677 = vmatpush1.msra.mxu0 0.0
    %3678 = vmatprep.subr.mxu0 0.0
    %3679 = vmatpush1.msra.mxu0 0.0
    %3680 = vmatprep.subr.mxu0 0.0
    %3681 = vmatpush1.msra.mxu0 0.0
    %3682 = vmatprep.subr.mxu0 0.0
    %3683 = vmatpush1.msra.mxu0 0.0
    %3684 = vmatprep.subr.mxu0 0.0
    %3685 = vmatpush1.msra.mxu0 0.0
    %3686 = vmatprep.subr.mxu0 0.0
    %3687 = vmatpush1.msra.mxu0 0.0
    %3688 = vmatprep.subr.mxu0 0.0
    %3689 = vmatpush1.msra.mxu0 0.0
    %3690 = vmatprep.subr.mxu0 0.0
    %3691 = vmatpush1.msra.mxu0 0.0
    %3692 = vmatprep.subr.mxu0 0.0
    %3693 = vmatpush1.msra.mxu0 0.0
    %3694 = vmatprep.subr.mxu0 0.0
    %3695 = vmatpush1.msra.mxu0 0.0
    %3696 = vmatprep.subr.mxu0 0.0
    %3697 = vmatpush1.msra.mxu0 0.0
    %3698 = vmatprep.subr.mxu0 0.0
    %3699 = vmatpush1.msra.mxu0 0.0
    %3700 = vmatprep.subr.mxu0 0.0
    %3701 = vmatpush1.msra.mxu0 0.0
    %3702 = vmatprep.subr.mxu0 0.0
    %3703 = vmatpush1.msra.mxu0 0.0
    %3704 = vmatprep.subr.mxu0 0.0
    %3705 = vmatpush1.msra.mxu0 0.0
    %3706 = vmatprep.subr.mxu0 0.0
    %3707 = vmatpush1.msra.mxu0 0.0
    %3708 = vmatprep.subr.mxu0 0.0
    %3709 = vmatpush1.msra.mxu0 0.0
    %3710 = vmatprep.subr.mxu0 0.0
    %3711 = vmatpush1.msra.mxu0 0.0
    %3712 = vmatprep.subr.mxu0 0.0
    %3713 = vmatpush1.msra.mxu0 0.0
    %3714 = vmatprep.subr.mxu0 0.0
    %3715 = vmatpush1.msra.mxu0 0.0
    %3716 = vmatprep.subr.mxu0 0.0
    %3717 = vmatpush1.msra.mxu0 0.0
    %3718 = vmatprep.subr.mxu0 0.0
    %3719 = vmatpush1.msra.mxu0 0.0
    %3720 = vmatprep.subr.mxu0 0.0
    %3721 = vmatpush1.msra.mxu0 0.0
    %3722 = vmatprep.subr.mxu0 0.0
    %3723 = vmatpush1.msra.mxu0 0.0
    %3724 = vmatprep.subr.mxu0 0.0
    %3725 = vmatpush1.msra.mxu0 0.0
    %3726 = vmatprep.mubr.f32.mxu0 0.0
    %3727 = vmatmul.mubr.f32.gmra.mrb[0].mxu0 %v3657
    %v3728 = vpop.f32.mrb[0].mxu0
    %v3729 = vadd.f32 0.0, %v3728
    %v3730 = vpop.f32.mrb[0].mxu0
    %3731 = vmatprep.mubr.f32.mxu0 0.0
    %3732 = vmatmul.mubr.f32.gmra.mrb[0].mxu0 %v3660
    %v3733 = vpop.f32.mrb[0].mxu0
    %v3734 = vadd.f32 0.0, %v3733
    %v3735 = vpop.f32.mrb[0].mxu0
    %3736 = vdwg.mxu0
    %v3737 = vadd.f32 %v3324, %v3729
    %v3738 = vadd.f32 %v3325, %v3734
    %3739 = vst [vmem:[#allocation13] sm:$0xff] %v3737
    %3740 = vst [vmem:[#allocation13 + $0x8] sm:$0xff] %v3738
    // Predicated region
    $region66: #{tpu_custom_call.1} parent=1 // pred_check
      _
    $region67: #{tpu_custom_call.1} parent=1 // pred_check_branch
      %3742 = sbr.rel (0) target = $region69
    $region68: #{tpu_custom_call.1} parent=1 // pred_region
      %s3744 = ssub.s32 256, 256
      %3745 = vsyncadd [#allocation4], %s3744
      %s3746 = sshll.u32 [#allocation13], 4
      %s3747 = int_to_ptr.vmem [resolvable:$true] %s3746
      %3752 = dma.vmem_to_hbm [thread:$0]  %s3747, 256, %s10, [#allocation4], 128, 128, 8
    $region69: #{tpu_custom_call.1} parent=1 // pred_fallthru
      _
    // Predicated region
    $region70: #{tpu_custom_call.1} parent=1 // pred_check
      _
    $region71: #{tpu_custom_call.1} parent=1 // pred_check_branch
      %3754 = sbr.rel (0) target = $region73
    $region72: #{tpu_custom_call.1} parent=1 // pred_region
      %3755 = dma.done [#allocation4], 256
    $region73: #{tpu_custom_call.1} parent=1 // pred_fallthru
      _
    %3756 = vsyncpa [#allocation3], 1
    %3757 = vsyncpa [#allocation6], 1
    %3758 = vsyncpa [#allocation9], 1
    %3759 = vsyncpa [#allocation12], 1
    %3760 = vsyncpa [#allocation4], 1

</llo_original>
